<compile_context>
chip_gen: v6e
topology: v6e:2x2x1
jax: 0.10.0
libtpu: 0.0.40
codegen_flags: <defaults>
</compile_context>

<pallas_src>
import jax
import jax.numpy as jnp
from jax import lax
from jax.experimental import pallas as pl
from jax.experimental.pallas import tpu as pltpu


def _make_encoder_kernel(num_layers, batch, emb_dim, hidden_dim):
    """Builds the fused embedding + multi-layer LSTM kernel (eval-mode dropout)."""
    L, B, E, H = num_layers, batch, emb_dim, hidden_dim

    def kernel(ids_ref, emb_ref, *refs):
        # refs = [w_0, b_0, ..., w_{L-1}, b_{L-1}, hidden_out, cell_out, scratch...]
        w_refs = refs[:2 * L]
        hidden_ref = refs[2 * L]
        cell_ref = refs[2 * L + 1]
        scr = refs[2 * L + 2:]
        xh = [scr[3 * l + 0] for l in range(L)]   # (B_pad, in_dim+H) concat buffers
        hs = [scr[3 * l + 1] for l in range(L)]   # (B_pad, H) hidden state
        cs = [scr[3 * l + 2] for l in range(L)]   # (B_pad, H) cell state

        T = ids_ref.shape[0]

        # h0/c0 = 0 (PyTorch default). Zeroing the concat buffers also keeps the
        # padded batch rows deterministic/finite.
        for l in range(L):
            xh[l][...] = jnp.zeros_like(xh[l])
            hs[l][...] = jnp.zeros_like(hs[l])
            cs[l][...] = jnp.zeros_like(cs[l])

        # Hoist bias loads out of the time loop (JAX does not CSE broadcasts in loops).
        b_vals = [w_refs[2 * l + 1][...] for l in range(L)]

        def lstm_cell(xh_val, w_ref, b_val, c_prev):
            # One fused [x|h] @ [W_ih; W_hh] MXU pass, f32 accumulation.
            gates = jnp.dot(xh_val.astype(w_ref.dtype), w_ref[...],
                            preferred_element_type=jnp.float32) + b_val
            # Whole-vreg activations (EUP slot) + one lane-mask select; gate order
            # i|f|g|o (PyTorch): tanh only on the g-gate lane group.
            lane = lax.broadcasted_iota(jnp.int32, gates.shape, 1)
            is_g = jnp.logical_and(lane >= 2 * H, lane < 3 * H)
            act = jnp.where(is_g, jnp.tanh(gates), jax.nn.sigmoid(gates))
            i_g = act[:, 0 * H:1 * H]
            f_g = act[:, 1 * H:2 * H]
            g_g = act[:, 2 * H:3 * H]
            o_g = act[:, 3 * H:4 * H]
            c_new = f_g * c_prev + i_g * g_g
            h_new = o_g * jnp.tanh(c_new)
            return h_new, c_new

        def step(t, carry):
            # In-kernel embedding gather: SMEM token id -> one VMEM table row, written
            # straight into layer-0's [x|h] concat buffer (rows >= B stay zero).
            for b in range(B):
                tok = ids_ref[t, b]
                xh[0][pl.ds(b, 1), pl.ds(0, E)] = emb_ref[tok]
            # TODO(synk): nn.Dropout on the embedding and nn.LSTM inter-layer dropout
            # are training-mode only; eval-mode identity semantics are reproduced here.
            h_below = None
            for l in range(L):
                d_in = E if l == 0 else H
                if l > 0:
                    xh[l][:, pl.ds(0, d_in)] = h_below
                xh[l][:, pl.ds(d_in, H)] = hs[l][...]
                h_new, c_new = lstm_cell(xh[l][...], w_refs[2 * l], b_vals[l],
                                         cs[l][...])
                hs[l][...] = h_new
                cs[l][...] = c_new
                h_below = h_new
            return carry

        lax.fori_loop(0, T, step, 0, unroll=True)

        for l in range(L):
            hidden_ref[l] = hs[l][...]
            cell_ref[l] = cs[l][...]

    return kernel


class EncoderRNNParams:
    """Deterministic synthetic parameters mirroring the PyTorch module shapes."""

    def __init__(self, key, input_size, embedding_size, hidden_size, num_layers,
                 matmul_dtype=jnp.float32):
        self.num_layers = num_layers
        self.hidden_size = hidden_size
        self.embedding_size = embedding_size
        keys = jax.random.split(key, 1 + 4 * num_layers)
        k = 1.0 / jnp.sqrt(hidden_size)

        # nn.Embedding(input_size, embedding_size)
        self.embedding = jax.random.normal(
            keys[0], (input_size, embedding_size), jnp.float32)

        # nn.LSTM(embedding_size, hidden_size, num_layers): per layer
        #   weight_ih_l{k}: (4H, in), weight_hh_l{k}: (4H, H), biases (4H,).
        # Stored stacked + transposed so the kernel does a single [x|h] @ [W_ih; W_hh].
        # matmul_dtype=jnp.bfloat16 halves resident-weight VMEM and uses the bf16-native
        # MXU on v6e/v7x at large H; f32 default keeps exact PyTorch eval numerics.
        self.w, self.bias = [], []
        for layer in range(num_layers):
            in_dim = embedding_size if layer == 0 else hidden_size
            kw = keys[1 + 4 * layer:1 + 4 * (layer + 1)]
            w_ih = jax.random.uniform(kw[0], (4 * hidden_size, in_dim),
                                      jnp.float32, -k, k)
            w_hh = jax.random.uniform(kw[1], (4 * hidden_size, hidden_size),
                                      jnp.float32, -k, k)
            b_ih = jax.random.uniform(kw[2], (4 * hidden_size,), jnp.float32, -k, k)
            b_hh = jax.random.uniform(kw[3], (4 * hidden_size,), jnp.float32, -k, k)
            w_stacked = jnp.concatenate([w_ih.T, w_hh.T], axis=0)   # (in_dim+H, 4H)
            self.w.append(w_stacked.astype(matmul_dtype))
            self.bias.append((b_ih + b_hh).reshape(1, 4 * hidden_size)
                             .astype(jnp.float32))


def encoder_rnn_forward(params, x_tokens):
    """x_tokens: (T, B) int32 -> (hidden, cell), each (num_layers, B, H)."""
    T, B = x_tokens.shape
    L = params.num_layers
    H = params.hidden_size
    E = params.embedding_size
    V = params.embedding.shape[0]
    B_pad = max(8, -(-B // 8) * 8)   # pad batch to a sublane multiple

    kernel = _make_encoder_kernel(L, B, E, H)

    # Embedding table stored as (V, 1, E) so the in-kernel gather is a dynamic index on
    # an untiled leading axis (pure base-address arithmetic).
    # TODO(synk): for large vocabularies keep the table in HBM (pl.ANY) and DMA rows.
    emb3 = params.embedding.reshape(V, 1, E)

    in_specs = [pl.BlockSpec((V, 1, E), lambda i, ids: (0, 0, 0))]
    operands = [emb3]
    for l in range(L):
        in_specs.append(pl.BlockSpec(params.w[l].shape, lambda i, ids: (0, 0)))
        in_specs.append(pl.BlockSpec(params.bias[l].shape, lambda i, ids: (0, 0)))
        operands.append(params.w[l])
        operands.append(params.bias[l])

    scratch_shapes = []
    for l in range(L):
        d_in = E if l == 0 else H
        scratch_shapes.append(pltpu.VMEM((B_pad, d_in + H), jnp.float32))  # [x|h]
        scratch_shapes.append(pltpu.VMEM((B_pad, H), jnp.float32))         # h state
        scratch_shapes.append(pltpu.VMEM((B_pad, H), jnp.float32))         # c state

    grid_spec = pltpu.PrefetchScalarGridSpec(
        num_scalar_prefetch=1,             # token ids -> SMEM
        grid=(1,),                         # whole problem is resident in VMEM
        in_specs=in_specs,
        out_specs=[
            pl.BlockSpec((L, B_pad, H), lambda i, ids: (0, 0, 0)),
            pl.BlockSpec((L, B_pad, H), lambda i, ids: (0, 0, 0)),
        ],
        scratch_shapes=scratch_shapes,
    )

    hidden_pad, cell_pad = pl.pallas_call(
        kernel,
        out_shape=(
            jax.ShapeDtypeStruct((L, B_pad, H), jnp.float32),
            jax.ShapeDtypeStruct((L, B_pad, H), jnp.float32),
        ),
        grid_spec=grid_spec,
        compiler_params=pltpu.CompilerParams(
            dimension_semantics=("arbitrary",)),
    )(x_tokens.astype(jnp.int32), *operands)

    return hidden_pad[:, :B, :], cell_pad[:, :B, :]


def _reference_forward(params, x_tokens):
    """Pure-JAX reference matching PyTorch nn.LSTM eval semantics."""
    emb = jnp.take(params.embedding, x_tokens, axis=0).astype(jnp.float32)  # (T,B,E)
    T, B, _ = emb.shape
    H = params.hidden_size
    layer_in = emb
    hiddens, cells = [], []
    for l in range(params.num_layers):
        W = params.w[l].astype(jnp.float32)
        bvec = params.bias[l].reshape(-1)
        h = jnp.zeros((B, H), jnp.float32)
        c = jnp.zeros((B, H), jnp.float32)
        outs = []
        for t in range(T):
            g = jnp.concatenate([layer_in[t], h], axis=-1) @ W + bvec
            i = jax.nn.sigmoid(g[:, :H])
            f = jax.nn.sigmoid(g[:, H:2 * H])
            gg = jnp.tanh(g[:, 2 * H:3 * H])
            o = jax.nn.sigmoid(g[:, 3 * H:])
            c = f * c + i * gg
            h = o * jnp.tanh(c)
            outs.append(h)
        layer_in = jnp.stack(outs, axis=0)
        hiddens.append(h)
        cells.append(c)
    return jnp.stack(hiddens, axis=0), jnp.stack(cells, axis=0)


if __name__ == "__main__":
    # Small shapes consistent with the module's forward.
    INPUT_SIZE = 50        # vocab
    EMBEDDING_SIZE = 32
    HIDDEN_SIZE = 32
    NUM_LAYERS = 2
    SEQ_LEN = 8
    BATCH = 2

    key = jax.random.PRNGKey(0)
    pkey, xkey = jax.random.split(key)

    params = EncoderRNNParams(pkey, INPUT_SIZE, EMBEDDING_SIZE,
                              HIDDEN_SIZE, NUM_LAYERS)
    x = jax.random.randint(xkey, (SEQ_LEN, BATCH), 0, INPUT_SIZE, jnp.int32)

    hidden, cell = encoder_rnn_forward(params, x)
    hidden = jax.block_until_ready(hidden)
    cell = jax.block_until_ready(cell)

    assert hidden.shape == (NUM_LAYERS, BATCH, HIDDEN_SIZE)
    assert cell.shape == (NUM_LAYERS, BATCH, HIDDEN_SIZE)
    assert bool(jnp.all(jnp.isfinite(hidden))) and bool(jnp.all(jnp.isfinite(cell)))

    ref_hidden, ref_cell = _reference_forward(params, x)
    assert jnp.allclose(hidden, ref_hidden, rtol=1e-4, atol=1e-5), \
        float(jnp.max(jnp.abs(hidden - ref_hidden)))
    assert jnp.allclose(cell, ref_cell, rtol=1e-4, atol=1e-5), \
        float(jnp.max(jnp.abs(cell - ref_cell)))

    print("KERNEL_OK")
</pallas_src>

<mosaic_0001>
module attributes {stable_mosaic.version = 11 : i64} {
  func.func @kernel(%arg0: i32, %arg1: memref<8x2xi32, #tpu.memory_space<smem>>, %arg2: memref<50x1x32xf32, #tpu.memory_space<vmem>>, %arg3: memref<64x128xf32, #tpu.memory_space<vmem>>, %arg4: memref<1x128xf32, #tpu.memory_space<vmem>>, %arg5: memref<64x128xf32, #tpu.memory_space<vmem>>, %arg6: memref<1x128xf32, #tpu.memory_space<vmem>>, %arg7: memref<2x8x32xf32, #tpu.memory_space<vmem>>, %arg8: memref<2x8x32xf32, #tpu.memory_space<vmem>>, %arg9: memref<8x64xf32, #tpu.memory_space<vmem>>, %arg10: memref<8x32xf32, #tpu.memory_space<vmem>>, %arg11: memref<8x32xf32, #tpu.memory_space<vmem>>, %arg12: memref<8x64xf32, #tpu.memory_space<vmem>>, %arg13: memref<8x32xf32, #tpu.memory_space<vmem>>, %arg14: memref<8x32xf32, #tpu.memory_space<vmem>>) attributes {dimension_semantics = [#tpu.dimension_semantics<arbitrary>], iteration_bounds = array<i64: 1>, scalar_prefetch = 1 : i64, scratch_operands = 6 : i64, tpu.core_type = #tpu.core_type<tc>, window_params = [{pipeline_mode = #tpu.pipeline_mode<synchronous>, transform_indices = @transform_0, window_bounds = array<i64: 50, 1, 32>}, {pipeline_mode = #tpu.pipeline_mode<synchronous>, transform_indices = @transform_1, window_bounds = array<i64: 64, 128>}, {pipeline_mode = #tpu.pipeline_mode<synchronous>, transform_indices = @transform_2, window_bounds = array<i64: 1, 128>}, {pipeline_mode = #tpu.pipeline_mode<synchronous>, transform_indices = @transform_3, window_bounds = array<i64: 64, 128>}, {pipeline_mode = #tpu.pipeline_mode<synchronous>, transform_indices = @transform_4, window_bounds = array<i64: 1, 128>}, {pipeline_mode = #tpu.pipeline_mode<synchronous>, transform_indices = @transform_5, window_bounds = array<i64: 2, 8, 32>}, {pipeline_mode = #tpu.pipeline_mode<synchronous>, transform_indices = @transform_6, window_bounds = array<i64: 2, 8, 32>}]} {
    %cst = arith.constant 0.000000e+00 : f32
    %0 = vector.broadcast %cst : f32 to vector<8x64xf32>
    %c0 = arith.constant 0 : index
    %c0_0 = arith.constant 0 : index
    %1 = vector.load %arg9[%c0, %c0_0] : memref<8x64xf32, #tpu.memory_space<vmem>>, vector<8x64xf32>
    tpu.vector_store %arg9[%c0, %c0_0], %0 {strides = array<i32>} : memref<8x64xf32, #tpu.memory_space<vmem>>, vector<8x64xf32>,
    %cst_1 = arith.constant 0.000000e+00 : f32
    %2 = vector.broadcast %cst_1 : f32 to vector<8x32xf32>
    %c0_2 = arith.constant 0 : index
    %c0_3 = arith.constant 0 : index
    %3 = vector.load %arg10[%c0_2, %c0_3] : memref<8x32xf32, #tpu.memory_space<vmem>>, vector<8x32xf32>
    tpu.vector_store %arg10[%c0_2, %c0_3], %2 {strides = array<i32>} : memref<8x32xf32, #tpu.memory_space<vmem>>, vector<8x32xf32>,
    %cst_4 = arith.constant 0.000000e+00 : f32
    %4 = vector.broadcast %cst_4 : f32 to vector<8x32xf32>
    %c0_5 = arith.constant 0 : index
    %c0_6 = arith.constant 0 : index
    %5 = vector.load %arg11[%c0_5, %c0_6] : memref<8x32xf32, #tpu.memory_space<vmem>>, vector<8x32xf32>
    tpu.vector_store %arg11[%c0_5, %c0_6], %4 {strides = array<i32>} : memref<8x32xf32, #tpu.memory_space<vmem>>, vector<8x32xf32>,
    %cst_7 = arith.constant 0.000000e+00 : f32
    %6 = vector.broadcast %cst_7 : f32 to vector<8x64xf32>
    %c0_8 = arith.constant 0 : index
    %c0_9 = arith.constant 0 : index
    %7 = vector.load %arg12[%c0_8, %c0_9] : memref<8x64xf32, #tpu.memory_space<vmem>>, vector<8x64xf32>
    tpu.vector_store %arg12[%c0_8, %c0_9], %6 {strides = array<i32>} : memref<8x64xf32, #tpu.memory_space<vmem>>, vector<8x64xf32>,
    %cst_10 = arith.constant 0.000000e+00 : f32
    %8 = vector.broadcast %cst_10 : f32 to vector<8x32xf32>
    %c0_11 = arith.constant 0 : index
    %c0_12 = arith.constant 0 : index
    %9 = vector.load %arg13[%c0_11, %c0_12] : memref<8x32xf32, #tpu.memory_space<vmem>>, vector<8x32xf32>
    tpu.vector_store %arg13[%c0_11, %c0_12], %8 {strides = array<i32>} : memref<8x32xf32, #tpu.memory_space<vmem>>, vector<8x32xf32>,
    %cst_13 = arith.constant 0.000000e+00 : f32
    %10 = vector.broadcast %cst_13 : f32 to vector<8x32xf32>
    %c0_14 = arith.constant 0 : index
    %c0_15 = arith.constant 0 : index
    %11 = vector.load %arg14[%c0_14, %c0_15] : memref<8x32xf32, #tpu.memory_space<vmem>>, vector<8x32xf32>
    tpu.vector_store %arg14[%c0_14, %c0_15], %10 {strides = array<i32>} : memref<8x32xf32, #tpu.memory_space<vmem>>, vector<8x32xf32>,
    %c0_16 = arith.constant 0 : index
    %c0_17 = arith.constant 0 : index
    %12 = vector.load %arg4[%c0_16, %c0_17] : memref<1x128xf32, #tpu.memory_space<vmem>>, vector<1x128xf32>
    %c0_18 = arith.constant 0 : index
    %c0_19 = arith.constant 0 : index
    %13 = vector.load %arg6[%c0_18, %c0_19] : memref<1x128xf32, #tpu.memory_space<vmem>>, vector<1x128xf32>
    %c0_i32 = arith.constant 0 : i32
    %14 = arith.index_cast %c0_i32 : i32 to index
    %c0_20 = arith.constant 0 : index
    %15 = memref.load %arg1[%14, %c0_20] : memref<8x2xi32, #tpu.memory_space<smem>>
    %16 = arith.index_cast %15 : i32 to index
    %c0_21 = arith.constant 0 : index
    %c0_22 = arith.constant 0 : index
    %17 = vector.load %arg2[%16, %c0_21, %c0_22] : memref<50x1x32xf32, #tpu.memory_space<vmem>>, vector<1x1x32xf32>
    %18 = vector.shape_cast %17 : vector<1x1x32xf32> to vector<1x32xf32>
    %c0_23 = arith.constant 0 : index
    %c0_24 = arith.constant 0 : index
    %19 = vector.load %arg9[%c0_23, %c0_24] : memref<8x64xf32, #tpu.memory_space<vmem>>, vector<1x32xf32>
    tpu.vector_store %arg9[%c0_23, %c0_24], %18 {strides = array<i32>} : memref<8x64xf32, #tpu.memory_space<vmem>>, vector<1x32xf32>,
    %20 = arith.index_cast %c0_i32 : i32 to index
    %c1 = arith.constant 1 : index
    %21 = memref.load %arg1[%20, %c1] : memref<8x2xi32, #tpu.memory_space<smem>>
    %22 = arith.index_cast %21 : i32 to index
    %c0_25 = arith.constant 0 : index
    %c0_26 = arith.constant 0 : index
    %23 = vector.load %arg2[%22, %c0_25, %c0_26] : memref<50x1x32xf32, #tpu.memory_space<vmem>>, vector<1x1x32xf32>
    %24 = vector.shape_cast %23 : vector<1x1x32xf32> to vector<1x32xf32>
    %c1_27 = arith.constant 1 : index
    %c0_28 = arith.constant 0 : index
    %25 = vector.load %arg9[%c1_27, %c0_28] : memref<8x64xf32, #tpu.memory_space<vmem>>, vector<1x32xf32>
    tpu.vector_store %arg9[%c1_27, %c0_28], %24 {strides = array<i32>} : memref<8x64xf32, #tpu.memory_space<vmem>>, vector<1x32xf32>,
    %c0_29 = arith.constant 0 : index
    %c0_30 = arith.constant 0 : index
    %26 = vector.load %arg10[%c0_29, %c0_30] : memref<8x32xf32, #tpu.memory_space<vmem>>, vector<8x32xf32>
    %c0_31 = arith.constant 0 : index
    %c32 = arith.constant 32 : index
    %27 = vector.load %arg9[%c0_31, %c32] : memref<8x64xf32, #tpu.memory_space<vmem>>, vector<8x32xf32>
    tpu.vector_store %arg9[%c0_31, %c32], %26 {strides = array<i32>} : memref<8x64xf32, #tpu.memory_space<vmem>>, vector<8x32xf32>,
    %c0_32 = arith.constant 0 : index
    %c0_33 = arith.constant 0 : index
    %28 = vector.load %arg9[%c0_32, %c0_33] : memref<8x64xf32, #tpu.memory_space<vmem>>, vector<8x64xf32>
    %c0_34 = arith.constant 0 : index
    %c0_35 = arith.constant 0 : index
    %29 = vector.load %arg11[%c0_34, %c0_35] : memref<8x32xf32, #tpu.memory_space<vmem>>, vector<8x32xf32>
    %c0_36 = arith.constant 0 : index
    %c0_37 = arith.constant 0 : index
    %30 = vector.load %arg3[%c0_36, %c0_37] : memref<64x128xf32, #tpu.memory_space<vmem>>, vector<64x128xf32>
    %cst_38 = arith.constant dense<0.000000e+00> : vector<8x128xf32>
    %31 = tpu.matmul %28, %30, %cst_38 {dimension_numbers = #tpu.dot_dimension_numbers<[1], [0], [0], [1], [0, 0, 1, 1], [], []>} : vector<8x64xf32>, vector<64x128xf32>, vector<8x128xf32> -> vector<8x128xf32>
    %32 = vector.broadcast %12 : vector<1x128xf32> to vector<8x128xf32>
    %33 = arith.addf %31, %32 : vector<8x128xf32>
    %34 = tpu.iota {dimensions = array<i32: 1>} : vector<8x128xi32>
    %c64_i32 = arith.constant 64 : i32
    %35 = vector.broadcast %c64_i32 : i32 to vector<8x128xi32>
    %36 = arith.cmpi sge, %34, %35 : vector<8x128xi32>
    %c96_i32 = arith.constant 96 : i32
    %37 = vector.broadcast %c96_i32 : i32 to vector<8x128xi32>
    %38 = arith.cmpi slt, %34, %37 : vector<8x128xi32>
    %39 = arith.andi %36, %38 : vector<8x128xi1>
    %40 = math.tanh %33 : vector<8x128xf32>
    %41 = arith.negf %33 : vector<8x128xf32>
    %42 = math.exp %41 : vector<8x128xf32>
    %cst_39 = arith.constant 1.000000e+00 : f32
    %43 = vector.broadcast %cst_39 : f32 to vector<8x128xf32>
    %44 = arith.addf %43, %42 : vector<8x128xf32>
    %45 = arith.divf %43, %44 : vector<8x128xf32>
    %46 = arith.select %39, %40, %45 : vector<8x128xi1>, vector<8x128xf32>
    %47 = vector.extract_strided_slice %46 {offsets = [0, 0], sizes = [8, 32], strides = [1, 1]} : vector<8x128xf32> to vector<8x32xf32>
    %48 = vector.extract_strided_slice %46 {offsets = [0, 32], sizes = [8, 32], strides = [1, 1]} : vector<8x128xf32> to vector<8x32xf32>
    %49 = vector.extract_strided_slice %46 {offsets = [0, 64], sizes = [8, 32], strides = [1, 1]} : vector<8x128xf32> to vector<8x32xf32>
    %50 = vector.extract_strided_slice %46 {offsets = [0, 96], sizes = [8, 32], strides = [1, 1]} : vector<8x128xf32> to vector<8x32xf32>
    %51 = arith.mulf %48, %29 : vector<8x32xf32>
    %52 = arith.mulf %47, %49 : vector<8x32xf32>
    %53 = arith.addf %51, %52 : vector<8x32xf32>
    %54 = math.tanh %53 : vector<8x32xf32>
    %55 = arith.mulf %50, %54 : vector<8x32xf32>
    %c0_40 = arith.constant 0 : index
    %c0_41 = arith.constant 0 : index
    %56 = vector.load %arg10[%c0_40, %c0_41] : memref<8x32xf32, #tpu.memory_space<vmem>>, vector<8x32xf32>
    tpu.vector_store %arg10[%c0_40, %c0_41], %55 {strides = array<i32>} : memref<8x32xf32, #tpu.memory_space<vmem>>, vector<8x32xf32>,
    %c0_42 = arith.constant 0 : index
    %c0_43 = arith.constant 0 : index
    %57 = vector.load %arg11[%c0_42, %c0_43] : memref<8x32xf32, #tpu.memory_space<vmem>>, vector<8x32xf32>
    tpu.vector_store %arg11[%c0_42, %c0_43], %53 {strides = array<i32>} : memref<8x32xf32, #tpu.memory_space<vmem>>, vector<8x32xf32>,
    %c0_44 = arith.constant 0 : index
    %c0_45 = arith.constant 0 : index
    %58 = vector.load %arg12[%c0_44, %c0_45] : memref<8x64xf32, #tpu.memory_space<vmem>>, vector<8x32xf32>
    tpu.vector_store %arg12[%c0_44, %c0_45], %55 {strides = array<i32>} : memref<8x64xf32, #tpu.memory_space<vmem>>, vector<8x32xf32>,
    %c0_46 = arith.constant 0 : index
    %c0_47 = arith.constant 0 : index
    %59 = vector.load %arg13[%c0_46, %c0_47] : memref<8x32xf32, #tpu.memory_space<vmem>>, vector<8x32xf32>
    %c0_48 = arith.constant 0 : index
    %c32_49 = arith.constant 32 : index
    %60 = vector.load %arg12[%c0_48, %c32_49] : memref<8x64xf32, #tpu.memory_space<vmem>>, vector<8x32xf32>
    tpu.vector_store %arg12[%c0_48, %c32_49], %59 {strides = array<i32>} : memref<8x64xf32, #tpu.memory_space<vmem>>, vector<8x32xf32>,
    %c0_50 = arith.constant 0 : index
    %c0_51 = arith.constant 0 : index
    %61 = vector.load %arg12[%c0_50, %c0_51] : memref<8x64xf32, #tpu.memory_space<vmem>>, vector<8x64xf32>
    %c0_52 = arith.constant 0 : index
    %c0_53 = arith.constant 0 : index
    %62 = vector.load %arg14[%c0_52, %c0_53] : memref<8x32xf32, #tpu.memory_space<vmem>>, vector<8x32xf32>
    %c0_54 = arith.constant 0 : index
    %c0_55 = arith.constant 0 : index
    %63 = vector.load %arg5[%c0_54, %c0_55] : memref<64x128xf32, #tpu.memory_space<vmem>>, vector<64x128xf32>
    %cst_56 = arith.constant dense<0.000000e+00> : vector<8x128xf32>
    %64 = tpu.matmul %61, %63, %cst_56 {dimension_numbers = #tpu.dot_dimension_numbers<[1], [0], [0], [1], [0, 0, 1, 1], [], []>} : vector<8x64xf32>, vector<64x128xf32>, vector<8x128xf32> -> vector<8x128xf32>
    %65 = vector.broadcast %13 : vector<1x128xf32> to vector<8x128xf32>
    %66 = arith.addf %64, %65 : vector<8x128xf32>
    %67 = tpu.iota {dimensions = array<i32: 1>} : vector<8x128xi32>
    %c64_i32_57 = arith.constant 64 : i32
    %68 = vector.broadcast %c64_i32_57 : i32 to vector<8x128xi32>
    %69 = arith.cmpi sge, %67, %68 : vector<8x128xi32>
    %c96_i32_58 = arith.constant 96 : i32
    %70 = vector.broadcast %c96_i32_58 : i32 to vector<8x128xi32>
    %71 = arith.cmpi slt, %67, %70 : vector<8x128xi32>
    %72 = arith.andi %69, %71 : vector<8x128xi1>
    %73 = math.tanh %66 : vector<8x128xf32>
    %74 = arith.negf %66 : vector<8x128xf32>
    %75 = math.exp %74 : vector<8x128xf32>
    %cst_59 = arith.constant 1.000000e+00 : f32
    %76 = vector.broadcast %cst_59 : f32 to vector<8x128xf32>
    %77 = arith.addf %76, %75 : vector<8x128xf32>
    %78 = arith.divf %76, %77 : vector<8x128xf32>
    %79 = arith.select %72, %73, %78 : vector<8x128xi1>, vector<8x128xf32>
    %80 = vector.extract_strided_slice %79 {offsets = [0, 0], sizes = [8, 32], strides = [1, 1]} : vector<8x128xf32> to vector<8x32xf32>
    %81 = vector.extract_strided_slice %79 {offsets = [0, 32], sizes = [8, 32], strides = [1, 1]} : vector<8x128xf32> to vector<8x32xf32>
    %82 = vector.extract_strided_slice %79 {offsets = [0, 64], sizes = [8, 32], strides = [1, 1]} : vector<8x128xf32> to vector<8x32xf32>
    %83 = vector.extract_strided_slice %79 {offsets = [0, 96], sizes = [8, 32], strides = [1, 1]} : vector<8x128xf32> to vector<8x32xf32>
    %84 = arith.mulf %81, %62 : vector<8x32xf32>
    %85 = arith.mulf %80, %82 : vector<8x32xf32>
    %86 = arith.addf %84, %85 : vector<8x32xf32>
    %87 = math.tanh %86 : vector<8x32xf32>
    %88 = arith.mulf %83, %87 : vector<8x32xf32>
    %c0_60 = arith.constant 0 : index
    %c0_61 = arith.constant 0 : index
    %89 = vector.load %arg13[%c0_60, %c0_61] : memref<8x32xf32, #tpu.memory_space<vmem>>, vector<8x32xf32>
    tpu.vector_store %arg13[%c0_60, %c0_61], %88 {strides = array<i32>} : memref<8x32xf32, #tpu.memory_space<vmem>>, vector<8x32xf32>,
    %c0_62 = arith.constant 0 : index
    %c0_63 = arith.constant 0 : index
    %90 = vector.load %arg14[%c0_62, %c0_63] : memref<8x32xf32, #tpu.memory_space<vmem>>, vector<8x32xf32>
    tpu.vector_store %arg14[%c0_62, %c0_63], %86 {strides = array<i32>} : memref<8x32xf32, #tpu.memory_space<vmem>>, vector<8x32xf32>,
    %c1_i32 = arith.constant 1 : i32
    %91 = arith.index_cast %c1_i32 : i32 to index
    %c0_64 = arith.constant 0 : index
    %92 = memref.load %arg1[%91, %c0_64] : memref<8x2xi32, #tpu.memory_space<smem>>
    %93 = arith.index_cast %92 : i32 to index
    %c0_65 = arith.constant 0 : index
    %c0_66 = arith.constant 0 : index
    %94 = vector.load %arg2[%93, %c0_65, %c0_66] : memref<50x1x32xf32, #tpu.memory_space<vmem>>, vector<1x1x32xf32>
    %95 = vector.shape_cast %94 : vector<1x1x32xf32> to vector<1x32xf32>
    %c0_67 = arith.constant 0 : index
    %c0_68 = arith.constant 0 : index
    %96 = vector.load %arg9[%c0_67, %c0_68] : memref<8x64xf32, #tpu.memory_space<vmem>>, vector<1x32xf32>
    tpu.vector_store %arg9[%c0_67, %c0_68], %95 {strides = array<i32>} : memref<8x64xf32, #tpu.memory_space<vmem>>, vector<1x32xf32>,
    %97 = arith.index_cast %c1_i32 : i32 to index
    %c1_69 = arith.constant 1 : index
    %98 = memref.load %arg1[%97, %c1_69] : memref<8x2xi32, #tpu.memory_space<smem>>
    %99 = arith.index_cast %98 : i32 to index
    %c0_70 = arith.constant 0 : index
    %c0_71 = arith.constant 0 : index
    %100 = vector.load %arg2[%99, %c0_70, %c0_71] : memref<50x1x32xf32, #tpu.memory_space<vmem>>, vector<1x1x32xf32>
    %101 = vector.shape_cast %100 : vector<1x1x32xf32> to vector<1x32xf32>
    %c1_72 = arith.constant 1 : index
    %c0_73 = arith.constant 0 : index
    %102 = vector.load %arg9[%c1_72, %c0_73] : memref<8x64xf32, #tpu.memory_space<vmem>>, vector<1x32xf32>
    tpu.vector_store %arg9[%c1_72, %c0_73], %101 {strides = array<i32>} : memref<8x64xf32, #tpu.memory_space<vmem>>, vector<1x32xf32>,
    %c0_74 = arith.constant 0 : index
    %c0_75 = arith.constant 0 : index
    %103 = vector.load %arg10[%c0_74, %c0_75] : memref<8x32xf32, #tpu.memory_space<vmem>>, vector<8x32xf32>
    %c0_76 = arith.constant 0 : index
    %c32_77 = arith.constant 32 : index
    %104 = vector.load %arg9[%c0_76, %c32_77] : memref<8x64xf32, #tpu.memory_space<vmem>>, vector<8x32xf32>
    tpu.vector_store %arg9[%c0_76, %c32_77], %103 {strides = array<i32>} : memref<8x64xf32, #tpu.memory_space<vmem>>, vector<8x32xf32>,
    %c0_78 = arith.constant 0 : index
    %c0_79 = arith.constant 0 : index
    %105 = vector.load %arg9[%c0_78, %c0_79] : memref<8x64xf32, #tpu.memory_space<vmem>>, vector<8x64xf32>
    %c0_80 = arith.constant 0 : index
    %c0_81 = arith.constant 0 : index
    %106 = vector.load %arg11[%c0_80, %c0_81] : memref<8x32xf32, #tpu.memory_space<vmem>>, vector<8x32xf32>
    %c0_82 = arith.constant 0 : index
    %c0_83 = arith.constant 0 : index
    %107 = vector.load %arg3[%c0_82, %c0_83] : memref<64x128xf32, #tpu.memory_space<vmem>>, vector<64x128xf32>
    %cst_84 = arith.constant dense<0.000000e+00> : vector<8x128xf32>
    %108 = tpu.matmul %105, %107, %cst_84 {dimension_numbers = #tpu.dot_dimension_numbers<[1], [0], [0], [1], [0, 0, 1, 1], [], []>} : vector<8x64xf32>, vector<64x128xf32>, vector<8x128xf32> -> vector<8x128xf32>
    %109 = vector.broadcast %12 : vector<1x128xf32> to vector<8x128xf32>
    %110 = arith.addf %108, %109 : vector<8x128xf32>
    %111 = tpu.iota {dimensions = array<i32: 1>} : vector<8x128xi32>
    %c64_i32_85 = arith.constant 64 : i32
    %112 = vector.broadcast %c64_i32_85 : i32 to vector<8x128xi32>
    %113 = arith.cmpi sge, %111, %112 : vector<8x128xi32>
    %c96_i32_86 = arith.constant 96 : i32
    %114 = vector.broadcast %c96_i32_86 : i32 to vector<8x128xi32>
    %115 = arith.cmpi slt, %111, %114 : vector<8x128xi32>
    %116 = arith.andi %113, %115 : vector<8x128xi1>
    %117 = math.tanh %110 : vector<8x128xf32>
    %118 = arith.negf %110 : vector<8x128xf32>
    %119 = math.exp %118 : vector<8x128xf32>
    %cst_87 = arith.constant 1.000000e+00 : f32
    %120 = vector.broadcast %cst_87 : f32 to vector<8x128xf32>
    %121 = arith.addf %120, %119 : vector<8x128xf32>
    %122 = arith.divf %120, %121 : vector<8x128xf32>
    %123 = arith.select %116, %117, %122 : vector<8x128xi1>, vector<8x128xf32>
    %124 = vector.extract_strided_slice %123 {offsets = [0, 0], sizes = [8, 32], strides = [1, 1]} : vector<8x128xf32> to vector<8x32xf32>
    %125 = vector.extract_strided_slice %123 {offsets = [0, 32], sizes = [8, 32], strides = [1, 1]} : vector<8x128xf32> to vector<8x32xf32>
    %126 = vector.extract_strided_slice %123 {offsets = [0, 64], sizes = [8, 32], strides = [1, 1]} : vector<8x128xf32> to vector<8x32xf32>
    %127 = vector.extract_strided_slice %123 {offsets = [0, 96], sizes = [8, 32], strides = [1, 1]} : vector<8x128xf32> to vector<8x32xf32>
    %128 = arith.mulf %125, %106 : vector<8x32xf32>
    %129 = arith.mulf %124, %126 : vector<8x32xf32>
    %130 = arith.addf %128, %129 : vector<8x32xf32>
    %131 = math.tanh %130 : vector<8x32xf32>
    %132 = arith.mulf %127, %131 : vector<8x32xf32>
    %c0_88 = arith.constant 0 : index
    %c0_89 = arith.constant 0 : index
    %133 = vector.load %arg10[%c0_88, %c0_89] : memref<8x32xf32, #tpu.memory_space<vmem>>, vector<8x32xf32>
    tpu.vector_store %arg10[%c0_88, %c0_89], %132 {strides = array<i32>} : memref<8x32xf32, #tpu.memory_space<vmem>>, vector<8x32xf32>,
    %c0_90 = arith.constant 0 : index
    %c0_91 = arith.constant 0 : index
    %134 = vector.load %arg11[%c0_90, %c0_91] : memref<8x32xf32, #tpu.memory_space<vmem>>, vector<8x32xf32>
    tpu.vector_store %arg11[%c0_90, %c0_91], %130 {strides = array<i32>} : memref<8x32xf32, #tpu.memory_space<vmem>>, vector<8x32xf32>,
    %c0_92 = arith.constant 0 : index
    %c0_93 = arith.constant 0 : index
    %135 = vector.load %arg12[%c0_92, %c0_93] : memref<8x64xf32, #tpu.memory_space<vmem>>, vector<8x32xf32>
    tpu.vector_store %arg12[%c0_92, %c0_93], %132 {strides = array<i32>} : memref<8x64xf32, #tpu.memory_space<vmem>>, vector<8x32xf32>,
    %c0_94 = arith.constant 0 : index
    %c0_95 = arith.constant 0 : index
    %136 = vector.load %arg13[%c0_94, %c0_95] : memref<8x32xf32, #tpu.memory_space<vmem>>, vector<8x32xf32>
    %c0_96 = arith.constant 0 : index
    %c32_97 = arith.constant 32 : index
    %137 = vector.load %arg12[%c0_96, %c32_97] : memref<8x64xf32, #tpu.memory_space<vmem>>, vector<8x32xf32>
    tpu.vector_store %arg12[%c0_96, %c32_97], %136 {strides = array<i32>} : memref<8x64xf32, #tpu.memory_space<vmem>>, vector<8x32xf32>,
    %c0_98 = arith.constant 0 : index
    %c0_99 = arith.constant 0 : index
    %138 = vector.load %arg12[%c0_98, %c0_99] : memref<8x64xf32, #tpu.memory_space<vmem>>, vector<8x64xf32>
    %c0_100 = arith.constant 0 : index
    %c0_101 = arith.constant 0 : index
    %139 = vector.load %arg14[%c0_100, %c0_101] : memref<8x32xf32, #tpu.memory_space<vmem>>, vector<8x32xf32>
    %c0_102 = arith.constant 0 : index
    %c0_103 = arith.constant 0 : index
    %140 = vector.load %arg5[%c0_102, %c0_103] : memref<64x128xf32, #tpu.memory_space<vmem>>, vector<64x128xf32>
    %cst_104 = arith.constant dense<0.000000e+00> : vector<8x128xf32>
    %141 = tpu.matmul %138, %140, %cst_104 {dimension_numbers = #tpu.dot_dimension_numbers<[1], [0], [0], [1], [0, 0, 1, 1], [], []>} : vector<8x64xf32>, vector<64x128xf32>, vector<8x128xf32> -> vector<8x128xf32>
    %142 = vector.broadcast %13 : vector<1x128xf32> to vector<8x128xf32>
    %143 = arith.addf %141, %142 : vector<8x128xf32>
    %144 = tpu.iota {dimensions = array<i32: 1>} : vector<8x128xi32>
    %c64_i32_105 = arith.constant 64 : i32
    %145 = vector.broadcast %c64_i32_105 : i32 to vector<8x128xi32>
    %146 = arith.cmpi sge, %144, %145 : vector<8x128xi32>
    %c96_i32_106 = arith.constant 96 : i32
    %147 = vector.broadcast %c96_i32_106 : i32 to vector<8x128xi32>
    %148 = arith.cmpi slt, %144, %147 : vector<8x128xi32>
    %149 = arith.andi %146, %148 : vector<8x128xi1>
    %150 = math.tanh %143 : vector<8x128xf32>
    %151 = arith.negf %143 : vector<8x128xf32>
    %152 = math.exp %151 : vector<8x128xf32>
    %cst_107 = arith.constant 1.000000e+00 : f32
    %153 = vector.broadcast %cst_107 : f32 to vector<8x128xf32>
    %154 = arith.addf %153, %152 : vector<8x128xf32>
    %155 = arith.divf %153, %154 : vector<8x128xf32>
    %156 = arith.select %149, %150, %155 : vector<8x128xi1>, vector<8x128xf32>
    %157 = vector.extract_strided_slice %156 {offsets = [0, 0], sizes = [8, 32], strides = [1, 1]} : vector<8x128xf32> to vector<8x32xf32>
    %158 = vector.extract_strided_slice %156 {offsets = [0, 32], sizes = [8, 32], strides = [1, 1]} : vector<8x128xf32> to vector<8x32xf32>
    %159 = vector.extract_strided_slice %156 {offsets = [0, 64], sizes = [8, 32], strides = [1, 1]} : vector<8x128xf32> to vector<8x32xf32>
    %160 = vector.extract_strided_slice %156 {offsets = [0, 96], sizes = [8, 32], strides = [1, 1]} : vector<8x128xf32> to vector<8x32xf32>
    %161 = arith.mulf %158, %139 : vector<8x32xf32>
    %162 = arith.mulf %157, %159 : vector<8x32xf32>
    %163 = arith.addf %161, %162 : vector<8x32xf32>
    %164 = math.tanh %163 : vector<8x32xf32>
    %165 = arith.mulf %160, %164 : vector<8x32xf32>
    %c0_108 = arith.constant 0 : index
    %c0_109 = arith.constant 0 : index
    %166 = vector.load %arg13[%c0_108, %c0_109] : memref<8x32xf32, #tpu.memory_space<vmem>>, vector<8x32xf32>
    tpu.vector_store %arg13[%c0_108, %c0_109], %165 {strides = array<i32>} : memref<8x32xf32, #tpu.memory_space<vmem>>, vector<8x32xf32>,
    %c0_110 = arith.constant 0 : index
    %c0_111 = arith.constant 0 : index
    %167 = vector.load %arg14[%c0_110, %c0_111] : memref<8x32xf32, #tpu.memory_space<vmem>>, vector<8x32xf32>
    tpu.vector_store %arg14[%c0_110, %c0_111], %163 {strides = array<i32>} : memref<8x32xf32, #tpu.memory_space<vmem>>, vector<8x32xf32>,
    %c2_i32 = arith.constant 2 : i32
    %168 = arith.index_cast %c2_i32 : i32 to index
    %c0_112 = arith.constant 0 : index
    %169 = memref.load %arg1[%168, %c0_112] : memref<8x2xi32, #tpu.memory_space<smem>>
    %170 = arith.index_cast %169 : i32 to index
    %c0_113 = arith.constant 0 : index
    %c0_114 = arith.constant 0 : index
    %171 = vector.load %arg2[%170, %c0_113, %c0_114] : memref<50x1x32xf32, #tpu.memory_space<vmem>>, vector<1x1x32xf32>
    %172 = vector.shape_cast %171 : vector<1x1x32xf32> to vector<1x32xf32>
    %c0_115 = arith.constant 0 : index
    %c0_116 = arith.constant 0 : index
    %173 = vector.load %arg9[%c0_115, %c0_116] : memref<8x64xf32, #tpu.memory_space<vmem>>, vector<1x32xf32>
    tpu.vector_store %arg9[%c0_115, %c0_116], %172 {strides = array<i32>} : memref<8x64xf32, #tpu.memory_space<vmem>>, vector<1x32xf32>,
    %174 = arith.index_cast %c2_i32 : i32 to index
    %c1_117 = arith.constant 1 : index
    %175 = memref.load %arg1[%174, %c1_117] : memref<8x2xi32, #tpu.memory_space<smem>>
    %176 = arith.index_cast %175 : i32 to index
    %c0_118 = arith.constant 0 : index
    %c0_119 = arith.constant 0 : index
    %177 = vector.load %arg2[%176, %c0_118, %c0_119] : memref<50x1x32xf32, #tpu.memory_space<vmem>>, vector<1x1x32xf32>
    %178 = vector.shape_cast %177 : vector<1x1x32xf32> to vector<1x32xf32>
    %c1_120 = arith.constant 1 : index
    %c0_121 = arith.constant 0 : index
    %179 = vector.load %arg9[%c1_120, %c0_121] : memref<8x64xf32, #tpu.memory_space<vmem>>, vector<1x32xf32>
    tpu.vector_store %arg9[%c1_120, %c0_121], %178 {strides = array<i32>} : memref<8x64xf32, #tpu.memory_space<vmem>>, vector<1x32xf32>,
    %c0_122 = arith.constant 0 : index
    %c0_123 = arith.constant 0 : index
    %180 = vector.load %arg10[%c0_122, %c0_123] : memref<8x32xf32, #tpu.memory_space<vmem>>, vector<8x32xf32>
    %c0_124 = arith.constant 0 : index
    %c32_125 = arith.constant 32 : index
    %181 = vector.load %arg9[%c0_124, %c32_125] : memref<8x64xf32, #tpu.memory_space<vmem>>, vector<8x32xf32>
    tpu.vector_store %arg9[%c0_124, %c32_125], %180 {strides = array<i32>} : memref<8x64xf32, #tpu.memory_space<vmem>>, vector<8x32xf32>,
    %c0_126 = arith.constant 0 : index
    %c0_127 = arith.constant 0 : index
    %182 = vector.load %arg9[%c0_126, %c0_127] : memref<8x64xf32, #tpu.memory_space<vmem>>, vector<8x64xf32>
    %c0_128 = arith.constant 0 : index
    %c0_129 = arith.constant 0 : index
    %183 = vector.load %arg11[%c0_128, %c0_129] : memref<8x32xf32, #tpu.memory_space<vmem>>, vector<8x32xf32>
    %c0_130 = arith.constant 0 : index
    %c0_131 = arith.constant 0 : index
    %184 = vector.load %arg3[%c0_130, %c0_131] : memref<64x128xf32, #tpu.memory_space<vmem>>, vector<64x128xf32>
    %cst_132 = arith.constant dense<0.000000e+00> : vector<8x128xf32>
    %185 = tpu.matmul %182, %184, %cst_132 {dimension_numbers = #tpu.dot_dimension_numbers<[1], [0], [0], [1], [0, 0, 1, 1], [], []>} : vector<8x64xf32>, vector<64x128xf32>, vector<8x128xf32> -> vector<8x128xf32>
    %186 = vector.broadcast %12 : vector<1x128xf32> to vector<8x128xf32>
    %187 = arith.addf %185, %186 : vector<8x128xf32>
    %188 = tpu.iota {dimensions = array<i32: 1>} : vector<8x128xi32>
    %c64_i32_133 = arith.constant 64 : i32
    %189 = vector.broadcast %c64_i32_133 : i32 to vector<8x128xi32>
    %190 = arith.cmpi sge, %188, %189 : vector<8x128xi32>
    %c96_i32_134 = arith.constant 96 : i32
    %191 = vector.broadcast %c96_i32_134 : i32 to vector<8x128xi32>
    %192 = arith.cmpi slt, %188, %191 : vector<8x128xi32>
    %193 = arith.andi %190, %192 : vector<8x128xi1>
    %194 = math.tanh %187 : vector<8x128xf32>
    %195 = arith.negf %187 : vector<8x128xf32>
    %196 = math.exp %195 : vector<8x128xf32>
    %cst_135 = arith.constant 1.000000e+00 : f32
    %197 = vector.broadcast %cst_135 : f32 to vector<8x128xf32>
    %198 = arith.addf %197, %196 : vector<8x128xf32>
    %199 = arith.divf %197, %198 : vector<8x128xf32>
    %200 = arith.select %193, %194, %199 : vector<8x128xi1>, vector<8x128xf32>
    %201 = vector.extract_strided_slice %200 {offsets = [0, 0], sizes = [8, 32], strides = [1, 1]} : vector<8x128xf32> to vector<8x32xf32>
    %202 = vector.extract_strided_slice %200 {offsets = [0, 32], sizes = [8, 32], strides = [1, 1]} : vector<8x128xf32> to vector<8x32xf32>
    %203 = vector.extract_strided_slice %200 {offsets = [0, 64], sizes = [8, 32], strides = [1, 1]} : vector<8x128xf32> to vector<8x32xf32>
    %204 = vector.extract_strided_slice %200 {offsets = [0, 96], sizes = [8, 32], strides = [1, 1]} : vector<8x128xf32> to vector<8x32xf32>
    %205 = arith.mulf %202, %183 : vector<8x32xf32>
    %206 = arith.mulf %201, %203 : vector<8x32xf32>
    %207 = arith.addf %205, %206 : vector<8x32xf32>
    %208 = math.tanh %207 : vector<8x32xf32>
    %209 = arith.mulf %204, %208 : vector<8x32xf32>
    %c0_136 = arith.constant 0 : index
    %c0_137 = arith.constant 0 : index
    %210 = vector.load %arg10[%c0_136, %c0_137] : memref<8x32xf32, #tpu.memory_space<vmem>>, vector<8x32xf32>
    tpu.vector_store %arg10[%c0_136, %c0_137], %209 {strides = array<i32>} : memref<8x32xf32, #tpu.memory_space<vmem>>, vector<8x32xf32>,
    %c0_138 = arith.constant 0 : index
    %c0_139 = arith.constant 0 : index
    %211 = vector.load %arg11[%c0_138, %c0_139] : memref<8x32xf32, #tpu.memory_space<vmem>>, vector<8x32xf32>
    tpu.vector_store %arg11[%c0_138, %c0_139], %207 {strides = array<i32>} : memref<8x32xf32, #tpu.memory_space<vmem>>, vector<8x32xf32>,
    %c0_140 = arith.constant 0 : index
    %c0_141 = arith.constant 0 : index
    %212 = vector.load %arg12[%c0_140, %c0_141] : memref<8x64xf32, #tpu.memory_space<vmem>>, vector<8x32xf32>
    tpu.vector_store %arg12[%c0_140, %c0_141], %209 {strides = array<i32>} : memref<8x64xf32, #tpu.memory_space<vmem>>, vector<8x32xf32>,
    %c0_142 = arith.constant 0 : index
    %c0_143 = arith.constant 0 : index
    %213 = vector.load %arg13[%c0_142, %c0_143] : memref<8x32xf32, #tpu.memory_space<vmem>>, vector<8x32xf32>
    %c0_144 = arith.constant 0 : index
    %c32_145 = arith.constant 32 : index
    %214 = vector.load %arg12[%c0_144, %c32_145] : memref<8x64xf32, #tpu.memory_space<vmem>>, vector<8x32xf32>
    tpu.vector_store %arg12[%c0_144, %c32_145], %213 {strides = array<i32>} : memref<8x64xf32, #tpu.memory_space<vmem>>, vector<8x32xf32>,
    %c0_146 = arith.constant 0 : index
    %c0_147 = arith.constant 0 : index
    %215 = vector.load %arg12[%c0_146, %c0_147] : memref<8x64xf32, #tpu.memory_space<vmem>>, vector<8x64xf32>
    %c0_148 = arith.constant 0 : index
    %c0_149 = arith.constant 0 : index
    %216 = vector.load %arg14[%c0_148, %c0_149] : memref<8x32xf32, #tpu.memory_space<vmem>>, vector<8x32xf32>
    %c0_150 = arith.constant 0 : index
    %c0_151 = arith.constant 0 : index
    %217 = vector.load %arg5[%c0_150, %c0_151] : memref<64x128xf32, #tpu.memory_space<vmem>>, vector<64x128xf32>
    %cst_152 = arith.constant dense<0.000000e+00> : vector<8x128xf32>
    %218 = tpu.matmul %215, %217, %cst_152 {dimension_numbers = #tpu.dot_dimension_numbers<[1], [0], [0], [1], [0, 0, 1, 1], [], []>} : vector<8x64xf32>, vector<64x128xf32>, vector<8x128xf32> -> vector<8x128xf32>
    %219 = vector.broadcast %13 : vector<1x128xf32> to vector<8x128xf32>
    %220 = arith.addf %218, %219 : vector<8x128xf32>
    %221 = tpu.iota {dimensions = array<i32: 1>} : vector<8x128xi32>
    %c64_i32_153 = arith.constant 64 : i32
    %222 = vector.broadcast %c64_i32_153 : i32 to vector<8x128xi32>
    %223 = arith.cmpi sge, %221, %222 : vector<8x128xi32>
    %c96_i32_154 = arith.constant 96 : i32
    %224 = vector.broadcast %c96_i32_154 : i32 to vector<8x128xi32>
    %225 = arith.cmpi slt, %221, %224 : vector<8x128xi32>
    %226 = arith.andi %223, %225 : vector<8x128xi1>
    %227 = math.tanh %220 : vector<8x128xf32>
    %228 = arith.negf %220 : vector<8x128xf32>
    %229 = math.exp %228 : vector<8x128xf32>
    %cst_155 = arith.constant 1.000000e+00 : f32
    %230 = vector.broadcast %cst_155 : f32 to vector<8x128xf32>
    %231 = arith.addf %230, %229 : vector<8x128xf32>
    %232 = arith.divf %230, %231 : vector<8x128xf32>
    %233 = arith.select %226, %227, %232 : vector<8x128xi1>, vector<8x128xf32>
    %234 = vector.extract_strided_slice %233 {offsets = [0, 0], sizes = [8, 32], strides = [1, 1]} : vector<8x128xf32> to vector<8x32xf32>
    %235 = vector.extract_strided_slice %233 {offsets = [0, 32], sizes = [8, 32], strides = [1, 1]} : vector<8x128xf32> to vector<8x32xf32>
    %236 = vector.extract_strided_slice %233 {offsets = [0, 64], sizes = [8, 32], strides = [1, 1]} : vector<8x128xf32> to vector<8x32xf32>
    %237 = vector.extract_strided_slice %233 {offsets = [0, 96], sizes = [8, 32], strides = [1, 1]} : vector<8x128xf32> to vector<8x32xf32>
    %238 = arith.mulf %235, %216 : vector<8x32xf32>
    %239 = arith.mulf %234, %236 : vector<8x32xf32>
    %240 = arith.addf %238, %239 : vector<8x32xf32>
    %241 = math.tanh %240 : vector<8x32xf32>
    %242 = arith.mulf %237, %241 : vector<8x32xf32>
    %c0_156 = arith.constant 0 : index
    %c0_157 = arith.constant 0 : index
    %243 = vector.load %arg13[%c0_156, %c0_157] : memref<8x32xf32, #tpu.memory_space<vmem>>, vector<8x32xf32>
    tpu.vector_store %arg13[%c0_156, %c0_157], %242 {strides = array<i32>} : memref<8x32xf32, #tpu.memory_space<vmem>>, vector<8x32xf32>,
    %c0_158 = arith.constant 0 : index
    %c0_159 = arith.constant 0 : index
    %244 = vector.load %arg14[%c0_158, %c0_159] : memref<8x32xf32, #tpu.memory_space<vmem>>, vector<8x32xf32>
    tpu.vector_store %arg14[%c0_158, %c0_159], %240 {strides = array<i32>} : memref<8x32xf32, #tpu.memory_space<vmem>>, vector<8x32xf32>,
    %c3_i32 = arith.constant 3 : i32
    %245 = arith.index_cast %c3_i32 : i32 to index
    %c0_160 = arith.constant 0 : index
    %246 = memref.load %arg1[%245, %c0_160] : memref<8x2xi32, #tpu.memory_space<smem>>
    %247 = arith.index_cast %246 : i32 to index
    %c0_161 = arith.constant 0 : index
    %c0_162 = arith.constant 0 : index
    %248 = vector.load %arg2[%247, %c0_161, %c0_162] : memref<50x1x32xf32, #tpu.memory_space<vmem>>, vector<1x1x32xf32>
    %249 = vector.shape_cast %248 : vector<1x1x32xf32> to vector<1x32xf32>
    %c0_163 = arith.constant 0 : index
    %c0_164 = arith.constant 0 : index
    %250 = vector.load %arg9[%c0_163, %c0_164] : memref<8x64xf32, #tpu.memory_space<vmem>>, vector<1x32xf32>
    tpu.vector_store %arg9[%c0_163, %c0_164], %249 {strides = array<i32>} : memref<8x64xf32, #tpu.memory_space<vmem>>, vector<1x32xf32>,
    %251 = arith.index_cast %c3_i32 : i32 to index
    %c1_165 = arith.constant 1 : index
    %252 = memref.load %arg1[%251, %c1_165] : memref<8x2xi32, #tpu.memory_space<smem>>
    %253 = arith.index_cast %252 : i32 to index
    %c0_166 = arith.constant 0 : index
    %c0_167 = arith.constant 0 : index
    %254 = vector.load %arg2[%253, %c0_166, %c0_167] : memref<50x1x32xf32, #tpu.memory_space<vmem>>, vector<1x1x32xf32>
    %255 = vector.shape_cast %254 : vector<1x1x32xf32> to vector<1x32xf32>
    %c1_168 = arith.constant 1 : index
    %c0_169 = arith.constant 0 : index
    %256 = vector.load %arg9[%c1_168, %c0_169] : memref<8x64xf32, #tpu.memory_space<vmem>>, vector<1x32xf32>
    tpu.vector_store %arg9[%c1_168, %c0_169], %255 {strides = array<i32>} : memref<8x64xf32, #tpu.memory_space<vmem>>, vector<1x32xf32>,
    %c0_170 = arith.constant 0 : index
    %c0_171 = arith.constant 0 : index
    %257 = vector.load %arg10[%c0_170, %c0_171] : memref<8x32xf32, #tpu.memory_space<vmem>>, vector<8x32xf32>
    %c0_172 = arith.constant 0 : index
    %c32_173 = arith.constant 32 : index
    %258 = vector.load %arg9[%c0_172, %c32_173] : memref<8x64xf32, #tpu.memory_space<vmem>>, vector<8x32xf32>
    tpu.vector_store %arg9[%c0_172, %c32_173], %257 {strides = array<i32>} : memref<8x64xf32, #tpu.memory_space<vmem>>, vector<8x32xf32>,
    %c0_174 = arith.constant 0 : index
    %c0_175 = arith.constant 0 : index
    %259 = vector.load %arg9[%c0_174, %c0_175] : memref<8x64xf32, #tpu.memory_space<vmem>>, vector<8x64xf32>
    %c0_176 = arith.constant 0 : index
    %c0_177 = arith.constant 0 : index
    %260 = vector.load %arg11[%c0_176, %c0_177] : memref<8x32xf32, #tpu.memory_space<vmem>>, vector<8x32xf32>
    %c0_178 = arith.constant 0 : index
    %c0_179 = arith.constant 0 : index
    %261 = vector.load %arg3[%c0_178, %c0_179] : memref<64x128xf32, #tpu.memory_space<vmem>>, vector<64x128xf32>
    %cst_180 = arith.constant dense<0.000000e+00> : vector<8x128xf32>
    %262 = tpu.matmul %259, %261, %cst_180 {dimension_numbers = #tpu.dot_dimension_numbers<[1], [0], [0], [1], [0, 0, 1, 1], [], []>} : vector<8x64xf32>, vector<64x128xf32>, vector<8x128xf32> -> vector<8x128xf32>
    %263 = vector.broadcast %12 : vector<1x128xf32> to vector<8x128xf32>
    %264 = arith.addf %262, %263 : vector<8x128xf32>
    %265 = tpu.iota {dimensions = array<i32: 1>} : vector<8x128xi32>
    %c64_i32_181 = arith.constant 64 : i32
    %266 = vector.broadcast %c64_i32_181 : i32 to vector<8x128xi32>
    %267 = arith.cmpi sge, %265, %266 : vector<8x128xi32>
    %c96_i32_182 = arith.constant 96 : i32
    %268 = vector.broadcast %c96_i32_182 : i32 to vector<8x128xi32>
    %269 = arith.cmpi slt, %265, %268 : vector<8x128xi32>
    %270 = arith.andi %267, %269 : vector<8x128xi1>
    %271 = math.tanh %264 : vector<8x128xf32>
    %272 = arith.negf %264 : vector<8x128xf32>
    %273 = math.exp %272 : vector<8x128xf32>
    %cst_183 = arith.constant 1.000000e+00 : f32
    %274 = vector.broadcast %cst_183 : f32 to vector<8x128xf32>
    %275 = arith.addf %274, %273 : vector<8x128xf32>
    %276 = arith.divf %274, %275 : vector<8x128xf32>
    %277 = arith.select %270, %271, %276 : vector<8x128xi1>, vector<8x128xf32>
    %278 = vector.extract_strided_slice %277 {offsets = [0, 0], sizes = [8, 32], strides = [1, 1]} : vector<8x128xf32> to vector<8x32xf32>
    %279 = vector.extract_strided_slice %277 {offsets = [0, 32], sizes = [8, 32], strides = [1, 1]} : vector<8x128xf32> to vector<8x32xf32>
    %280 = vector.extract_strided_slice %277 {offsets = [0, 64], sizes = [8, 32], strides = [1, 1]} : vector<8x128xf32> to vector<8x32xf32>
    %281 = vector.extract_strided_slice %277 {offsets = [0, 96], sizes = [8, 32], strides = [1, 1]} : vector<8x128xf32> to vector<8x32xf32>
    %282 = arith.mulf %279, %260 : vector<8x32xf32>
    %283 = arith.mulf %278, %280 : vector<8x32xf32>
    %284 = arith.addf %282, %283 : vector<8x32xf32>
    %285 = math.tanh %284 : vector<8x32xf32>
    %286 = arith.mulf %281, %285 : vector<8x32xf32>
    %c0_184 = arith.constant 0 : index
    %c0_185 = arith.constant 0 : index
    %287 = vector.load %arg10[%c0_184, %c0_185] : memref<8x32xf32, #tpu.memory_space<vmem>>, vector<8x32xf32>
    tpu.vector_store %arg10[%c0_184, %c0_185], %286 {strides = array<i32>} : memref<8x32xf32, #tpu.memory_space<vmem>>, vector<8x32xf32>,
    %c0_186 = arith.constant 0 : index
    %c0_187 = arith.constant 0 : index
    %288 = vector.load %arg11[%c0_186, %c0_187] : memref<8x32xf32, #tpu.memory_space<vmem>>, vector<8x32xf32>
    tpu.vector_store %arg11[%c0_186, %c0_187], %284 {strides = array<i32>} : memref<8x32xf32, #tpu.memory_space<vmem>>, vector<8x32xf32>,
    %c0_188 = arith.constant 0 : index
    %c0_189 = arith.constant 0 : index
    %289 = vector.load %arg12[%c0_188, %c0_189] : memref<8x64xf32, #tpu.memory_space<vmem>>, vector<8x32xf32>
    tpu.vector_store %arg12[%c0_188, %c0_189], %286 {strides = array<i32>} : memref<8x64xf32, #tpu.memory_space<vmem>>, vector<8x32xf32>,
    %c0_190 = arith.constant 0 : index
    %c0_191 = arith.constant 0 : index
    %290 = vector.load %arg13[%c0_190, %c0_191] : memref<8x32xf32, #tpu.memory_space<vmem>>, vector<8x32xf32>
    %c0_192 = arith.constant 0 : index
    %c32_193 = arith.constant 32 : index
    %291 = vector.load %arg12[%c0_192, %c32_193] : memref<8x64xf32, #tpu.memory_space<vmem>>, vector<8x32xf32>
    tpu.vector_store %arg12[%c0_192, %c32_193], %290 {strides = array<i32>} : memref<8x64xf32, #tpu.memory_space<vmem>>, vector<8x32xf32>,
    %c0_194 = arith.constant 0 : index
    %c0_195 = arith.constant 0 : index
    %292 = vector.load %arg12[%c0_194, %c0_195] : memref<8x64xf32, #tpu.memory_space<vmem>>, vector<8x64xf32>
    %c0_196 = arith.constant 0 : index
    %c0_197 = arith.constant 0 : index
    %293 = vector.load %arg14[%c0_196, %c0_197] : memref<8x32xf32, #tpu.memory_space<vmem>>, vector<8x32xf32>
    %c0_198 = arith.constant 0 : index
    %c0_199 = arith.constant 0 : index
    %294 = vector.load %arg5[%c0_198, %c0_199] : memref<64x128xf32, #tpu.memory_space<vmem>>, vector<64x128xf32>
    %cst_200 = arith.constant dense<0.000000e+00> : vector<8x128xf32>
    %295 = tpu.matmul %292, %294, %cst_200 {dimension_numbers = #tpu.dot_dimension_numbers<[1], [0], [0], [1], [0, 0, 1, 1], [], []>} : vector<8x64xf32>, vector<64x128xf32>, vector<8x128xf32> -> vector<8x128xf32>
    %296 = vector.broadcast %13 : vector<1x128xf32> to vector<8x128xf32>
    %297 = arith.addf %295, %296 : vector<8x128xf32>
    %298 = tpu.iota {dimensions = array<i32: 1>} : vector<8x128xi32>
    %c64_i32_201 = arith.constant 64 : i32
    %299 = vector.broadcast %c64_i32_201 : i32 to vector<8x128xi32>
    %300 = arith.cmpi sge, %298, %299 : vector<8x128xi32>
    %c96_i32_202 = arith.constant 96 : i32
    %301 = vector.broadcast %c96_i32_202 : i32 to vector<8x128xi32>
    %302 = arith.cmpi slt, %298, %301 : vector<8x128xi32>
    %303 = arith.andi %300, %302 : vector<8x128xi1>
    %304 = math.tanh %297 : vector<8x128xf32>
    %305 = arith.negf %297 : vector<8x128xf32>
    %306 = math.exp %305 : vector<8x128xf32>
    %cst_203 = arith.constant 1.000000e+00 : f32
    %307 = vector.broadcast %cst_203 : f32 to vector<8x128xf32>
    %308 = arith.addf %307, %306 : vector<8x128xf32>
    %309 = arith.divf %307, %308 : vector<8x128xf32>
    %310 = arith.select %303, %304, %309 : vector<8x128xi1>, vector<8x128xf32>
    %311 = vector.extract_strided_slice %310 {offsets = [0, 0], sizes = [8, 32], strides = [1, 1]} : vector<8x128xf32> to vector<8x32xf32>
    %312 = vector.extract_strided_slice %310 {offsets = [0, 32], sizes = [8, 32], strides = [1, 1]} : vector<8x128xf32> to vector<8x32xf32>
    %313 = vector.extract_strided_slice %310 {offsets = [0, 64], sizes = [8, 32], strides = [1, 1]} : vector<8x128xf32> to vector<8x32xf32>
    %314 = vector.extract_strided_slice %310 {offsets = [0, 96], sizes = [8, 32], strides = [1, 1]} : vector<8x128xf32> to vector<8x32xf32>
    %315 = arith.mulf %312, %293 : vector<8x32xf32>
    %316 = arith.mulf %311, %313 : vector<8x32xf32>
    %317 = arith.addf %315, %316 : vector<8x32xf32>
    %318 = math.tanh %317 : vector<8x32xf32>
    %319 = arith.mulf %314, %318 : vector<8x32xf32>
    %c0_204 = arith.constant 0 : index
    %c0_205 = arith.constant 0 : index
    %320 = vector.load %arg13[%c0_204, %c0_205] : memref<8x32xf32, #tpu.memory_space<vmem>>, vector<8x32xf32>
    tpu.vector_store %arg13[%c0_204, %c0_205], %319 {strides = array<i32>} : memref<8x32xf32, #tpu.memory_space<vmem>>, vector<8x32xf32>,
    %c0_206 = arith.constant 0 : index
    %c0_207 = arith.constant 0 : index
    %321 = vector.load %arg14[%c0_206, %c0_207] : memref<8x32xf32, #tpu.memory_space<vmem>>, vector<8x32xf32>
    tpu.vector_store %arg14[%c0_206, %c0_207], %317 {strides = array<i32>} : memref<8x32xf32, #tpu.memory_space<vmem>>, vector<8x32xf32>,
    %c4_i32 = arith.constant 4 : i32
    %322 = arith.index_cast %c4_i32 : i32 to index
    %c0_208 = arith.constant 0 : index
    %323 = memref.load %arg1[%322, %c0_208] : memref<8x2xi32, #tpu.memory_space<smem>>
    %324 = arith.index_cast %323 : i32 to index
    %c0_209 = arith.constant 0 : index
    %c0_210 = arith.constant 0 : index
    %325 = vector.load %arg2[%324, %c0_209, %c0_210] : memref<50x1x32xf32, #tpu.memory_space<vmem>>, vector<1x1x32xf32>
    %326 = vector.shape_cast %325 : vector<1x1x32xf32> to vector<1x32xf32>
    %c0_211 = arith.constant 0 : index
    %c0_212 = arith.constant 0 : index
    %327 = vector.load %arg9[%c0_211, %c0_212] : memref<8x64xf32, #tpu.memory_space<vmem>>, vector<1x32xf32>
    tpu.vector_store %arg9[%c0_211, %c0_212], %326 {strides = array<i32>} : memref<8x64xf32, #tpu.memory_space<vmem>>, vector<1x32xf32>,
    %328 = arith.index_cast %c4_i32 : i32 to index
    %c1_213 = arith.constant 1 : index
    %329 = memref.load %arg1[%328, %c1_213] : memref<8x2xi32, #tpu.memory_space<smem>>
    %330 = arith.index_cast %329 : i32 to index
    %c0_214 = arith.constant 0 : index
    %c0_215 = arith.constant 0 : index
    %331 = vector.load %arg2[%330, %c0_214, %c0_215] : memref<50x1x32xf32, #tpu.memory_space<vmem>>, vector<1x1x32xf32>
    %332 = vector.shape_cast %331 : vector<1x1x32xf32> to vector<1x32xf32>
    %c1_216 = arith.constant 1 : index
    %c0_217 = arith.constant 0 : index
    %333 = vector.load %arg9[%c1_216, %c0_217] : memref<8x64xf32, #tpu.memory_space<vmem>>, vector<1x32xf32>
    tpu.vector_store %arg9[%c1_216, %c0_217], %332 {strides = array<i32>} : memref<8x64xf32, #tpu.memory_space<vmem>>, vector<1x32xf32>,
    %c0_218 = arith.constant 0 : index
    %c0_219 = arith.constant 0 : index
    %334 = vector.load %arg10[%c0_218, %c0_219] : memref<8x32xf32, #tpu.memory_space<vmem>>, vector<8x32xf32>
    %c0_220 = arith.constant 0 : index
    %c32_221 = arith.constant 32 : index
    %335 = vector.load %arg9[%c0_220, %c32_221] : memref<8x64xf32, #tpu.memory_space<vmem>>, vector<8x32xf32>
    tpu.vector_store %arg9[%c0_220, %c32_221], %334 {strides = array<i32>} : memref<8x64xf32, #tpu.memory_space<vmem>>, vector<8x32xf32>,
    %c0_222 = arith.constant 0 : index
    %c0_223 = arith.constant 0 : index
    %336 = vector.load %arg9[%c0_222, %c0_223] : memref<8x64xf32, #tpu.memory_space<vmem>>, vector<8x64xf32>
    %c0_224 = arith.constant 0 : index
    %c0_225 = arith.constant 0 : index
    %337 = vector.load %arg11[%c0_224, %c0_225] : memref<8x32xf32, #tpu.memory_space<vmem>>, vector<8x32xf32>
    %c0_226 = arith.constant 0 : index
    %c0_227 = arith.constant 0 : index
    %338 = vector.load %arg3[%c0_226, %c0_227] : memref<64x128xf32, #tpu.memory_space<vmem>>, vector<64x128xf32>
    %cst_228 = arith.constant dense<0.000000e+00> : vector<8x128xf32>
    %339 = tpu.matmul %336, %338, %cst_228 {dimension_numbers = #tpu.dot_dimension_numbers<[1], [0], [0], [1], [0, 0, 1, 1], [], []>} : vector<8x64xf32>, vector<64x128xf32>, vector<8x128xf32> -> vector<8x128xf32>
    %340 = vector.broadcast %12 : vector<1x128xf32> to vector<8x128xf32>
    %341 = arith.addf %339, %340 : vector<8x128xf32>
    %342 = tpu.iota {dimensions = array<i32: 1>} : vector<8x128xi32>
    %c64_i32_229 = arith.constant 64 : i32
    %343 = vector.broadcast %c64_i32_229 : i32 to vector<8x128xi32>
    %344 = arith.cmpi sge, %342, %343 : vector<8x128xi32>
    %c96_i32_230 = arith.constant 96 : i32
    %345 = vector.broadcast %c96_i32_230 : i32 to vector<8x128xi32>
    %346 = arith.cmpi slt, %342, %345 : vector<8x128xi32>
    %347 = arith.andi %344, %346 : vector<8x128xi1>
    %348 = math.tanh %341 : vector<8x128xf32>
    %349 = arith.negf %341 : vector<8x128xf32>
    %350 = math.exp %349 : vector<8x128xf32>
    %cst_231 = arith.constant 1.000000e+00 : f32
    %351 = vector.broadcast %cst_231 : f32 to vector<8x128xf32>
    %352 = arith.addf %351, %350 : vector<8x128xf32>
    %353 = arith.divf %351, %352 : vector<8x128xf32>
    %354 = arith.select %347, %348, %353 : vector<8x128xi1>, vector<8x128xf32>
    %355 = vector.extract_strided_slice %354 {offsets = [0, 0], sizes = [8, 32], strides = [1, 1]} : vector<8x128xf32> to vector<8x32xf32>
    %356 = vector.extract_strided_slice %354 {offsets = [0, 32], sizes = [8, 32], strides = [1, 1]} : vector<8x128xf32> to vector<8x32xf32>
    %357 = vector.extract_strided_slice %354 {offsets = [0, 64], sizes = [8, 32], strides = [1, 1]} : vector<8x128xf32> to vector<8x32xf32>
    %358 = vector.extract_strided_slice %354 {offsets = [0, 96], sizes = [8, 32], strides = [1, 1]} : vector<8x128xf32> to vector<8x32xf32>
    %359 = arith.mulf %356, %337 : vector<8x32xf32>
    %360 = arith.mulf %355, %357 : vector<8x32xf32>
    %361 = arith.addf %359, %360 : vector<8x32xf32>
    %362 = math.tanh %361 : vector<8x32xf32>
    %363 = arith.mulf %358, %362 : vector<8x32xf32>
    %c0_232 = arith.constant 0 : index
    %c0_233 = arith.constant 0 : index
    %364 = vector.load %arg10[%c0_232, %c0_233] : memref<8x32xf32, #tpu.memory_space<vmem>>, vector<8x32xf32>
    tpu.vector_store %arg10[%c0_232, %c0_233], %363 {strides = array<i32>} : memref<8x32xf32, #tpu.memory_space<vmem>>, vector<8x32xf32>,
    %c0_234 = arith.constant 0 : index
    %c0_235 = arith.constant 0 : index
    %365 = vector.load %arg11[%c0_234, %c0_235] : memref<8x32xf32, #tpu.memory_space<vmem>>, vector<8x32xf32>
    tpu.vector_store %arg11[%c0_234, %c0_235], %361 {strides = array<i32>} : memref<8x32xf32, #tpu.memory_space<vmem>>, vector<8x32xf32>,
    %c0_236 = arith.constant 0 : index
    %c0_237 = arith.constant 0 : index
    %366 = vector.load %arg12[%c0_236, %c0_237] : memref<8x64xf32, #tpu.memory_space<vmem>>, vector<8x32xf32>
    tpu.vector_store %arg12[%c0_236, %c0_237], %363 {strides = array<i32>} : memref<8x64xf32, #tpu.memory_space<vmem>>, vector<8x32xf32>,
    %c0_238 = arith.constant 0 : index
    %c0_239 = arith.constant 0 : index
    %367 = vector.load %arg13[%c0_238, %c0_239] : memref<8x32xf32, #tpu.memory_space<vmem>>, vector<8x32xf32>
    %c0_240 = arith.constant 0 : index
    %c32_241 = arith.constant 32 : index
    %368 = vector.load %arg12[%c0_240, %c32_241] : memref<8x64xf32, #tpu.memory_space<vmem>>, vector<8x32xf32>
    tpu.vector_store %arg12[%c0_240, %c32_241], %367 {strides = array<i32>} : memref<8x64xf32, #tpu.memory_space<vmem>>, vector<8x32xf32>,
    %c0_242 = arith.constant 0 : index
    %c0_243 = arith.constant 0 : index
    %369 = vector.load %arg12[%c0_242, %c0_243] : memref<8x64xf32, #tpu.memory_space<vmem>>, vector<8x64xf32>
    %c0_244 = arith.constant 0 : index
    %c0_245 = arith.constant 0 : index
    %370 = vector.load %arg14[%c0_244, %c0_245] : memref<8x32xf32, #tpu.memory_space<vmem>>, vector<8x32xf32>
    %c0_246 = arith.constant 0 : index
    %c0_247 = arith.constant 0 : index
    %371 = vector.load %arg5[%c0_246, %c0_247] : memref<64x128xf32, #tpu.memory_space<vmem>>, vector<64x128xf32>
    %cst_248 = arith.constant dense<0.000000e+00> : vector<8x128xf32>
    %372 = tpu.matmul %369, %371, %cst_248 {dimension_numbers = #tpu.dot_dimension_numbers<[1], [0], [0], [1], [0, 0, 1, 1], [], []>} : vector<8x64xf32>, vector<64x128xf32>, vector<8x128xf32> -> vector<8x128xf32>
    %373 = vector.broadcast %13 : vector<1x128xf32> to vector<8x128xf32>
    %374 = arith.addf %372, %373 : vector<8x128xf32>
    %375 = tpu.iota {dimensions = array<i32: 1>} : vector<8x128xi32>
    %c64_i32_249 = arith.constant 64 : i32
    %376 = vector.broadcast %c64_i32_249 : i32 to vector<8x128xi32>
    %377 = arith.cmpi sge, %375, %376 : vector<8x128xi32>
    %c96_i32_250 = arith.constant 96 : i32
    %378 = vector.broadcast %c96_i32_250 : i32 to vector<8x128xi32>
    %379 = arith.cmpi slt, %375, %378 : vector<8x128xi32>
    %380 = arith.andi %377, %379 : vector<8x128xi1>
    %381 = math.tanh %374 : vector<8x128xf32>
    %382 = arith.negf %374 : vector<8x128xf32>
    %383 = math.exp %382 : vector<8x128xf32>
    %cst_251 = arith.constant 1.000000e+00 : f32
    %384 = vector.broadcast %cst_251 : f32 to vector<8x128xf32>
    %385 = arith.addf %384, %383 : vector<8x128xf32>
    %386 = arith.divf %384, %385 : vector<8x128xf32>
    %387 = arith.select %380, %381, %386 : vector<8x128xi1>, vector<8x128xf32>
    %388 = vector.extract_strided_slice %387 {offsets = [0, 0], sizes = [8, 32], strides = [1, 1]} : vector<8x128xf32> to vector<8x32xf32>
    %389 = vector.extract_strided_slice %387 {offsets = [0, 32], sizes = [8, 32], strides = [1, 1]} : vector<8x128xf32> to vector<8x32xf32>
    %390 = vector.extract_strided_slice %387 {offsets = [0, 64], sizes = [8, 32], strides = [1, 1]} : vector<8x128xf32> to vector<8x32xf32>
    %391 = vector.extract_strided_slice %387 {offsets = [0, 96], sizes = [8, 32], strides = [1, 1]} : vector<8x128xf32> to vector<8x32xf32>
    %392 = arith.mulf %389, %370 : vector<8x32xf32>
    %393 = arith.mulf %388, %390 : vector<8x32xf32>
    %394 = arith.addf %392, %393 : vector<8x32xf32>
    %395 = math.tanh %394 : vector<8x32xf32>
    %396 = arith.mulf %391, %395 : vector<8x32xf32>
    %c0_252 = arith.constant 0 : index
    %c0_253 = arith.constant 0 : index
    %397 = vector.load %arg13[%c0_252, %c0_253] : memref<8x32xf32, #tpu.memory_space<vmem>>, vector<8x32xf32>
    tpu.vector_store %arg13[%c0_252, %c0_253], %396 {strides = array<i32>} : memref<8x32xf32, #tpu.memory_space<vmem>>, vector<8x32xf32>,
    %c0_254 = arith.constant 0 : index
    %c0_255 = arith.constant 0 : index
    %398 = vector.load %arg14[%c0_254, %c0_255] : memref<8x32xf32, #tpu.memory_space<vmem>>, vector<8x32xf32>
    tpu.vector_store %arg14[%c0_254, %c0_255], %394 {strides = array<i32>} : memref<8x32xf32, #tpu.memory_space<vmem>>, vector<8x32xf32>,
    %c5_i32 = arith.constant 5 : i32
    %399 = arith.index_cast %c5_i32 : i32 to index
    %c0_256 = arith.constant 0 : index
    %400 = memref.load %arg1[%399, %c0_256] : memref<8x2xi32, #tpu.memory_space<smem>>
    %401 = arith.index_cast %400 : i32 to index
    %c0_257 = arith.constant 0 : index
    %c0_258 = arith.constant 0 : index
    %402 = vector.load %arg2[%401, %c0_257, %c0_258] : memref<50x1x32xf32, #tpu.memory_space<vmem>>, vector<1x1x32xf32>
    %403 = vector.shape_cast %402 : vector<1x1x32xf32> to vector<1x32xf32>
    %c0_259 = arith.constant 0 : index
    %c0_260 = arith.constant 0 : index
    %404 = vector.load %arg9[%c0_259, %c0_260] : memref<8x64xf32, #tpu.memory_space<vmem>>, vector<1x32xf32>
    tpu.vector_store %arg9[%c0_259, %c0_260], %403 {strides = array<i32>} : memref<8x64xf32, #tpu.memory_space<vmem>>, vector<1x32xf32>,
    %405 = arith.index_cast %c5_i32 : i32 to index
    %c1_261 = arith.constant 1 : index
    %406 = memref.load %arg1[%405, %c1_261] : memref<8x2xi32, #tpu.memory_space<smem>>
    %407 = arith.index_cast %406 : i32 to index
    %c0_262 = arith.constant 0 : index
    %c0_263 = arith.constant 0 : index
    %408 = vector.load %arg2[%407, %c0_262, %c0_263] : memref<50x1x32xf32, #tpu.memory_space<vmem>>, vector<1x1x32xf32>
    %409 = vector.shape_cast %408 : vector<1x1x32xf32> to vector<1x32xf32>
    %c1_264 = arith.constant 1 : index
    %c0_265 = arith.constant 0 : index
    %410 = vector.load %arg9[%c1_264, %c0_265] : memref<8x64xf32, #tpu.memory_space<vmem>>, vector<1x32xf32>
    tpu.vector_store %arg9[%c1_264, %c0_265], %409 {strides = array<i32>} : memref<8x64xf32, #tpu.memory_space<vmem>>, vector<1x32xf32>,
    %c0_266 = arith.constant 0 : index
    %c0_267 = arith.constant 0 : index
    %411 = vector.load %arg10[%c0_266, %c0_267] : memref<8x32xf32, #tpu.memory_space<vmem>>, vector<8x32xf32>
    %c0_268 = arith.constant 0 : index
    %c32_269 = arith.constant 32 : index
    %412 = vector.load %arg9[%c0_268, %c32_269] : memref<8x64xf32, #tpu.memory_space<vmem>>, vector<8x32xf32>
    tpu.vector_store %arg9[%c0_268, %c32_269], %411 {strides = array<i32>} : memref<8x64xf32, #tpu.memory_space<vmem>>, vector<8x32xf32>,
    %c0_270 = arith.constant 0 : index
    %c0_271 = arith.constant 0 : index
    %413 = vector.load %arg9[%c0_270, %c0_271] : memref<8x64xf32, #tpu.memory_space<vmem>>, vector<8x64xf32>
    %c0_272 = arith.constant 0 : index
    %c0_273 = arith.constant 0 : index
    %414 = vector.load %arg11[%c0_272, %c0_273] : memref<8x32xf32, #tpu.memory_space<vmem>>, vector<8x32xf32>
    %c0_274 = arith.constant 0 : index
    %c0_275 = arith.constant 0 : index
    %415 = vector.load %arg3[%c0_274, %c0_275] : memref<64x128xf32, #tpu.memory_space<vmem>>, vector<64x128xf32>
    %cst_276 = arith.constant dense<0.000000e+00> : vector<8x128xf32>
    %416 = tpu.matmul %413, %415, %cst_276 {dimension_numbers = #tpu.dot_dimension_numbers<[1], [0], [0], [1], [0, 0, 1, 1], [], []>} : vector<8x64xf32>, vector<64x128xf32>, vector<8x128xf32> -> vector<8x128xf32>
    %417 = vector.broadcast %12 : vector<1x128xf32> to vector<8x128xf32>
    %418 = arith.addf %416, %417 : vector<8x128xf32>
    %419 = tpu.iota {dimensions = array<i32: 1>} : vector<8x128xi32>
    %c64_i32_277 = arith.constant 64 : i32
    %420 = vector.broadcast %c64_i32_277 : i32 to vector<8x128xi32>
    %421 = arith.cmpi sge, %419, %420 : vector<8x128xi32>
    %c96_i32_278 = arith.constant 96 : i32
    %422 = vector.broadcast %c96_i32_278 : i32 to vector<8x128xi32>
    %423 = arith.cmpi slt, %419, %422 : vector<8x128xi32>
    %424 = arith.andi %421, %423 : vector<8x128xi1>
    %425 = math.tanh %418 : vector<8x128xf32>
    %426 = arith.negf %418 : vector<8x128xf32>
    %427 = math.exp %426 : vector<8x128xf32>
    %cst_279 = arith.constant 1.000000e+00 : f32
    %428 = vector.broadcast %cst_279 : f32 to vector<8x128xf32>
    %429 = arith.addf %428, %427 : vector<8x128xf32>
    %430 = arith.divf %428, %429 : vector<8x128xf32>
    %431 = arith.select %424, %425, %430 : vector<8x128xi1>, vector<8x128xf32>
    %432 = vector.extract_strided_slice %431 {offsets = [0, 0], sizes = [8, 32], strides = [1, 1]} : vector<8x128xf32> to vector<8x32xf32>
    %433 = vector.extract_strided_slice %431 {offsets = [0, 32], sizes = [8, 32], strides = [1, 1]} : vector<8x128xf32> to vector<8x32xf32>
    %434 = vector.extract_strided_slice %431 {offsets = [0, 64], sizes = [8, 32], strides = [1, 1]} : vector<8x128xf32> to vector<8x32xf32>
    %435 = vector.extract_strided_slice %431 {offsets = [0, 96], sizes = [8, 32], strides = [1, 1]} : vector<8x128xf32> to vector<8x32xf32>
    %436 = arith.mulf %433, %414 : vector<8x32xf32>
    %437 = arith.mulf %432, %434 : vector<8x32xf32>
    %438 = arith.addf %436, %437 : vector<8x32xf32>
    %439 = math.tanh %438 : vector<8x32xf32>
    %440 = arith.mulf %435, %439 : vector<8x32xf32>
    %c0_280 = arith.constant 0 : index
    %c0_281 = arith.constant 0 : index
    %441 = vector.load %arg10[%c0_280, %c0_281] : memref<8x32xf32, #tpu.memory_space<vmem>>, vector<8x32xf32>
    tpu.vector_store %arg10[%c0_280, %c0_281], %440 {strides = array<i32>} : memref<8x32xf32, #tpu.memory_space<vmem>>, vector<8x32xf32>,
    %c0_282 = arith.constant 0 : index
    %c0_283 = arith.constant 0 : index
    %442 = vector.load %arg11[%c0_282, %c0_283] : memref<8x32xf32, #tpu.memory_space<vmem>>, vector<8x32xf32>
    tpu.vector_store %arg11[%c0_282, %c0_283], %438 {strides = array<i32>} : memref<8x32xf32, #tpu.memory_space<vmem>>, vector<8x32xf32>,
    %c0_284 = arith.constant 0 : index
    %c0_285 = arith.constant 0 : index
    %443 = vector.load %arg12[%c0_284, %c0_285] : memref<8x64xf32, #tpu.memory_space<vmem>>, vector<8x32xf32>
    tpu.vector_store %arg12[%c0_284, %c0_285], %440 {strides = array<i32>} : memref<8x64xf32, #tpu.memory_space<vmem>>, vector<8x32xf32>,
    %c0_286 = arith.constant 0 : index
    %c0_287 = arith.constant 0 : index
    %444 = vector.load %arg13[%c0_286, %c0_287] : memref<8x32xf32, #tpu.memory_space<vmem>>, vector<8x32xf32>
    %c0_288 = arith.constant 0 : index
    %c32_289 = arith.constant 32 : index
    %445 = vector.load %arg12[%c0_288, %c32_289] : memref<8x64xf32, #tpu.memory_space<vmem>>, vector<8x32xf32>
    tpu.vector_store %arg12[%c0_288, %c32_289], %444 {strides = array<i32>} : memref<8x64xf32, #tpu.memory_space<vmem>>, vector<8x32xf32>,
    %c0_290 = arith.constant 0 : index
    %c0_291 = arith.constant 0 : index
    %446 = vector.load %arg12[%c0_290, %c0_291] : memref<8x64xf32, #tpu.memory_space<vmem>>, vector<8x64xf32>
    %c0_292 = arith.constant 0 : index
    %c0_293 = arith.constant 0 : index
    %447 = vector.load %arg14[%c0_292, %c0_293] : memref<8x32xf32, #tpu.memory_space<vmem>>, vector<8x32xf32>
    %c0_294 = arith.constant 0 : index
    %c0_295 = arith.constant 0 : index
    %448 = vector.load %arg5[%c0_294, %c0_295] : memref<64x128xf32, #tpu.memory_space<vmem>>, vector<64x128xf32>
    %cst_296 = arith.constant dense<0.000000e+00> : vector<8x128xf32>
    %449 = tpu.matmul %446, %448, %cst_296 {dimension_numbers = #tpu.dot_dimension_numbers<[1], [0], [0], [1], [0, 0, 1, 1], [], []>} : vector<8x64xf32>, vector<64x128xf32>, vector<8x128xf32> -> vector<8x128xf32>
    %450 = vector.broadcast %13 : vector<1x128xf32> to vector<8x128xf32>
    %451 = arith.addf %449, %450 : vector<8x128xf32>
    %452 = tpu.iota {dimensions = array<i32: 1>} : vector<8x128xi32>
    %c64_i32_297 = arith.constant 64 : i32
    %453 = vector.broadcast %c64_i32_297 : i32 to vector<8x128xi32>
    %454 = arith.cmpi sge, %452, %453 : vector<8x128xi32>
    %c96_i32_298 = arith.constant 96 : i32
    %455 = vector.broadcast %c96_i32_298 : i32 to vector<8x128xi32>
    %456 = arith.cmpi slt, %452, %455 : vector<8x128xi32>
    %457 = arith.andi %454, %456 : vector<8x128xi1>
    %458 = math.tanh %451 : vector<8x128xf32>
    %459 = arith.negf %451 : vector<8x128xf32>
    %460 = math.exp %459 : vector<8x128xf32>
    %cst_299 = arith.constant 1.000000e+00 : f32
    %461 = vector.broadcast %cst_299 : f32 to vector<8x128xf32>
    %462 = arith.addf %461, %460 : vector<8x128xf32>
    %463 = arith.divf %461, %462 : vector<8x128xf32>
    %464 = arith.select %457, %458, %463 : vector<8x128xi1>, vector<8x128xf32>
    %465 = vector.extract_strided_slice %464 {offsets = [0, 0], sizes = [8, 32], strides = [1, 1]} : vector<8x128xf32> to vector<8x32xf32>
    %466 = vector.extract_strided_slice %464 {offsets = [0, 32], sizes = [8, 32], strides = [1, 1]} : vector<8x128xf32> to vector<8x32xf32>
    %467 = vector.extract_strided_slice %464 {offsets = [0, 64], sizes = [8, 32], strides = [1, 1]} : vector<8x128xf32> to vector<8x32xf32>
    %468 = vector.extract_strided_slice %464 {offsets = [0, 96], sizes = [8, 32], strides = [1, 1]} : vector<8x128xf32> to vector<8x32xf32>
    %469 = arith.mulf %466, %447 : vector<8x32xf32>
    %470 = arith.mulf %465, %467 : vector<8x32xf32>
    %471 = arith.addf %469, %470 : vector<8x32xf32>
    %472 = math.tanh %471 : vector<8x32xf32>
    %473 = arith.mulf %468, %472 : vector<8x32xf32>
    %c0_300 = arith.constant 0 : index
    %c0_301 = arith.constant 0 : index
    %474 = vector.load %arg13[%c0_300, %c0_301] : memref<8x32xf32, #tpu.memory_space<vmem>>, vector<8x32xf32>
    tpu.vector_store %arg13[%c0_300, %c0_301], %473 {strides = array<i32>} : memref<8x32xf32, #tpu.memory_space<vmem>>, vector<8x32xf32>,
    %c0_302 = arith.constant 0 : index
    %c0_303 = arith.constant 0 : index
    %475 = vector.load %arg14[%c0_302, %c0_303] : memref<8x32xf32, #tpu.memory_space<vmem>>, vector<8x32xf32>
    tpu.vector_store %arg14[%c0_302, %c0_303], %471 {strides = array<i32>} : memref<8x32xf32, #tpu.memory_space<vmem>>, vector<8x32xf32>,
    %c6_i32 = arith.constant 6 : i32
    %476 = arith.index_cast %c6_i32 : i32 to index
    %c0_304 = arith.constant 0 : index
    %477 = memref.load %arg1[%476, %c0_304] : memref<8x2xi32, #tpu.memory_space<smem>>
    %478 = arith.index_cast %477 : i32 to index
    %c0_305 = arith.constant 0 : index
    %c0_306 = arith.constant 0 : index
    %479 = vector.load %arg2[%478, %c0_305, %c0_306] : memref<50x1x32xf32, #tpu.memory_space<vmem>>, vector<1x1x32xf32>
    %480 = vector.shape_cast %479 : vector<1x1x32xf32> to vector<1x32xf32>
    %c0_307 = arith.constant 0 : index
    %c0_308 = arith.constant 0 : index
    %481 = vector.load %arg9[%c0_307, %c0_308] : memref<8x64xf32, #tpu.memory_space<vmem>>, vector<1x32xf32>
    tpu.vector_store %arg9[%c0_307, %c0_308], %480 {strides = array<i32>} : memref<8x64xf32, #tpu.memory_space<vmem>>, vector<1x32xf32>,
    %482 = arith.index_cast %c6_i32 : i32 to index
    %c1_309 = arith.constant 1 : index
    %483 = memref.load %arg1[%482, %c1_309] : memref<8x2xi32, #tpu.memory_space<smem>>
    %484 = arith.index_cast %483 : i32 to index
    %c0_310 = arith.constant 0 : index
    %c0_311 = arith.constant 0 : index
    %485 = vector.load %arg2[%484, %c0_310, %c0_311] : memref<50x1x32xf32, #tpu.memory_space<vmem>>, vector<1x1x32xf32>
    %486 = vector.shape_cast %485 : vector<1x1x32xf32> to vector<1x32xf32>
    %c1_312 = arith.constant 1 : index
    %c0_313 = arith.constant 0 : index
    %487 = vector.load %arg9[%c1_312, %c0_313] : memref<8x64xf32, #tpu.memory_space<vmem>>, vector<1x32xf32>
    tpu.vector_store %arg9[%c1_312, %c0_313], %486 {strides = array<i32>} : memref<8x64xf32, #tpu.memory_space<vmem>>, vector<1x32xf32>,
    %c0_314 = arith.constant 0 : index
    %c0_315 = arith.constant 0 : index
    %488 = vector.load %arg10[%c0_314, %c0_315] : memref<8x32xf32, #tpu.memory_space<vmem>>, vector<8x32xf32>
    %c0_316 = arith.constant 0 : index
    %c32_317 = arith.constant 32 : index
    %489 = vector.load %arg9[%c0_316, %c32_317] : memref<8x64xf32, #tpu.memory_space<vmem>>, vector<8x32xf32>
    tpu.vector_store %arg9[%c0_316, %c32_317], %488 {strides = array<i32>} : memref<8x64xf32, #tpu.memory_space<vmem>>, vector<8x32xf32>,
    %c0_318 = arith.constant 0 : index
    %c0_319 = arith.constant 0 : index
    %490 = vector.load %arg9[%c0_318, %c0_319] : memref<8x64xf32, #tpu.memory_space<vmem>>, vector<8x64xf32>
    %c0_320 = arith.constant 0 : index
    %c0_321 = arith.constant 0 : index
    %491 = vector.load %arg11[%c0_320, %c0_321] : memref<8x32xf32, #tpu.memory_space<vmem>>, vector<8x32xf32>
    %c0_322 = arith.constant 0 : index
    %c0_323 = arith.constant 0 : index
    %492 = vector.load %arg3[%c0_322, %c0_323] : memref<64x128xf32, #tpu.memory_space<vmem>>, vector<64x128xf32>
    %cst_324 = arith.constant dense<0.000000e+00> : vector<8x128xf32>
    %493 = tpu.matmul %490, %492, %cst_324 {dimension_numbers = #tpu.dot_dimension_numbers<[1], [0], [0], [1], [0, 0, 1, 1], [], []>} : vector<8x64xf32>, vector<64x128xf32>, vector<8x128xf32> -> vector<8x128xf32>
    %494 = vector.broadcast %12 : vector<1x128xf32> to vector<8x128xf32>
    %495 = arith.addf %493, %494 : vector<8x128xf32>
    %496 = tpu.iota {dimensions = array<i32: 1>} : vector<8x128xi32>
    %c64_i32_325 = arith.constant 64 : i32
    %497 = vector.broadcast %c64_i32_325 : i32 to vector<8x128xi32>
    %498 = arith.cmpi sge, %496, %497 : vector<8x128xi32>
    %c96_i32_326 = arith.constant 96 : i32
    %499 = vector.broadcast %c96_i32_326 : i32 to vector<8x128xi32>
    %500 = arith.cmpi slt, %496, %499 : vector<8x128xi32>
    %501 = arith.andi %498, %500 : vector<8x128xi1>
    %502 = math.tanh %495 : vector<8x128xf32>
    %503 = arith.negf %495 : vector<8x128xf32>
    %504 = math.exp %503 : vector<8x128xf32>
    %cst_327 = arith.constant 1.000000e+00 : f32
    %505 = vector.broadcast %cst_327 : f32 to vector<8x128xf32>
    %506 = arith.addf %505, %504 : vector<8x128xf32>
    %507 = arith.divf %505, %506 : vector<8x128xf32>
    %508 = arith.select %501, %502, %507 : vector<8x128xi1>, vector<8x128xf32>
    %509 = vector.extract_strided_slice %508 {offsets = [0, 0], sizes = [8, 32], strides = [1, 1]} : vector<8x128xf32> to vector<8x32xf32>
    %510 = vector.extract_strided_slice %508 {offsets = [0, 32], sizes = [8, 32], strides = [1, 1]} : vector<8x128xf32> to vector<8x32xf32>
    %511 = vector.extract_strided_slice %508 {offsets = [0, 64], sizes = [8, 32], strides = [1, 1]} : vector<8x128xf32> to vector<8x32xf32>
    %512 = vector.extract_strided_slice %508 {offsets = [0, 96], sizes = [8, 32], strides = [1, 1]} : vector<8x128xf32> to vector<8x32xf32>
    %513 = arith.mulf %510, %491 : vector<8x32xf32>
    %514 = arith.mulf %509, %511 : vector<8x32xf32>
    %515 = arith.addf %513, %514 : vector<8x32xf32>
    %516 = math.tanh %515 : vector<8x32xf32>
    %517 = arith.mulf %512, %516 : vector<8x32xf32>
    %c0_328 = arith.constant 0 : index
    %c0_329 = arith.constant 0 : index
    %518 = vector.load %arg10[%c0_328, %c0_329] : memref<8x32xf32, #tpu.memory_space<vmem>>, vector<8x32xf32>
    tpu.vector_store %arg10[%c0_328, %c0_329], %517 {strides = array<i32>} : memref<8x32xf32, #tpu.memory_space<vmem>>, vector<8x32xf32>,
    %c0_330 = arith.constant 0 : index
    %c0_331 = arith.constant 0 : index
    %519 = vector.load %arg11[%c0_330, %c0_331] : memref<8x32xf32, #tpu.memory_space<vmem>>, vector<8x32xf32>
    tpu.vector_store %arg11[%c0_330, %c0_331], %515 {strides = array<i32>} : memref<8x32xf32, #tpu.memory_space<vmem>>, vector<8x32xf32>,
    %c0_332 = arith.constant 0 : index
    %c0_333 = arith.constant 0 : index
    %520 = vector.load %arg12[%c0_332, %c0_333] : memref<8x64xf32, #tpu.memory_space<vmem>>, vector<8x32xf32>
    tpu.vector_store %arg12[%c0_332, %c0_333], %517 {strides = array<i32>} : memref<8x64xf32, #tpu.memory_space<vmem>>, vector<8x32xf32>,
    %c0_334 = arith.constant 0 : index
    %c0_335 = arith.constant 0 : index
    %521 = vector.load %arg13[%c0_334, %c0_335] : memref<8x32xf32, #tpu.memory_space<vmem>>, vector<8x32xf32>
    %c0_336 = arith.constant 0 : index
    %c32_337 = arith.constant 32 : index
    %522 = vector.load %arg12[%c0_336, %c32_337] : memref<8x64xf32, #tpu.memory_space<vmem>>, vector<8x32xf32>
    tpu.vector_store %arg12[%c0_336, %c32_337], %521 {strides = array<i32>} : memref<8x64xf32, #tpu.memory_space<vmem>>, vector<8x32xf32>,
    %c0_338 = arith.constant 0 : index
    %c0_339 = arith.constant 0 : index
    %523 = vector.load %arg12[%c0_338, %c0_339] : memref<8x64xf32, #tpu.memory_space<vmem>>, vector<8x64xf32>
    %c0_340 = arith.constant 0 : index
    %c0_341 = arith.constant 0 : index
    %524 = vector.load %arg14[%c0_340, %c0_341] : memref<8x32xf32, #tpu.memory_space<vmem>>, vector<8x32xf32>
    %c0_342 = arith.constant 0 : index
    %c0_343 = arith.constant 0 : index
    %525 = vector.load %arg5[%c0_342, %c0_343] : memref<64x128xf32, #tpu.memory_space<vmem>>, vector<64x128xf32>
    %cst_344 = arith.constant dense<0.000000e+00> : vector<8x128xf32>
    %526 = tpu.matmul %523, %525, %cst_344 {dimension_numbers = #tpu.dot_dimension_numbers<[1], [0], [0], [1], [0, 0, 1, 1], [], []>} : vector<8x64xf32>, vector<64x128xf32>, vector<8x128xf32> -> vector<8x128xf32>
    %527 = vector.broadcast %13 : vector<1x128xf32> to vector<8x128xf32>
    %528 = arith.addf %526, %527 : vector<8x128xf32>
    %529 = tpu.iota {dimensions = array<i32: 1>} : vector<8x128xi32>
    %c64_i32_345 = arith.constant 64 : i32
    %530 = vector.broadcast %c64_i32_345 : i32 to vector<8x128xi32>
    %531 = arith.cmpi sge, %529, %530 : vector<8x128xi32>
    %c96_i32_346 = arith.constant 96 : i32
    %532 = vector.broadcast %c96_i32_346 : i32 to vector<8x128xi32>
    %533 = arith.cmpi slt, %529, %532 : vector<8x128xi32>
    %534 = arith.andi %531, %533 : vector<8x128xi1>
    %535 = math.tanh %528 : vector<8x128xf32>
    %536 = arith.negf %528 : vector<8x128xf32>
    %537 = math.exp %536 : vector<8x128xf32>
    %cst_347 = arith.constant 1.000000e+00 : f32
    %538 = vector.broadcast %cst_347 : f32 to vector<8x128xf32>
    %539 = arith.addf %538, %537 : vector<8x128xf32>
    %540 = arith.divf %538, %539 : vector<8x128xf32>
    %541 = arith.select %534, %535, %540 : vector<8x128xi1>, vector<8x128xf32>
    %542 = vector.extract_strided_slice %541 {offsets = [0, 0], sizes = [8, 32], strides = [1, 1]} : vector<8x128xf32> to vector<8x32xf32>
    %543 = vector.extract_strided_slice %541 {offsets = [0, 32], sizes = [8, 32], strides = [1, 1]} : vector<8x128xf32> to vector<8x32xf32>
    %544 = vector.extract_strided_slice %541 {offsets = [0, 64], sizes = [8, 32], strides = [1, 1]} : vector<8x128xf32> to vector<8x32xf32>
    %545 = vector.extract_strided_slice %541 {offsets = [0, 96], sizes = [8, 32], strides = [1, 1]} : vector<8x128xf32> to vector<8x32xf32>
    %546 = arith.mulf %543, %524 : vector<8x32xf32>
    %547 = arith.mulf %542, %544 : vector<8x32xf32>
    %548 = arith.addf %546, %547 : vector<8x32xf32>
    %549 = math.tanh %548 : vector<8x32xf32>
    %550 = arith.mulf %545, %549 : vector<8x32xf32>
    %c0_348 = arith.constant 0 : index
    %c0_349 = arith.constant 0 : index
    %551 = vector.load %arg13[%c0_348, %c0_349] : memref<8x32xf32, #tpu.memory_space<vmem>>, vector<8x32xf32>
    tpu.vector_store %arg13[%c0_348, %c0_349], %550 {strides = array<i32>} : memref<8x32xf32, #tpu.memory_space<vmem>>, vector<8x32xf32>,
    %c0_350 = arith.constant 0 : index
    %c0_351 = arith.constant 0 : index
    %552 = vector.load %arg14[%c0_350, %c0_351] : memref<8x32xf32, #tpu.memory_space<vmem>>, vector<8x32xf32>
    tpu.vector_store %arg14[%c0_350, %c0_351], %548 {strides = array<i32>} : memref<8x32xf32, #tpu.memory_space<vmem>>, vector<8x32xf32>,
    %c7_i32 = arith.constant 7 : i32
    %553 = arith.index_cast %c7_i32 : i32 to index
    %c0_352 = arith.constant 0 : index
    %554 = memref.load %arg1[%553, %c0_352] : memref<8x2xi32, #tpu.memory_space<smem>>
    %555 = arith.index_cast %554 : i32 to index
    %c0_353 = arith.constant 0 : index
    %c0_354 = arith.constant 0 : index
    %556 = vector.load %arg2[%555, %c0_353, %c0_354] : memref<50x1x32xf32, #tpu.memory_space<vmem>>, vector<1x1x32xf32>
    %557 = vector.shape_cast %556 : vector<1x1x32xf32> to vector<1x32xf32>
    %c0_355 = arith.constant 0 : index
    %c0_356 = arith.constant 0 : index
    %558 = vector.load %arg9[%c0_355, %c0_356] : memref<8x64xf32, #tpu.memory_space<vmem>>, vector<1x32xf32>
    tpu.vector_store %arg9[%c0_355, %c0_356], %557 {strides = array<i32>} : memref<8x64xf32, #tpu.memory_space<vmem>>, vector<1x32xf32>,
    %559 = arith.index_cast %c7_i32 : i32 to index
    %c1_357 = arith.constant 1 : index
    %560 = memref.load %arg1[%559, %c1_357] : memref<8x2xi32, #tpu.memory_space<smem>>
    %561 = arith.index_cast %560 : i32 to index
    %c0_358 = arith.constant 0 : index
    %c0_359 = arith.constant 0 : index
    %562 = vector.load %arg2[%561, %c0_358, %c0_359] : memref<50x1x32xf32, #tpu.memory_space<vmem>>, vector<1x1x32xf32>
    %563 = vector.shape_cast %562 : vector<1x1x32xf32> to vector<1x32xf32>
    %c1_360 = arith.constant 1 : index
    %c0_361 = arith.constant 0 : index
    %564 = vector.load %arg9[%c1_360, %c0_361] : memref<8x64xf32, #tpu.memory_space<vmem>>, vector<1x32xf32>
    tpu.vector_store %arg9[%c1_360, %c0_361], %563 {strides = array<i32>} : memref<8x64xf32, #tpu.memory_space<vmem>>, vector<1x32xf32>,
    %c0_362 = arith.constant 0 : index
    %c0_363 = arith.constant 0 : index
    %565 = vector.load %arg10[%c0_362, %c0_363] : memref<8x32xf32, #tpu.memory_space<vmem>>, vector<8x32xf32>
    %c0_364 = arith.constant 0 : index
    %c32_365 = arith.constant 32 : index
    %566 = vector.load %arg9[%c0_364, %c32_365] : memref<8x64xf32, #tpu.memory_space<vmem>>, vector<8x32xf32>
    tpu.vector_store %arg9[%c0_364, %c32_365], %565 {strides = array<i32>} : memref<8x64xf32, #tpu.memory_space<vmem>>, vector<8x32xf32>,
    %c0_366 = arith.constant 0 : index
    %c0_367 = arith.constant 0 : index
    %567 = vector.load %arg9[%c0_366, %c0_367] : memref<8x64xf32, #tpu.memory_space<vmem>>, vector<8x64xf32>
    %c0_368 = arith.constant 0 : index
    %c0_369 = arith.constant 0 : index
    %568 = vector.load %arg11[%c0_368, %c0_369] : memref<8x32xf32, #tpu.memory_space<vmem>>, vector<8x32xf32>
    %c0_370 = arith.constant 0 : index
    %c0_371 = arith.constant 0 : index
    %569 = vector.load %arg3[%c0_370, %c0_371] : memref<64x128xf32, #tpu.memory_space<vmem>>, vector<64x128xf32>
    %cst_372 = arith.constant dense<0.000000e+00> : vector<8x128xf32>
    %570 = tpu.matmul %567, %569, %cst_372 {dimension_numbers = #tpu.dot_dimension_numbers<[1], [0], [0], [1], [0, 0, 1, 1], [], []>} : vector<8x64xf32>, vector<64x128xf32>, vector<8x128xf32> -> vector<8x128xf32>
    %571 = vector.broadcast %12 : vector<1x128xf32> to vector<8x128xf32>
    %572 = arith.addf %570, %571 : vector<8x128xf32>
    %573 = tpu.iota {dimensions = array<i32: 1>} : vector<8x128xi32>
    %c64_i32_373 = arith.constant 64 : i32
    %574 = vector.broadcast %c64_i32_373 : i32 to vector<8x128xi32>
    %575 = arith.cmpi sge, %573, %574 : vector<8x128xi32>
    %c96_i32_374 = arith.constant 96 : i32
    %576 = vector.broadcast %c96_i32_374 : i32 to vector<8x128xi32>
    %577 = arith.cmpi slt, %573, %576 : vector<8x128xi32>
    %578 = arith.andi %575, %577 : vector<8x128xi1>
    %579 = math.tanh %572 : vector<8x128xf32>
    %580 = arith.negf %572 : vector<8x128xf32>
    %581 = math.exp %580 : vector<8x128xf32>
    %cst_375 = arith.constant 1.000000e+00 : f32
    %582 = vector.broadcast %cst_375 : f32 to vector<8x128xf32>
    %583 = arith.addf %582, %581 : vector<8x128xf32>
    %584 = arith.divf %582, %583 : vector<8x128xf32>
    %585 = arith.select %578, %579, %584 : vector<8x128xi1>, vector<8x128xf32>
    %586 = vector.extract_strided_slice %585 {offsets = [0, 0], sizes = [8, 32], strides = [1, 1]} : vector<8x128xf32> to vector<8x32xf32>
    %587 = vector.extract_strided_slice %585 {offsets = [0, 32], sizes = [8, 32], strides = [1, 1]} : vector<8x128xf32> to vector<8x32xf32>
    %588 = vector.extract_strided_slice %585 {offsets = [0, 64], sizes = [8, 32], strides = [1, 1]} : vector<8x128xf32> to vector<8x32xf32>
    %589 = vector.extract_strided_slice %585 {offsets = [0, 96], sizes = [8, 32], strides = [1, 1]} : vector<8x128xf32> to vector<8x32xf32>
    %590 = arith.mulf %587, %568 : vector<8x32xf32>
    %591 = arith.mulf %586, %588 : vector<8x32xf32>
    %592 = arith.addf %590, %591 : vector<8x32xf32>
    %593 = math.tanh %592 : vector<8x32xf32>
    %594 = arith.mulf %589, %593 : vector<8x32xf32>
    %c0_376 = arith.constant 0 : index
    %c0_377 = arith.constant 0 : index
    %595 = vector.load %arg10[%c0_376, %c0_377] : memref<8x32xf32, #tpu.memory_space<vmem>>, vector<8x32xf32>
    tpu.vector_store %arg10[%c0_376, %c0_377], %594 {strides = array<i32>} : memref<8x32xf32, #tpu.memory_space<vmem>>, vector<8x32xf32>,
    %c0_378 = arith.constant 0 : index
    %c0_379 = arith.constant 0 : index
    %596 = vector.load %arg11[%c0_378, %c0_379] : memref<8x32xf32, #tpu.memory_space<vmem>>, vector<8x32xf32>
    tpu.vector_store %arg11[%c0_378, %c0_379], %592 {strides = array<i32>} : memref<8x32xf32, #tpu.memory_space<vmem>>, vector<8x32xf32>,
    %c0_380 = arith.constant 0 : index
    %c0_381 = arith.constant 0 : index
    %597 = vector.load %arg12[%c0_380, %c0_381] : memref<8x64xf32, #tpu.memory_space<vmem>>, vector<8x32xf32>
    tpu.vector_store %arg12[%c0_380, %c0_381], %594 {strides = array<i32>} : memref<8x64xf32, #tpu.memory_space<vmem>>, vector<8x32xf32>,
    %c0_382 = arith.constant 0 : index
    %c0_383 = arith.constant 0 : index
    %598 = vector.load %arg13[%c0_382, %c0_383] : memref<8x32xf32, #tpu.memory_space<vmem>>, vector<8x32xf32>
    %c0_384 = arith.constant 0 : index
    %c32_385 = arith.constant 32 : index
    %599 = vector.load %arg12[%c0_384, %c32_385] : memref<8x64xf32, #tpu.memory_space<vmem>>, vector<8x32xf32>
    tpu.vector_store %arg12[%c0_384, %c32_385], %598 {strides = array<i32>} : memref<8x64xf32, #tpu.memory_space<vmem>>, vector<8x32xf32>,
    %c0_386 = arith.constant 0 : index
    %c0_387 = arith.constant 0 : index
    %600 = vector.load %arg12[%c0_386, %c0_387] : memref<8x64xf32, #tpu.memory_space<vmem>>, vector<8x64xf32>
    %c0_388 = arith.constant 0 : index
    %c0_389 = arith.constant 0 : index
    %601 = vector.load %arg14[%c0_388, %c0_389] : memref<8x32xf32, #tpu.memory_space<vmem>>, vector<8x32xf32>
    %c0_390 = arith.constant 0 : index
    %c0_391 = arith.constant 0 : index
    %602 = vector.load %arg5[%c0_390, %c0_391] : memref<64x128xf32, #tpu.memory_space<vmem>>, vector<64x128xf32>
    %cst_392 = arith.constant dense<0.000000e+00> : vector<8x128xf32>
    %603 = tpu.matmul %600, %602, %cst_392 {dimension_numbers = #tpu.dot_dimension_numbers<[1], [0], [0], [1], [0, 0, 1, 1], [], []>} : vector<8x64xf32>, vector<64x128xf32>, vector<8x128xf32> -> vector<8x128xf32>
    %604 = vector.broadcast %13 : vector<1x128xf32> to vector<8x128xf32>
    %605 = arith.addf %603, %604 : vector<8x128xf32>
    %606 = tpu.iota {dimensions = array<i32: 1>} : vector<8x128xi32>
    %c64_i32_393 = arith.constant 64 : i32
    %607 = vector.broadcast %c64_i32_393 : i32 to vector<8x128xi32>
    %608 = arith.cmpi sge, %606, %607 : vector<8x128xi32>
    %c96_i32_394 = arith.constant 96 : i32
    %609 = vector.broadcast %c96_i32_394 : i32 to vector<8x128xi32>
    %610 = arith.cmpi slt, %606, %609 : vector<8x128xi32>
    %611 = arith.andi %608, %610 : vector<8x128xi1>
    %612 = math.tanh %605 : vector<8x128xf32>
    %613 = arith.negf %605 : vector<8x128xf32>
    %614 = math.exp %613 : vector<8x128xf32>
    %cst_395 = arith.constant 1.000000e+00 : f32
    %615 = vector.broadcast %cst_395 : f32 to vector<8x128xf32>
    %616 = arith.addf %615, %614 : vector<8x128xf32>
    %617 = arith.divf %615, %616 : vector<8x128xf32>
    %618 = arith.select %611, %612, %617 : vector<8x128xi1>, vector<8x128xf32>
    %619 = vector.extract_strided_slice %618 {offsets = [0, 0], sizes = [8, 32], strides = [1, 1]} : vector<8x128xf32> to vector<8x32xf32>
    %620 = vector.extract_strided_slice %618 {offsets = [0, 32], sizes = [8, 32], strides = [1, 1]} : vector<8x128xf32> to vector<8x32xf32>
    %621 = vector.extract_strided_slice %618 {offsets = [0, 64], sizes = [8, 32], strides = [1, 1]} : vector<8x128xf32> to vector<8x32xf32>
    %622 = vector.extract_strided_slice %618 {offsets = [0, 96], sizes = [8, 32], strides = [1, 1]} : vector<8x128xf32> to vector<8x32xf32>
    %623 = arith.mulf %620, %601 : vector<8x32xf32>
    %624 = arith.mulf %619, %621 : vector<8x32xf32>
    %625 = arith.addf %623, %624 : vector<8x32xf32>
    %626 = math.tanh %625 : vector<8x32xf32>
    %627 = arith.mulf %622, %626 : vector<8x32xf32>
    %c0_396 = arith.constant 0 : index
    %c0_397 = arith.constant 0 : index
    %628 = vector.load %arg13[%c0_396, %c0_397] : memref<8x32xf32, #tpu.memory_space<vmem>>, vector<8x32xf32>
    tpu.vector_store %arg13[%c0_396, %c0_397], %627 {strides = array<i32>} : memref<8x32xf32, #tpu.memory_space<vmem>>, vector<8x32xf32>,
    %c0_398 = arith.constant 0 : index
    %c0_399 = arith.constant 0 : index
    %629 = vector.load %arg14[%c0_398, %c0_399] : memref<8x32xf32, #tpu.memory_space<vmem>>, vector<8x32xf32>
    tpu.vector_store %arg14[%c0_398, %c0_399], %625 {strides = array<i32>} : memref<8x32xf32, #tpu.memory_space<vmem>>, vector<8x32xf32>,
    %c8_i32 = arith.constant 8 : i32
    %c0_400 = arith.constant 0 : index
    %c0_401 = arith.constant 0 : index
    %630 = vector.load %arg10[%c0_400, %c0_401] : memref<8x32xf32, #tpu.memory_space<vmem>>, vector<8x32xf32>
    %c0_402 = arith.constant 0 : index
    %c0_403 = arith.constant 0 : index
    %c0_404 = arith.constant 0 : index
    %631 = vector.load %arg7[%c0_402, %c0_403, %c0_404] : memref<2x8x32xf32, #tpu.memory_space<vmem>>, vector<1x8x32xf32>
    %632 = vector.shape_cast %631 : vector<1x8x32xf32> to vector<8x32xf32>
    %633 = vector.shape_cast %630 : vector<8x32xf32> to vector<1x8x32xf32>
    tpu.vector_store %arg7[%c0_402, %c0_403, %c0_404], %633 {strides = array<i32>} : memref<2x8x32xf32, #tpu.memory_space<vmem>>, vector<1x8x32xf32>,
    %c0_405 = arith.constant 0 : index
    %c0_406 = arith.constant 0 : index
    %634 = vector.load %arg11[%c0_405, %c0_406] : memref<8x32xf32, #tpu.memory_space<vmem>>, vector<8x32xf32>
    %c0_407 = arith.constant 0 : index
    %c0_408 = arith.constant 0 : index
    %c0_409 = arith.constant 0 : index
    %635 = vector.load %arg8[%c0_407, %c0_408, %c0_409] : memref<2x8x32xf32, #tpu.memory_space<vmem>>, vector<1x8x32xf32>
    %636 = vector.shape_cast %635 : vector<1x8x32xf32> to vector<8x32xf32>
    %637 = vector.shape_cast %634 : vector<8x32xf32> to vector<1x8x32xf32>
    tpu.vector_store %arg8[%c0_407, %c0_408, %c0_409], %637 {strides = array<i32>} : memref<2x8x32xf32, #tpu.memory_space<vmem>>, vector<1x8x32xf32>,
    %c0_410 = arith.constant 0 : index
    %c0_411 = arith.constant 0 : index
    %638 = vector.load %arg13[%c0_410, %c0_411] : memref<8x32xf32, #tpu.memory_space<vmem>>, vector<8x32xf32>
    %c1_412 = arith.constant 1 : index
    %c0_413 = arith.constant 0 : index
    %c0_414 = arith.constant 0 : index
    %639 = vector.load %arg7[%c1_412, %c0_413, %c0_414] : memref<2x8x32xf32, #tpu.memory_space<vmem>>, vector<1x8x32xf32>
    %640 = vector.shape_cast %639 : vector<1x8x32xf32> to vector<8x32xf32>
    %641 = vector.shape_cast %638 : vector<8x32xf32> to vector<1x8x32xf32>
    tpu.vector_store %arg7[%c1_412, %c0_413, %c0_414], %641 {strides = array<i32>} : memref<2x8x32xf32, #tpu.memory_space<vmem>>, vector<1x8x32xf32>,
    %c0_415 = arith.constant 0 : index
    %c0_416 = arith.constant 0 : index
    %642 = vector.load %arg14[%c0_415, %c0_416] : memref<8x32xf32, #tpu.memory_space<vmem>>, vector<8x32xf32>
    %c1_417 = arith.constant 1 : index
    %c0_418 = arith.constant 0 : index
    %c0_419 = arith.constant 0 : index
    %643 = vector.load %arg8[%c1_417, %c0_418, %c0_419] : memref<2x8x32xf32, #tpu.memory_space<vmem>>, vector<1x8x32xf32>
    %644 = vector.shape_cast %643 : vector<1x8x32xf32> to vector<8x32xf32>
    %645 = vector.shape_cast %642 : vector<8x32xf32> to vector<1x8x32xf32>
    tpu.vector_store %arg8[%c1_417, %c0_418, %c0_419], %645 {strides = array<i32>} : memref<2x8x32xf32, #tpu.memory_space<vmem>>, vector<1x8x32xf32>,
    return
  }
  func.func @transform_0(%arg0: i32, %arg1: memref<8x2xi32, #tpu.memory_space<smem>>) -> (i32, i32, i32) {
    %c0_i32 = arith.constant 0 : i32
    %c0_i32_0 = arith.constant 0 : i32
    %c0_i32_1 = arith.constant 0 : i32
    %c0_i32_2 = arith.constant 0 : i32
    return %c0_i32, %c0_i32_0, %c0_i32_1 : i32, i32, i32
  }
  func.func @transform_1(%arg0: i32, %arg1: memref<8x2xi32, #tpu.memory_space<smem>>) -> (i32, i32) {
    %c0_i32 = arith.constant 0 : i32
    %c0_i32_0 = arith.constant 0 : i32
    %c0_i32_1 = arith.constant 0 : i32
    return %c0_i32, %c0_i32_0 : i32, i32
  }
  func.func @transform_2(%arg0: i32, %arg1: memref<8x2xi32, #tpu.memory_space<smem>>) -> (i32, i32) {
    %c0_i32 = arith.constant 0 : i32
    %c0_i32_0 = arith.constant 0 : i32
    %c0_i32_1 = arith.constant 0 : i32
    return %c0_i32, %c0_i32_0 : i32, i32
  }
  func.func @transform_3(%arg0: i32, %arg1: memref<8x2xi32, #tpu.memory_space<smem>>) -> (i32, i32) {
    %c0_i32 = arith.constant 0 : i32
    %c0_i32_0 = arith.constant 0 : i32
    %c0_i32_1 = arith.constant 0 : i32
    return %c0_i32, %c0_i32_0 : i32, i32
  }
  func.func @transform_4(%arg0: i32, %arg1: memref<8x2xi32, #tpu.memory_space<smem>>) -> (i32, i32) {
    %c0_i32 = arith.constant 0 : i32
    %c0_i32_0 = arith.constant 0 : i32
    %c0_i32_1 = arith.constant 0 : i32
    return %c0_i32, %c0_i32_0 : i32, i32
  }
  func.func @transform_5(%arg0: i32, %arg1: memref<8x2xi32, #tpu.memory_space<smem>>) -> (i32, i32, i32) {
    %c0_i32 = arith.constant 0 : i32
    %c0_i32_0 = arith.constant 0 : i32
    %c0_i32_1 = arith.constant 0 : i32
    %c0_i32_2 = arith.constant 0 : i32
    return %c0_i32, %c0_i32_0, %c0_i32_1 : i32, i32, i32
  }
  func.func @transform_6(%arg0: i32, %arg1: memref<8x2xi32, #tpu.memory_space<smem>>) -> (i32, i32, i32) {
    %c0_i32 = arith.constant 0 : i32
    %c0_i32_0 = arith.constant 0 : i32
    %c0_i32_1 = arith.constant 0 : i32
    %c0_i32_2 = arith.constant 0 : i32
    return %c0_i32, %c0_i32_0, %c0_i32_1 : i32, i32, i32
  }
}

</mosaic_0001>

<llo_original>
// kernel: tpu_custom_call.1
$region0: #{tpu_custom_call.1}
  #allocation0 [shape = 'u32[]', space=smem, size = 0x4, offset = 0x4, fixed_abs, tag = 'smem constant byte address 0x4 - core index']
  #allocation1 [shape = 'u32[144,128]{1,0:T(1,128)}', space=vmem, size = 0x12000, scoped, tag = 'internal scratch']
  #allocation2 [shape = 'f32[8,64]{1,0:T(8,128)}', space=vmem, size = 0x1000, scoped, tag = 'scratch operand']
  #allocation3 [shape = 'f32[8,32]{1,0:T(8,128)}', space=vmem, size = 0x1000, scoped, tag = 'scratch operand']
  #allocation4 [shape = 'f32[8,32]{1,0:T(8,128)}', space=vmem, size = 0x1000, scoped, tag = 'scratch operand']
  #allocation5 [shape = 'f32[8,64]{1,0:T(8,128)}', space=vmem, size = 0x1000, scoped, tag = 'scratch operand']
  #allocation6 [shape = 'f32[8,32]{1,0:T(8,128)}', space=vmem, size = 0x1000, scoped, tag = 'scratch operand']
  #allocation7 [shape = 'f32[8,32]{1,0:T(8,128)}', space=vmem, size = 0x1000, scoped, tag = 'scratch operand']
  #allocation8 [shape = 's32[1]{0}', space=sflag, size = 0x4, scoped, tag = 'scoped memory for tpu_custom_call.1']
  #allocation9 [shape = 'u8[4096]{0}', space=smem, size = 0x1000, scoped, tag = 'prefetched SMEM operand 0']
  %s0 = inlined_call_operand.vmem [shape: s32[8,2], index: 0, kind: input, shape index: {}]
  %s1 = inlined_call_operand.vmem [shape: f32[50,1,32], index: 1, kind: input, shape index: {}]
  %s2 = inlined_call_operand.vmem [shape: f32[64,128], index: 2, kind: input, shape index: {}]
  %s3 = inlined_call_operand.vmem [shape: f32[1,128], index: 3, kind: input, shape index: {}]
  %s4 = inlined_call_operand.hbm [shape: f32[64,128], index: 4, kind: input, shape index: {}]
  %s5 = inlined_call_operand.vmem [shape: f32[1,128], index: 5, kind: input, shape index: {}]
  %s6 = inlined_call_operand.hbm [shape: f32[2,8,32], index: 6, kind: output, shape index: {0}]
  %s7 = inlined_call_operand.hbm [shape: f32[2,8,32], index: 7, kind: output, shape index: {1}]
  %8 = xla_tuple %s6, %s7
  %s9 = sld [smem:[#allocation0]]
  $region42: #{tpu_custom_call.1} parent=0
    _
  %s11 = ssub.s32 1, %s9
  %s12 = scalar_select 0, %s11, %s9
  %s13 = sshll.u32 %s0, 4
  %s14 = int_to_ptr.vmem [resolvable:$true] %s13
  %16 = dma.vmem_to_smem %s14, 128, [#allocation9], [#allocation8]
  %17 = dma.done [#allocation8], 128
  %18 = sfence
  $region1: #{tpu_custom_call.1} parent=0
    #allocation10 [shape = 'u8[32768]{0}', space=vmem, size = 0x8000, scoped, tag = 'input window, operand 4, single buffered']
    #allocation11 [shape = 's32[1]{0}', space=sflag, size = 0x4, scoped, tag = 'scoped memory for tpu_custom_call.1']
    #allocation12 [shape = 's32[1]{0}', space=sflag, size = 0x4, scoped, tag = 'scoped memory for tpu_custom_call.1']
    #allocation13 [shape = 'u8[8192]{0}', space=vmem, size = 0x2000, scoped, tag = 'output window, operand 0, single buffered']
    #allocation14 [shape = 'u8[8192]{0}', space=vmem, size = 0x2000, scoped, tag = 'output window, operand 1, single buffered']
    #allocation15 [shape = 's32[1]{0}', space=sflag, size = 0x4, scoped, tag = 'scoped memory for tpu_custom_call.1']
    %19 = vsyncpa [#allocation11], 0
    %20 = vsyncpa [#allocation12], 0
    %21 = vsyncpa [#allocation15], 0
    // Predicated region
    $region2: #{tpu_custom_call.1} parent=1 // pred_check
      _
    $region3: #{tpu_custom_call.1} parent=1 // pred_check_branch
      %23 = sbr.rel (0) target = $region5
    $region4: #{tpu_custom_call.1} parent=1 // pred_region
      _
    $region5: #{tpu_custom_call.1} parent=1 // pred_fallthru
      _
    // Predicated region
    $region6: #{tpu_custom_call.1} parent=1 // pred_check
      _
    $region7: #{tpu_custom_call.1} parent=1 // pred_check_branch
      %25 = sbr.rel (0) target = $region9
    $region8: #{tpu_custom_call.1} parent=1 // pred_region
      _
    $region9: #{tpu_custom_call.1} parent=1 // pred_fallthru
      _
    // Predicated region
    $region10: #{tpu_custom_call.1} parent=1 // pred_check
      _
    $region11: #{tpu_custom_call.1} parent=1 // pred_check_branch
      %27 = sbr.rel (0) target = $region13
    $region12: #{tpu_custom_call.1} parent=1 // pred_region
      _
    $region13: #{tpu_custom_call.1} parent=1 // pred_fallthru
      _
    // Predicated region
    $region14: #{tpu_custom_call.1} parent=1 // pred_check
      _
    $region15: #{tpu_custom_call.1} parent=1 // pred_check_branch
      %29 = sbr.rel (0) target = $region17
    $region16: #{tpu_custom_call.1} parent=1 // pred_region
      %s31 = ssub.s32 1024, 1024
      %32 = vsyncadd [#allocation11], %s31
      %s33 = sshll.u32 [#allocation10], 4
      %s34 = int_to_ptr.vmem [resolvable:$true] %s33
      %39 = dma.hbm_to_vmem [thread:$0]  %s4, 1024, %s34, [#allocation11], 128, 128, 8
    $region17: #{tpu_custom_call.1} parent=1 // pred_fallthru
      _
    // Predicated region
    $region18: #{tpu_custom_call.1} parent=1 // pred_check
      _
    $region19: #{tpu_custom_call.1} parent=1 // pred_check_branch
      %41 = sbr.rel (0) target = $region21
    $region20: #{tpu_custom_call.1} parent=1 // pred_region
      _
    $region21: #{tpu_custom_call.1} parent=1 // pred_fallthru
      _
    // Predicated region
    $region22: #{tpu_custom_call.1} parent=1 // pred_check
      _
    $region23: #{tpu_custom_call.1} parent=1 // pred_check_branch
      %43 = sbr.rel (0) target = $region25
    $region24: #{tpu_custom_call.1} parent=1 // pred_region
      %44 = dma.done [#allocation11], 1024
    $region25: #{tpu_custom_call.1} parent=1 // pred_fallthru
      _
    %vm45 = vcmask 523264
    %46 = vst.msk [vmem:[#allocation2] sm:$0xff] %vm45, 0.0
    %vm47 = vcmask 261120
    %48 = vst.msk [vmem:[#allocation3] sm:$0xff] %vm47, 0.0
    %49 = vst.msk [vmem:[#allocation4] sm:$0xff] %vm47, 0.0
    %50 = vst.msk [vmem:[#allocation5] sm:$0xff] %vm45, 0.0
    %51 = vst.msk [vmem:[#allocation6] sm:$0xff] %vm47, 0.0
    %52 = vst.msk [vmem:[#allocation7] sm:$0xff] %vm47, 0.0
    %v53 = vld [vmem:[%s3] sm:$0x1]
    %v54 = vld [vmem:[%s5] sm:$0x1]
    %s55 = sld [smem:[#allocation9]]
    %s56 = scalar_lea.vmem %s1, %s55
    %v57 = vld [vmem:[%s56] sm:$0x1]
    %vm58 = vcmask 253952
    %59 = vst.msk [vmem:[#allocation2] sm:$0x1] %vm58, %v57
    %s60 = sld [smem:[#allocation9 + $0x1]]
    %s61 = scalar_lea.vmem %s1, %s60
    %v62 = vld [vmem:[%s61] sm:$0x1]
    %63 = vst.msk [vmem:[#allocation2 + $0x1] sm:$0x1] %vm58, %v62
    %v64 = vld [vmem:[#allocation3] sm:$0xff]
    %66 = vrot.lane.b32.xlu0 %v64, 32
    %v67 = vpop.permute.xlu0 %66
    %vm69 = vcmask 523520
    %70 = vst.msk [vmem:[#allocation2] sm:$0xff] %vm69, %v67
    %v71 = vld [vmem:[#allocation2] sm:$0xff]
    %v72 = vld [vmem:[#allocation4] sm:$0xff]
    %v73 = vld [vmem:[%s2] sm:$0xff]
    %v74 = vld [vmem:[%s2 + $0x8] sm:$0xff]
    %v75 = vld [vmem:[%s2 + $0x10] sm:$0xff]
    %v76 = vld [vmem:[%s2 + $0x18] sm:$0xff]
    %v77 = vld [vmem:[%s2 + $0x20] sm:$0xff]
    %v78 = vld [vmem:[%s2 + $0x28] sm:$0xff]
    %v79 = vld [vmem:[%s2 + $0x30] sm:$0xff]
    %v80 = vld [vmem:[%s2 + $0x38] sm:$0xff]
    %v82 = vlaneseq
    %v83 = vshrl.u32 %v82, 7
    %v84 = vsub.s32 0, %v83
    %v85 = vrot.slane %v53, %v84
    %v88 = vsel %vm45, %v71, 0
    %90 = vmatprep.subr.mxu0 0.0
    %91 = vmatpush1.msra.mxu0 0.0
    %92 = vmatprep.subr.mxu0 0.0
    %93 = vmatpush1.msra.mxu0 0.0
    %94 = vmatprep.subr.mxu0 0.0
    %95 = vmatpush1.msra.mxu0 0.0
    %96 = vmatprep.subr.mxu0 0.0
    %97 = vmatpush1.msra.mxu0 0.0
    %98 = vmatprep.subr.mxu0 0.0
    %99 = vmatpush1.msra.mxu0 0.0
    %100 = vmatprep.subr.mxu0 0.0
    %101 = vmatpush1.msra.mxu0 0.0
    %102 = vmatprep.subr.mxu0 0.0
    %103 = vmatpush1.msra.mxu0 0.0
    %104 = vmatprep.subr.mxu0 0.0
    %105 = vmatpush1.msra.mxu0 0.0
    %106 = vmatprep.subr.mxu0 0.0
    %107 = vmatpush1.msra.mxu0 %v80
    %108 = vmatprep.subr.mxu0 0.0
    %109 = vmatpush1.msra.mxu0 %v79
    %110 = vmatprep.subr.mxu0 0.0
    %111 = vmatpush1.msra.mxu0 %v78
    %112 = vmatprep.subr.mxu0 0.0
    %113 = vmatpush1.msra.mxu0 %v77
    %114 = vmatprep.subr.mxu0 0.0
    %115 = vmatpush1.msra.mxu0 %v76
    %116 = vmatprep.subr.mxu0 0.0
    %117 = vmatpush1.msra.mxu0 %v75
    %118 = vmatprep.subr.mxu0 0.0
    %119 = vmatpush1.msra.mxu0 %v74
    %120 = vmatprep.subr.mxu0 0.0
    %121 = vmatpush1.msra.mxu0 %v73
    %122 = vmatprep.subr.mxu0 0.0
    %123 = vmatpush2.msra.mxu0 0.0
    %124 = vmatprep.subr.mxu0 0.0
    %125 = vmatpush2.msra.mxu0 0.0
    %126 = vmatprep.subr.mxu0 0.0
    %127 = vmatpush2.msra.mxu0 0.0
    %128 = vmatprep.subr.mxu0 0.0
    %129 = vmatpush2.msra.mxu0 0.0
    %130 = vmatprep.subr.mxu0 0.0
    %131 = vmatpush2.msra.mxu0 0.0
    %132 = vmatprep.subr.mxu0 0.0
    %133 = vmatpush2.msra.mxu0 0.0
    %134 = vmatprep.subr.mxu0 0.0
    %135 = vmatpush2.msra.mxu0 0.0
    %136 = vmatprep.subr.mxu0 0.0
    %137 = vmatpush2.msra.mxu0 0.0
    %138 = vmatprep.subr.mxu0 0.0
    %139 = vmatpush2.msra.mxu0 0.0
    %140 = vmatprep.subr.mxu0 0.0
    %141 = vmatpush2.msra.mxu0 0.0
    %142 = vmatprep.subr.mxu0 0.0
    %143 = vmatpush2.msra.mxu0 0.0
    %144 = vmatprep.subr.mxu0 0.0
    %145 = vmatpush2.msra.mxu0 0.0
    %146 = vmatprep.subr.mxu0 0.0
    %147 = vmatpush2.msra.mxu0 0.0
    %148 = vmatprep.subr.mxu0 0.0
    %149 = vmatpush2.msra.mxu0 0.0
    %150 = vmatprep.subr.mxu0 0.0
    %151 = vmatpush2.msra.mxu0 0.0
    %152 = vmatprep.subr.mxu0 0.0
    %153 = vmatpush2.msra.mxu0 0.0
    %154 = vmatprep.mubr.f32.mxu0 0.0
    %155 = vmatmul.mubr.f32.gmra.mxu0 %v88
    %v156 = vpop.f32.mrf.mxu0
    %v157 = vadd.f32 %v85, %v156
    %v158 = vpop.f32.mrf.mxu0
    %159 = vdwg.mxu0
    %v160 = vlaneseq
    %v161 = vand.u32 %v160, 127
    %vm162 = vcmp.ge.s32.totalorder %v161, 64
    %vm163 = vcmp.lt.s32.totalorder %v161, 96
    %vm164 = vmand %vm162, %vm163
    %v165 = vtanh.pop %v157
    %v166 = vxor.u32 %v157, 2147483648
    %v167 = vmul.f32 %v166, 1.442695
    %v168 = vpow.pop %v167
    %v169 = vadd.f32 %v168, 1.0
    %v170 = vrcp.pop %v169
    %v171 = vmul.f32 1.0, %v170
    %v172 = vsel %vm164, %v165, %v171
    %174 = vrot.lane.b32.xlu0 %v72, 32
    %v175 = vpop.permute.xlu0 %174
    %v177 = vmul.f32 %v172, %v175
    %179 = vrot.lane.b32.xlu0 %v172, 64
    %v180 = vpop.permute.xlu0 %179
    %v182 = vmul.f32 %v172, %v180
    %184 = vrot.lane.b32.xlu0 %v182, 32
    %v185 = vpop.permute.xlu0 %184
    %v187 = vadd.f32 %v177, %v185
    %v188 = vtanh.pop %v187
    %190 = vrot.lane.b32.xlu0 %v188, 64
    %v191 = vpop.permute.xlu0 %190
    %v193 = vmul.f32 %v172, %v191
    %195 = vrot.lane.b32.xlu0 %v193, 32
    %v196 = vpop.permute.xlu0 %195
    %198 = vst.msk [vmem:[#allocation3] sm:$0xff] %vm47, %v196
    %200 = vrot.lane.b32.xlu0 %v187, 96
    %v201 = vpop.permute.xlu0 %200
    %203 = vst.msk [vmem:[#allocation4] sm:$0xff] %vm47, %v201
    %204 = vst.msk [vmem:[#allocation5] sm:$0xff] %vm47, %v196
    %v205 = vld [vmem:[#allocation6] sm:$0xff]
    %207 = vrot.lane.b32.xlu0 %v205, 32
    %v208 = vpop.permute.xlu0 %207
    %210 = vst.msk [vmem:[#allocation5] sm:$0xff] %vm69, %v208
    %v211 = vld [vmem:[#allocation5] sm:$0xff]
    %v212 = vld [vmem:[#allocation7] sm:$0xff]
    %v213 = vld [vmem:[#allocation10] sm:$0xff]
    %v214 = vld [vmem:[#allocation10 + $0x8] sm:$0xff]
    %v215 = vld [vmem:[#allocation10 + $0x10] sm:$0xff]
    %v216 = vld [vmem:[#allocation10 + $0x18] sm:$0xff]
    %v217 = vld [vmem:[#allocation10 + $0x20] sm:$0xff]
    %v218 = vld [vmem:[#allocation10 + $0x28] sm:$0xff]
    %v219 = vld [vmem:[#allocation10 + $0x30] sm:$0xff]
    %v220 = vld [vmem:[#allocation10 + $0x38] sm:$0xff]
    %v222 = vlaneseq
    %v223 = vshrl.u32 %v222, 7
    %v224 = vsub.s32 0, %v223
    %v225 = vrot.slane %v54, %v224
    %v228 = vsel %vm45, %v211, 0
    %230 = vmatprep.subr.mxu0 0.0
    %231 = vmatpush1.msra.mxu0 0.0
    %232 = vmatprep.subr.mxu0 0.0
    %233 = vmatpush1.msra.mxu0 0.0
    %234 = vmatprep.subr.mxu0 0.0
    %235 = vmatpush1.msra.mxu0 0.0
    %236 = vmatprep.subr.mxu0 0.0
    %237 = vmatpush1.msra.mxu0 0.0
    %238 = vmatprep.subr.mxu0 0.0
    %239 = vmatpush1.msra.mxu0 0.0
    %240 = vmatprep.subr.mxu0 0.0
    %241 = vmatpush1.msra.mxu0 0.0
    %242 = vmatprep.subr.mxu0 0.0
    %243 = vmatpush1.msra.mxu0 0.0
    %244 = vmatprep.subr.mxu0 0.0
    %245 = vmatpush1.msra.mxu0 0.0
    %246 = vmatprep.subr.mxu0 0.0
    %247 = vmatpush1.msra.mxu0 %v220
    %248 = vmatprep.subr.mxu0 0.0
    %249 = vmatpush1.msra.mxu0 %v219
    %250 = vmatprep.subr.mxu0 0.0
    %251 = vmatpush1.msra.mxu0 %v218
    %252 = vmatprep.subr.mxu0 0.0
    %253 = vmatpush1.msra.mxu0 %v217
    %254 = vmatprep.subr.mxu0 0.0
    %255 = vmatpush1.msra.mxu0 %v216
    %256 = vmatprep.subr.mxu0 0.0
    %257 = vmatpush1.msra.mxu0 %v215
    %258 = vmatprep.subr.mxu0 0.0
    %259 = vmatpush1.msra.mxu0 %v214
    %260 = vmatprep.subr.mxu0 0.0
    %261 = vmatpush1.msra.mxu0 %v213
    %262 = vmatprep.subr.mxu0 0.0
    %263 = vmatpush2.msra.mxu0 0.0
    %264 = vmatprep.subr.mxu0 0.0
    %265 = vmatpush2.msra.mxu0 0.0
    %266 = vmatprep.subr.mxu0 0.0
    %267 = vmatpush2.msra.mxu0 0.0
    %268 = vmatprep.subr.mxu0 0.0
    %269 = vmatpush2.msra.mxu0 0.0
    %270 = vmatprep.subr.mxu0 0.0
    %271 = vmatpush2.msra.mxu0 0.0
    %272 = vmatprep.subr.mxu0 0.0
    %273 = vmatpush2.msra.mxu0 0.0
    %274 = vmatprep.subr.mxu0 0.0
    %275 = vmatpush2.msra.mxu0 0.0
    %276 = vmatprep.subr.mxu0 0.0
    %277 = vmatpush2.msra.mxu0 0.0
    %278 = vmatprep.subr.mxu0 0.0
    %279 = vmatpush2.msra.mxu0 0.0
    %280 = vmatprep.subr.mxu0 0.0
    %281 = vmatpush2.msra.mxu0 0.0
    %282 = vmatprep.subr.mxu0 0.0
    %283 = vmatpush2.msra.mxu0 0.0
    %284 = vmatprep.subr.mxu0 0.0
    %285 = vmatpush2.msra.mxu0 0.0
    %286 = vmatprep.subr.mxu0 0.0
    %287 = vmatpush2.msra.mxu0 0.0
    %288 = vmatprep.subr.mxu0 0.0
    %289 = vmatpush2.msra.mxu0 0.0
    %290 = vmatprep.subr.mxu0 0.0
    %291 = vmatpush2.msra.mxu0 0.0
    %292 = vmatprep.subr.mxu0 0.0
    %293 = vmatpush2.msra.mxu0 0.0
    %294 = vmatprep.mubr.f32.mxu0 0.0
    %295 = vmatmul.mubr.f32.gmra.mxu0 %v228
    %v296 = vpop.f32.mrf.mxu0
    %v297 = vadd.f32 %v225, %v296
    %v298 = vpop.f32.mrf.mxu0
    %299 = vdwg.mxu0
    %v300 = vtanh.pop %v297
    %v301 = vxor.u32 %v297, 2147483648
    %v302 = vmul.f32 %v301, 1.442695
    %v303 = vpow.pop %v302
    %v304 = vadd.f32 %v303, 1.0
    %v305 = vrcp.pop %v304
    %v306 = vmul.f32 1.0, %v305
    %v307 = vsel %vm164, %v300, %v306
    %309 = vrot.lane.b32.xlu0 %v212, 32
    %v310 = vpop.permute.xlu0 %309
    %v312 = vmul.f32 %v307, %v310
    %314 = vrot.lane.b32.xlu0 %v307, 64
    %v315 = vpop.permute.xlu0 %314
    %v317 = vmul.f32 %v307, %v315
    %319 = vrot.lane.b32.xlu0 %v317, 32
    %v320 = vpop.permute.xlu0 %319
    %v322 = vadd.f32 %v312, %v320
    %v323 = vtanh.pop %v322
    %325 = vrot.lane.b32.xlu0 %v323, 64
    %v326 = vpop.permute.xlu0 %325
    %v328 = vmul.f32 %v307, %v326
    %330 = vrot.lane.b32.xlu0 %v328, 32
    %v331 = vpop.permute.xlu0 %330
    %333 = vst.msk [vmem:[#allocation6] sm:$0xff] %vm47, %v331
    %335 = vrot.lane.b32.xlu0 %v322, 96
    %v336 = vpop.permute.xlu0 %335
    %338 = vst.msk [vmem:[#allocation7] sm:$0xff] %vm47, %v336
    %s339 = sld [smem:[#allocation9 + $0x80]]
    %s340 = scalar_lea.vmem %s1, %s339
    %v341 = vld [vmem:[%s340] sm:$0x1]
    %342 = vst.msk [vmem:[#allocation2] sm:$0x1] %vm58, %v341
    %s343 = sld [smem:[#allocation9 + $0x81]]
    %s344 = scalar_lea.vmem %s1, %s343
    %v345 = vld [vmem:[%s344] sm:$0x1]
    %346 = vst.msk [vmem:[#allocation2 + $0x1] sm:$0x1] %vm58, %v345
    %v347 = vld [vmem:[#allocation3] sm:$0xff]
    %349 = vrot.lane.b32.xlu0 %v347, 32
    %v350 = vpop.permute.xlu0 %349
    %352 = vst.msk [vmem:[#allocation2] sm:$0xff] %vm69, %v350
    %v353 = vld [vmem:[#allocation2] sm:$0xff]
    %v354 = vld [vmem:[#allocation4] sm:$0xff]
    %v355 = vld [vmem:[%s2] sm:$0xff]
    %v356 = vld [vmem:[%s2 + $0x8] sm:$0xff]
    %v357 = vld [vmem:[%s2 + $0x10] sm:$0xff]
    %v358 = vld [vmem:[%s2 + $0x18] sm:$0xff]
    %v359 = vld [vmem:[%s2 + $0x20] sm:$0xff]
    %v360 = vld [vmem:[%s2 + $0x28] sm:$0xff]
    %v361 = vld [vmem:[%s2 + $0x30] sm:$0xff]
    %v362 = vld [vmem:[%s2 + $0x38] sm:$0xff]
    %v364 = vsel %vm45, %v353, 0
    %366 = vmatprep.subr.mxu0 0.0
    %367 = vmatpush1.msra.mxu0 0.0
    %368 = vmatprep.subr.mxu0 0.0
    %369 = vmatpush1.msra.mxu0 0.0
    %370 = vmatprep.subr.mxu0 0.0
    %371 = vmatpush1.msra.mxu0 0.0
    %372 = vmatprep.subr.mxu0 0.0
    %373 = vmatpush1.msra.mxu0 0.0
    %374 = vmatprep.subr.mxu0 0.0
    %375 = vmatpush1.msra.mxu0 0.0
    %376 = vmatprep.subr.mxu0 0.0
    %377 = vmatpush1.msra.mxu0 0.0
    %378 = vmatprep.subr.mxu0 0.0
    %379 = vmatpush1.msra.mxu0 0.0
    %380 = vmatprep.subr.mxu0 0.0
    %381 = vmatpush1.msra.mxu0 0.0
    %382 = vmatprep.subr.mxu0 0.0
    %383 = vmatpush1.msra.mxu0 %v362
    %384 = vmatprep.subr.mxu0 0.0
    %385 = vmatpush1.msra.mxu0 %v361
    %386 = vmatprep.subr.mxu0 0.0
    %387 = vmatpush1.msra.mxu0 %v360
    %388 = vmatprep.subr.mxu0 0.0
    %389 = vmatpush1.msra.mxu0 %v359
    %390 = vmatprep.subr.mxu0 0.0
    %391 = vmatpush1.msra.mxu0 %v358
    %392 = vmatprep.subr.mxu0 0.0
    %393 = vmatpush1.msra.mxu0 %v357
    %394 = vmatprep.subr.mxu0 0.0
    %395 = vmatpush1.msra.mxu0 %v356
    %396 = vmatprep.subr.mxu0 0.0
    %397 = vmatpush1.msra.mxu0 %v355
    %398 = vmatprep.subr.mxu0 0.0
    %399 = vmatpush2.msra.mxu0 0.0
    %400 = vmatprep.subr.mxu0 0.0
    %401 = vmatpush2.msra.mxu0 0.0
    %402 = vmatprep.subr.mxu0 0.0
    %403 = vmatpush2.msra.mxu0 0.0
    %404 = vmatprep.subr.mxu0 0.0
    %405 = vmatpush2.msra.mxu0 0.0
    %406 = vmatprep.subr.mxu0 0.0
    %407 = vmatpush2.msra.mxu0 0.0
    %408 = vmatprep.subr.mxu0 0.0
    %409 = vmatpush2.msra.mxu0 0.0
    %410 = vmatprep.subr.mxu0 0.0
    %411 = vmatpush2.msra.mxu0 0.0
    %412 = vmatprep.subr.mxu0 0.0
    %413 = vmatpush2.msra.mxu0 0.0
    %414 = vmatprep.subr.mxu0 0.0
    %415 = vmatpush2.msra.mxu0 0.0
    %416 = vmatprep.subr.mxu0 0.0
    %417 = vmatpush2.msra.mxu0 0.0
    %418 = vmatprep.subr.mxu0 0.0
    %419 = vmatpush2.msra.mxu0 0.0
    %420 = vmatprep.subr.mxu0 0.0
    %421 = vmatpush2.msra.mxu0 0.0
    %422 = vmatprep.subr.mxu0 0.0
    %423 = vmatpush2.msra.mxu0 0.0
    %424 = vmatprep.subr.mxu0 0.0
    %425 = vmatpush2.msra.mxu0 0.0
    %426 = vmatprep.subr.mxu0 0.0
    %427 = vmatpush2.msra.mxu0 0.0
    %428 = vmatprep.subr.mxu0 0.0
    %429 = vmatpush2.msra.mxu0 0.0
    %430 = vmatprep.mubr.f32.mxu0 0.0
    %431 = vmatmul.mubr.f32.gmra.mxu0 %v364
    %v432 = vpop.f32.mrf.mxu0
    %v433 = vadd.f32 %v85, %v432
    %v434 = vpop.f32.mrf.mxu0
    %435 = vdwg.mxu0
    %v436 = vtanh.pop %v433
    %v437 = vxor.u32 %v433, 2147483648
    %v438 = vmul.f32 %v437, 1.442695
    %v439 = vpow.pop %v438
    %v440 = vadd.f32 %v439, 1.0
    %v441 = vrcp.pop %v440
    %v442 = vmul.f32 1.0, %v441
    %v443 = vsel %vm164, %v436, %v442
    %445 = vrot.lane.b32.xlu0 %v354, 32
    %v446 = vpop.permute.xlu0 %445
    %v448 = vmul.f32 %v443, %v446
    %450 = vrot.lane.b32.xlu0 %v443, 64
    %v451 = vpop.permute.xlu0 %450
    %v453 = vmul.f32 %v443, %v451
    %455 = vrot.lane.b32.xlu0 %v453, 32
    %v456 = vpop.permute.xlu0 %455
    %v458 = vadd.f32 %v448, %v456
    %v459 = vtanh.pop %v458
    %461 = vrot.lane.b32.xlu0 %v459, 64
    %v462 = vpop.permute.xlu0 %461
    %v464 = vmul.f32 %v443, %v462
    %466 = vrot.lane.b32.xlu0 %v464, 32
    %v467 = vpop.permute.xlu0 %466
    %469 = vst.msk [vmem:[#allocation3] sm:$0xff] %vm47, %v467
    %471 = vrot.lane.b32.xlu0 %v458, 96
    %v472 = vpop.permute.xlu0 %471
    %474 = vst.msk [vmem:[#allocation4] sm:$0xff] %vm47, %v472
    %475 = vst.msk [vmem:[#allocation5] sm:$0xff] %vm47, %v467
    %v476 = vld [vmem:[#allocation6] sm:$0xff]
    %478 = vrot.lane.b32.xlu0 %v476, 32
    %v479 = vpop.permute.xlu0 %478
    %481 = vst.msk [vmem:[#allocation5] sm:$0xff] %vm69, %v479
    %v482 = vld [vmem:[#allocation5] sm:$0xff]
    %v483 = vld [vmem:[#allocation7] sm:$0xff]
    %v484 = vld [vmem:[#allocation10] sm:$0xff]
    %v485 = vld [vmem:[#allocation10 + $0x8] sm:$0xff]
    %v486 = vld [vmem:[#allocation10 + $0x10] sm:$0xff]
    %v487 = vld [vmem:[#allocation10 + $0x18] sm:$0xff]
    %v488 = vld [vmem:[#allocation10 + $0x20] sm:$0xff]
    %v489 = vld [vmem:[#allocation10 + $0x28] sm:$0xff]
    %v490 = vld [vmem:[#allocation10 + $0x30] sm:$0xff]
    %v491 = vld [vmem:[#allocation10 + $0x38] sm:$0xff]
    %v493 = vsel %vm45, %v482, 0
    %495 = vmatprep.subr.mxu0 0.0
    %496 = vmatpush1.msra.mxu0 0.0
    %497 = vmatprep.subr.mxu0 0.0
    %498 = vmatpush1.msra.mxu0 0.0
    %499 = vmatprep.subr.mxu0 0.0
    %500 = vmatpush1.msra.mxu0 0.0
    %501 = vmatprep.subr.mxu0 0.0
    %502 = vmatpush1.msra.mxu0 0.0
    %503 = vmatprep.subr.mxu0 0.0
    %504 = vmatpush1.msra.mxu0 0.0
    %505 = vmatprep.subr.mxu0 0.0
    %506 = vmatpush1.msra.mxu0 0.0
    %507 = vmatprep.subr.mxu0 0.0
    %508 = vmatpush1.msra.mxu0 0.0
    %509 = vmatprep.subr.mxu0 0.0
    %510 = vmatpush1.msra.mxu0 0.0
    %511 = vmatprep.subr.mxu0 0.0
    %512 = vmatpush1.msra.mxu0 %v491
    %513 = vmatprep.subr.mxu0 0.0
    %514 = vmatpush1.msra.mxu0 %v490
    %515 = vmatprep.subr.mxu0 0.0
    %516 = vmatpush1.msra.mxu0 %v489
    %517 = vmatprep.subr.mxu0 0.0
    %518 = vmatpush1.msra.mxu0 %v488
    %519 = vmatprep.subr.mxu0 0.0
    %520 = vmatpush1.msra.mxu0 %v487
    %521 = vmatprep.subr.mxu0 0.0
    %522 = vmatpush1.msra.mxu0 %v486
    %523 = vmatprep.subr.mxu0 0.0
    %524 = vmatpush1.msra.mxu0 %v485
    %525 = vmatprep.subr.mxu0 0.0
    %526 = vmatpush1.msra.mxu0 %v484
    %527 = vmatprep.subr.mxu0 0.0
    %528 = vmatpush2.msra.mxu0 0.0
    %529 = vmatprep.subr.mxu0 0.0
    %530 = vmatpush2.msra.mxu0 0.0
    %531 = vmatprep.subr.mxu0 0.0
    %532 = vmatpush2.msra.mxu0 0.0
    %533 = vmatprep.subr.mxu0 0.0
    %534 = vmatpush2.msra.mxu0 0.0
    %535 = vmatprep.subr.mxu0 0.0
    %536 = vmatpush2.msra.mxu0 0.0
    %537 = vmatprep.subr.mxu0 0.0
    %538 = vmatpush2.msra.mxu0 0.0
    %539 = vmatprep.subr.mxu0 0.0
    %540 = vmatpush2.msra.mxu0 0.0
    %541 = vmatprep.subr.mxu0 0.0
    %542 = vmatpush2.msra.mxu0 0.0
    %543 = vmatprep.subr.mxu0 0.0
    %544 = vmatpush2.msra.mxu0 0.0
    %545 = vmatprep.subr.mxu0 0.0
    %546 = vmatpush2.msra.mxu0 0.0
    %547 = vmatprep.subr.mxu0 0.0
    %548 = vmatpush2.msra.mxu0 0.0
    %549 = vmatprep.subr.mxu0 0.0
    %550 = vmatpush2.msra.mxu0 0.0
    %551 = vmatprep.subr.mxu0 0.0
    %552 = vmatpush2.msra.mxu0 0.0
    %553 = vmatprep.subr.mxu0 0.0
    %554 = vmatpush2.msra.mxu0 0.0
    %555 = vmatprep.subr.mxu0 0.0
    %556 = vmatpush2.msra.mxu0 0.0
    %557 = vmatprep.subr.mxu0 0.0
    %558 = vmatpush2.msra.mxu0 0.0
    %559 = vmatprep.mubr.f32.mxu0 0.0
    %560 = vmatmul.mubr.f32.gmra.mxu0 %v493
    %v561 = vpop.f32.mrf.mxu0
    %v562 = vadd.f32 %v225, %v561
    %v563 = vpop.f32.mrf.mxu0
    %564 = vdwg.mxu0
    %v565 = vtanh.pop %v562
    %v566 = vxor.u32 %v562, 2147483648
    %v567 = vmul.f32 %v566, 1.442695
    %v568 = vpow.pop %v567
    %v569 = vadd.f32 %v568, 1.0
    %v570 = vrcp.pop %v569
    %v571 = vmul.f32 1.0, %v570
    %v572 = vsel %vm164, %v565, %v571
    %574 = vrot.lane.b32.xlu0 %v483, 32
    %v575 = vpop.permute.xlu0 %574
    %v577 = vmul.f32 %v572, %v575
    %579 = vrot.lane.b32.xlu0 %v572, 64
    %v580 = vpop.permute.xlu0 %579
    %v582 = vmul.f32 %v572, %v580
    %584 = vrot.lane.b32.xlu0 %v582, 32
    %v585 = vpop.permute.xlu0 %584
    %v587 = vadd.f32 %v577, %v585
    %v588 = vtanh.pop %v587
    %590 = vrot.lane.b32.xlu0 %v588, 64
    %v591 = vpop.permute.xlu0 %590
    %v593 = vmul.f32 %v572, %v591
    %595 = vrot.lane.b32.xlu0 %v593, 32
    %v596 = vpop.permute.xlu0 %595
    %598 = vst.msk [vmem:[#allocation6] sm:$0xff] %vm47, %v596
    %600 = vrot.lane.b32.xlu0 %v587, 96
    %v601 = vpop.permute.xlu0 %600
    %603 = vst.msk [vmem:[#allocation7] sm:$0xff] %vm47, %v601
    %s604 = sld [smem:[#allocation9 + $0x100]]
    %s605 = scalar_lea.vmem %s1, %s604
    %v606 = vld [vmem:[%s605] sm:$0x1]
    %607 = vst.msk [vmem:[#allocation2] sm:$0x1] %vm58, %v606
    %s608 = sld [smem:[#allocation9 + $0x101]]
    %s609 = scalar_lea.vmem %s1, %s608
    %v610 = vld [vmem:[%s609] sm:$0x1]
    %611 = vst.msk [vmem:[#allocation2 + $0x1] sm:$0x1] %vm58, %v610
    %v612 = vld [vmem:[#allocation3] sm:$0xff]
    %614 = vrot.lane.b32.xlu0 %v612, 32
    %v615 = vpop.permute.xlu0 %614
    %617 = vst.msk [vmem:[#allocation2] sm:$0xff] %vm69, %v615
    %v618 = vld [vmem:[#allocation2] sm:$0xff]
    %v619 = vld [vmem:[#allocation4] sm:$0xff]
    %v620 = vld [vmem:[%s2] sm:$0xff]
    %v621 = vld [vmem:[%s2 + $0x8] sm:$0xff]
    %v622 = vld [vmem:[%s2 + $0x10] sm:$0xff]
    %v623 = vld [vmem:[%s2 + $0x18] sm:$0xff]
    %v624 = vld [vmem:[%s2 + $0x20] sm:$0xff]
    %v625 = vld [vmem:[%s2 + $0x28] sm:$0xff]
    %v626 = vld [vmem:[%s2 + $0x30] sm:$0xff]
    %v627 = vld [vmem:[%s2 + $0x38] sm:$0xff]
    %v629 = vsel %vm45, %v618, 0
    %631 = vmatprep.subr.mxu0 0.0
    %632 = vmatpush1.msra.mxu0 0.0
    %633 = vmatprep.subr.mxu0 0.0
    %634 = vmatpush1.msra.mxu0 0.0
    %635 = vmatprep.subr.mxu0 0.0
    %636 = vmatpush1.msra.mxu0 0.0
    %637 = vmatprep.subr.mxu0 0.0
    %638 = vmatpush1.msra.mxu0 0.0
    %639 = vmatprep.subr.mxu0 0.0
    %640 = vmatpush1.msra.mxu0 0.0
    %641 = vmatprep.subr.mxu0 0.0
    %642 = vmatpush1.msra.mxu0 0.0
    %643 = vmatprep.subr.mxu0 0.0
    %644 = vmatpush1.msra.mxu0 0.0
    %645 = vmatprep.subr.mxu0 0.0
    %646 = vmatpush1.msra.mxu0 0.0
    %647 = vmatprep.subr.mxu0 0.0
    %648 = vmatpush1.msra.mxu0 %v627
    %649 = vmatprep.subr.mxu0 0.0
    %650 = vmatpush1.msra.mxu0 %v626
    %651 = vmatprep.subr.mxu0 0.0
    %652 = vmatpush1.msra.mxu0 %v625
    %653 = vmatprep.subr.mxu0 0.0
    %654 = vmatpush1.msra.mxu0 %v624
    %655 = vmatprep.subr.mxu0 0.0
    %656 = vmatpush1.msra.mxu0 %v623
    %657 = vmatprep.subr.mxu0 0.0
    %658 = vmatpush1.msra.mxu0 %v622
    %659 = vmatprep.subr.mxu0 0.0
    %660 = vmatpush1.msra.mxu0 %v621
    %661 = vmatprep.subr.mxu0 0.0
    %662 = vmatpush1.msra.mxu0 %v620
    %663 = vmatprep.subr.mxu0 0.0
    %664 = vmatpush2.msra.mxu0 0.0
    %665 = vmatprep.subr.mxu0 0.0
    %666 = vmatpush2.msra.mxu0 0.0
    %667 = vmatprep.subr.mxu0 0.0
    %668 = vmatpush2.msra.mxu0 0.0
    %669 = vmatprep.subr.mxu0 0.0
    %670 = vmatpush2.msra.mxu0 0.0
    %671 = vmatprep.subr.mxu0 0.0
    %672 = vmatpush2.msra.mxu0 0.0
    %673 = vmatprep.subr.mxu0 0.0
    %674 = vmatpush2.msra.mxu0 0.0
    %675 = vmatprep.subr.mxu0 0.0
    %676 = vmatpush2.msra.mxu0 0.0
    %677 = vmatprep.subr.mxu0 0.0
    %678 = vmatpush2.msra.mxu0 0.0
    %679 = vmatprep.subr.mxu0 0.0
    %680 = vmatpush2.msra.mxu0 0.0
    %681 = vmatprep.subr.mxu0 0.0
    %682 = vmatpush2.msra.mxu0 0.0
    %683 = vmatprep.subr.mxu0 0.0
    %684 = vmatpush2.msra.mxu0 0.0
    %685 = vmatprep.subr.mxu0 0.0
    %686 = vmatpush2.msra.mxu0 0.0
    %687 = vmatprep.subr.mxu0 0.0
    %688 = vmatpush2.msra.mxu0 0.0
    %689 = vmatprep.subr.mxu0 0.0
    %690 = vmatpush2.msra.mxu0 0.0
    %691 = vmatprep.subr.mxu0 0.0
    %692 = vmatpush2.msra.mxu0 0.0
    %693 = vmatprep.subr.mxu0 0.0
    %694 = vmatpush2.msra.mxu0 0.0
    %695 = vmatprep.mubr.f32.mxu0 0.0
    %696 = vmatmul.mubr.f32.gmra.mxu0 %v629
    %v697 = vpop.f32.mrf.mxu0
    %v698 = vadd.f32 %v85, %v697
    %v699 = vpop.f32.mrf.mxu0
    %700 = vdwg.mxu0
    %v701 = vtanh.pop %v698
    %v702 = vxor.u32 %v698, 2147483648
    %v703 = vmul.f32 %v702, 1.442695
    %v704 = vpow.pop %v703
    %v705 = vadd.f32 %v704, 1.0
    %v706 = vrcp.pop %v705
    %v707 = vmul.f32 1.0, %v706
    %v708 = vsel %vm164, %v701, %v707
    %710 = vrot.lane.b32.xlu0 %v619, 32
    %v711 = vpop.permute.xlu0 %710
    %v713 = vmul.f32 %v708, %v711
    %715 = vrot.lane.b32.xlu0 %v708, 64
    %v716 = vpop.permute.xlu0 %715
    %v718 = vmul.f32 %v708, %v716
    %720 = vrot.lane.b32.xlu0 %v718, 32
    %v721 = vpop.permute.xlu0 %720
    %v723 = vadd.f32 %v713, %v721
    %v724 = vtanh.pop %v723
    %726 = vrot.lane.b32.xlu0 %v724, 64
    %v727 = vpop.permute.xlu0 %726
    %v729 = vmul.f32 %v708, %v727
    %731 = vrot.lane.b32.xlu0 %v729, 32
    %v732 = vpop.permute.xlu0 %731
    %734 = vst.msk [vmem:[#allocation3] sm:$0xff] %vm47, %v732
    %736 = vrot.lane.b32.xlu0 %v723, 96
    %v737 = vpop.permute.xlu0 %736
    %739 = vst.msk [vmem:[#allocation4] sm:$0xff] %vm47, %v737
    %740 = vst.msk [vmem:[#allocation5] sm:$0xff] %vm47, %v732
    %v741 = vld [vmem:[#allocation6] sm:$0xff]
    %743 = vrot.lane.b32.xlu0 %v741, 32
    %v744 = vpop.permute.xlu0 %743
    %746 = vst.msk [vmem:[#allocation5] sm:$0xff] %vm69, %v744
    %v747 = vld [vmem:[#allocation5] sm:$0xff]
    %v748 = vld [vmem:[#allocation7] sm:$0xff]
    %v749 = vld [vmem:[#allocation10] sm:$0xff]
    %v750 = vld [vmem:[#allocation10 + $0x8] sm:$0xff]
    %v751 = vld [vmem:[#allocation10 + $0x10] sm:$0xff]
    %v752 = vld [vmem:[#allocation10 + $0x18] sm:$0xff]
    %v753 = vld [vmem:[#allocation10 + $0x20] sm:$0xff]
    %v754 = vld [vmem:[#allocation10 + $0x28] sm:$0xff]
    %v755 = vld [vmem:[#allocation10 + $0x30] sm:$0xff]
    %v756 = vld [vmem:[#allocation10 + $0x38] sm:$0xff]
    %v758 = vsel %vm45, %v747, 0
    %760 = vmatprep.subr.mxu0 0.0
    %761 = vmatpush1.msra.mxu0 0.0
    %762 = vmatprep.subr.mxu0 0.0
    %763 = vmatpush1.msra.mxu0 0.0
    %764 = vmatprep.subr.mxu0 0.0
    %765 = vmatpush1.msra.mxu0 0.0
    %766 = vmatprep.subr.mxu0 0.0
    %767 = vmatpush1.msra.mxu0 0.0
    %768 = vmatprep.subr.mxu0 0.0
    %769 = vmatpush1.msra.mxu0 0.0
    %770 = vmatprep.subr.mxu0 0.0
    %771 = vmatpush1.msra.mxu0 0.0
    %772 = vmatprep.subr.mxu0 0.0
    %773 = vmatpush1.msra.mxu0 0.0
    %774 = vmatprep.subr.mxu0 0.0
    %775 = vmatpush1.msra.mxu0 0.0
    %776 = vmatprep.subr.mxu0 0.0
    %777 = vmatpush1.msra.mxu0 %v756
    %778 = vmatprep.subr.mxu0 0.0
    %779 = vmatpush1.msra.mxu0 %v755
    %780 = vmatprep.subr.mxu0 0.0
    %781 = vmatpush1.msra.mxu0 %v754
    %782 = vmatprep.subr.mxu0 0.0
    %783 = vmatpush1.msra.mxu0 %v753
    %784 = vmatprep.subr.mxu0 0.0
    %785 = vmatpush1.msra.mxu0 %v752
    %786 = vmatprep.subr.mxu0 0.0
    %787 = vmatpush1.msra.mxu0 %v751
    %788 = vmatprep.subr.mxu0 0.0
    %789 = vmatpush1.msra.mxu0 %v750
    %790 = vmatprep.subr.mxu0 0.0
    %791 = vmatpush1.msra.mxu0 %v749
    %792 = vmatprep.subr.mxu0 0.0
    %793 = vmatpush2.msra.mxu0 0.0
    %794 = vmatprep.subr.mxu0 0.0
    %795 = vmatpush2.msra.mxu0 0.0
    %796 = vmatprep.subr.mxu0 0.0
    %797 = vmatpush2.msra.mxu0 0.0
    %798 = vmatprep.subr.mxu0 0.0
    %799 = vmatpush2.msra.mxu0 0.0
    %800 = vmatprep.subr.mxu0 0.0
    %801 = vmatpush2.msra.mxu0 0.0
    %802 = vmatprep.subr.mxu0 0.0
    %803 = vmatpush2.msra.mxu0 0.0
    %804 = vmatprep.subr.mxu0 0.0
    %805 = vmatpush2.msra.mxu0 0.0
    %806 = vmatprep.subr.mxu0 0.0
    %807 = vmatpush2.msra.mxu0 0.0
    %808 = vmatprep.subr.mxu0 0.0
    %809 = vmatpush2.msra.mxu0 0.0
    %810 = vmatprep.subr.mxu0 0.0
    %811 = vmatpush2.msra.mxu0 0.0
    %812 = vmatprep.subr.mxu0 0.0
    %813 = vmatpush2.msra.mxu0 0.0
    %814 = vmatprep.subr.mxu0 0.0
    %815 = vmatpush2.msra.mxu0 0.0
    %816 = vmatprep.subr.mxu0 0.0
    %817 = vmatpush2.msra.mxu0 0.0
    %818 = vmatprep.subr.mxu0 0.0
    %819 = vmatpush2.msra.mxu0 0.0
    %820 = vmatprep.subr.mxu0 0.0
    %821 = vmatpush2.msra.mxu0 0.0
    %822 = vmatprep.subr.mxu0 0.0
    %823 = vmatpush2.msra.mxu0 0.0
    %824 = vmatprep.mubr.f32.mxu0 0.0
    %825 = vmatmul.mubr.f32.gmra.mxu0 %v758
    %v826 = vpop.f32.mrf.mxu0
    %v827 = vadd.f32 %v225, %v826
    %v828 = vpop.f32.mrf.mxu0
    %829 = vdwg.mxu0
    %v830 = vtanh.pop %v827
    %v831 = vxor.u32 %v827, 2147483648
    %v832 = vmul.f32 %v831, 1.442695
    %v833 = vpow.pop %v832
    %v834 = vadd.f32 %v833, 1.0
    %v835 = vrcp.pop %v834
    %v836 = vmul.f32 1.0, %v835
    %v837 = vsel %vm164, %v830, %v836
    %839 = vrot.lane.b32.xlu0 %v748, 32
    %v840 = vpop.permute.xlu0 %839
    %v842 = vmul.f32 %v837, %v840
    %844 = vrot.lane.b32.xlu0 %v837, 64
    %v845 = vpop.permute.xlu0 %844
    %v847 = vmul.f32 %v837, %v845
    %849 = vrot.lane.b32.xlu0 %v847, 32
    %v850 = vpop.permute.xlu0 %849
    %v852 = vadd.f32 %v842, %v850
    %v853 = vtanh.pop %v852
    %855 = vrot.lane.b32.xlu0 %v853, 64
    %v856 = vpop.permute.xlu0 %855
    %v858 = vmul.f32 %v837, %v856
    %860 = vrot.lane.b32.xlu0 %v858, 32
    %v861 = vpop.permute.xlu0 %860
    %863 = vst.msk [vmem:[#allocation6] sm:$0xff] %vm47, %v861
    %865 = vrot.lane.b32.xlu0 %v852, 96
    %v866 = vpop.permute.xlu0 %865
    %868 = vst.msk [vmem:[#allocation7] sm:$0xff] %vm47, %v866
    %s869 = sld [smem:[#allocation9 + $0x180]]
    %s870 = scalar_lea.vmem %s1, %s869
    %v871 = vld [vmem:[%s870] sm:$0x1]
    %872 = vst.msk [vmem:[#allocation2] sm:$0x1] %vm58, %v871
    %s873 = sld [smem:[#allocation9 + $0x181]]
    %s874 = scalar_lea.vmem %s1, %s873
    %v875 = vld [vmem:[%s874] sm:$0x1]
    %876 = vst.msk [vmem:[#allocation2 + $0x1] sm:$0x1] %vm58, %v875
    %v877 = vld [vmem:[#allocation3] sm:$0xff]
    %879 = vrot.lane.b32.xlu0 %v877, 32
    %v880 = vpop.permute.xlu0 %879
    %882 = vst.msk [vmem:[#allocation2] sm:$0xff] %vm69, %v880
    %v883 = vld [vmem:[#allocation2] sm:$0xff]
    %v884 = vld [vmem:[#allocation4] sm:$0xff]
    %v885 = vld [vmem:[%s2] sm:$0xff]
    %v886 = vld [vmem:[%s2 + $0x8] sm:$0xff]
    %v887 = vld [vmem:[%s2 + $0x10] sm:$0xff]
    %v888 = vld [vmem:[%s2 + $0x18] sm:$0xff]
    %v889 = vld [vmem:[%s2 + $0x20] sm:$0xff]
    %v890 = vld [vmem:[%s2 + $0x28] sm:$0xff]
    %v891 = vld [vmem:[%s2 + $0x30] sm:$0xff]
    %v892 = vld [vmem:[%s2 + $0x38] sm:$0xff]
    %v894 = vsel %vm45, %v883, 0
    %896 = vmatprep.subr.mxu0 0.0
    %897 = vmatpush1.msra.mxu0 0.0
    %898 = vmatprep.subr.mxu0 0.0
    %899 = vmatpush1.msra.mxu0 0.0
    %900 = vmatprep.subr.mxu0 0.0
    %901 = vmatpush1.msra.mxu0 0.0
    %902 = vmatprep.subr.mxu0 0.0
    %903 = vmatpush1.msra.mxu0 0.0
    %904 = vmatprep.subr.mxu0 0.0
    %905 = vmatpush1.msra.mxu0 0.0
    %906 = vmatprep.subr.mxu0 0.0
    %907 = vmatpush1.msra.mxu0 0.0
    %908 = vmatprep.subr.mxu0 0.0
    %909 = vmatpush1.msra.mxu0 0.0
    %910 = vmatprep.subr.mxu0 0.0
    %911 = vmatpush1.msra.mxu0 0.0
    %912 = vmatprep.subr.mxu0 0.0
    %913 = vmatpush1.msra.mxu0 %v892
    %914 = vmatprep.subr.mxu0 0.0
    %915 = vmatpush1.msra.mxu0 %v891
    %916 = vmatprep.subr.mxu0 0.0
    %917 = vmatpush1.msra.mxu0 %v890
    %918 = vmatprep.subr.mxu0 0.0
    %919 = vmatpush1.msra.mxu0 %v889
    %920 = vmatprep.subr.mxu0 0.0
    %921 = vmatpush1.msra.mxu0 %v888
    %922 = vmatprep.subr.mxu0 0.0
    %923 = vmatpush1.msra.mxu0 %v887
    %924 = vmatprep.subr.mxu0 0.0
    %925 = vmatpush1.msra.mxu0 %v886
    %926 = vmatprep.subr.mxu0 0.0
    %927 = vmatpush1.msra.mxu0 %v885
    %928 = vmatprep.subr.mxu0 0.0
    %929 = vmatpush2.msra.mxu0 0.0
    %930 = vmatprep.subr.mxu0 0.0
    %931 = vmatpush2.msra.mxu0 0.0
    %932 = vmatprep.subr.mxu0 0.0
    %933 = vmatpush2.msra.mxu0 0.0
    %934 = vmatprep.subr.mxu0 0.0
    %935 = vmatpush2.msra.mxu0 0.0
    %936 = vmatprep.subr.mxu0 0.0
    %937 = vmatpush2.msra.mxu0 0.0
    %938 = vmatprep.subr.mxu0 0.0
    %939 = vmatpush2.msra.mxu0 0.0
    %940 = vmatprep.subr.mxu0 0.0
    %941 = vmatpush2.msra.mxu0 0.0
    %942 = vmatprep.subr.mxu0 0.0
    %943 = vmatpush2.msra.mxu0 0.0
    %944 = vmatprep.subr.mxu0 0.0
    %945 = vmatpush2.msra.mxu0 0.0
    %946 = vmatprep.subr.mxu0 0.0
    %947 = vmatpush2.msra.mxu0 0.0
    %948 = vmatprep.subr.mxu0 0.0
    %949 = vmatpush2.msra.mxu0 0.0
    %950 = vmatprep.subr.mxu0 0.0
    %951 = vmatpush2.msra.mxu0 0.0
    %952 = vmatprep.subr.mxu0 0.0
    %953 = vmatpush2.msra.mxu0 0.0
    %954 = vmatprep.subr.mxu0 0.0
    %955 = vmatpush2.msra.mxu0 0.0
    %956 = vmatprep.subr.mxu0 0.0
    %957 = vmatpush2.msra.mxu0 0.0
    %958 = vmatprep.subr.mxu0 0.0
    %959 = vmatpush2.msra.mxu0 0.0
    %960 = vmatprep.mubr.f32.mxu0 0.0
    %961 = vmatmul.mubr.f32.gmra.mxu0 %v894
    %v962 = vpop.f32.mrf.mxu0
    %v963 = vadd.f32 %v85, %v962
    %v964 = vpop.f32.mrf.mxu0
    %965 = vdwg.mxu0
    %v966 = vtanh.pop %v963
    %v967 = vxor.u32 %v963, 2147483648
    %v968 = vmul.f32 %v967, 1.442695
    %v969 = vpow.pop %v968
    %v970 = vadd.f32 %v969, 1.0
    %v971 = vrcp.pop %v970
    %v972 = vmul.f32 1.0, %v971
    %v973 = vsel %vm164, %v966, %v972
    %975 = vrot.lane.b32.xlu0 %v884, 32
    %v976 = vpop.permute.xlu0 %975
    %v978 = vmul.f32 %v973, %v976
    %980 = vrot.lane.b32.xlu0 %v973, 64
    %v981 = vpop.permute.xlu0 %980
    %v983 = vmul.f32 %v973, %v981
    %985 = vrot.lane.b32.xlu0 %v983, 32
    %v986 = vpop.permute.xlu0 %985
    %v988 = vadd.f32 %v978, %v986
    %v989 = vtanh.pop %v988
    %991 = vrot.lane.b32.xlu0 %v989, 64
    %v992 = vpop.permute.xlu0 %991
    %v994 = vmul.f32 %v973, %v992
    %996 = vrot.lane.b32.xlu0 %v994, 32
    %v997 = vpop.permute.xlu0 %996
    %999 = vst.msk [vmem:[#allocation3] sm:$0xff] %vm47, %v997
    %1001 = vrot.lane.b32.xlu0 %v988, 96
    %v1002 = vpop.permute.xlu0 %1001
    %1004 = vst.msk [vmem:[#allocation4] sm:$0xff] %vm47, %v1002
    %1005 = vst.msk [vmem:[#allocation5] sm:$0xff] %vm47, %v997
    %v1006 = vld [vmem:[#allocation6] sm:$0xff]
    %1008 = vrot.lane.b32.xlu0 %v1006, 32
    %v1009 = vpop.permute.xlu0 %1008
    %1011 = vst.msk [vmem:[#allocation5] sm:$0xff] %vm69, %v1009
    %v1012 = vld [vmem:[#allocation5] sm:$0xff]
    %v1013 = vld [vmem:[#allocation7] sm:$0xff]
    %v1014 = vld [vmem:[#allocation10] sm:$0xff]
    %v1015 = vld [vmem:[#allocation10 + $0x8] sm:$0xff]
    %v1016 = vld [vmem:[#allocation10 + $0x10] sm:$0xff]
    %v1017 = vld [vmem:[#allocation10 + $0x18] sm:$0xff]
    %v1018 = vld [vmem:[#allocation10 + $0x20] sm:$0xff]
    %v1019 = vld [vmem:[#allocation10 + $0x28] sm:$0xff]
    %v1020 = vld [vmem:[#allocation10 + $0x30] sm:$0xff]
    %v1021 = vld [vmem:[#allocation10 + $0x38] sm:$0xff]
    %v1023 = vsel %vm45, %v1012, 0
    %1025 = vmatprep.subr.mxu0 0.0
    %1026 = vmatpush1.msra.mxu0 0.0
    %1027 = vmatprep.subr.mxu0 0.0
    %1028 = vmatpush1.msra.mxu0 0.0
    %1029 = vmatprep.subr.mxu0 0.0
    %1030 = vmatpush1.msra.mxu0 0.0
    %1031 = vmatprep.subr.mxu0 0.0
    %1032 = vmatpush1.msra.mxu0 0.0
    %1033 = vmatprep.subr.mxu0 0.0
    %1034 = vmatpush1.msra.mxu0 0.0
    %1035 = vmatprep.subr.mxu0 0.0
    %1036 = vmatpush1.msra.mxu0 0.0
    %1037 = vmatprep.subr.mxu0 0.0
    %1038 = vmatpush1.msra.mxu0 0.0
    %1039 = vmatprep.subr.mxu0 0.0
    %1040 = vmatpush1.msra.mxu0 0.0
    %1041 = vmatprep.subr.mxu0 0.0
    %1042 = vmatpush1.msra.mxu0 %v1021
    %1043 = vmatprep.subr.mxu0 0.0
    %1044 = vmatpush1.msra.mxu0 %v1020
    %1045 = vmatprep.subr.mxu0 0.0
    %1046 = vmatpush1.msra.mxu0 %v1019
    %1047 = vmatprep.subr.mxu0 0.0
    %1048 = vmatpush1.msra.mxu0 %v1018
    %1049 = vmatprep.subr.mxu0 0.0
    %1050 = vmatpush1.msra.mxu0 %v1017
    %1051 = vmatprep.subr.mxu0 0.0
    %1052 = vmatpush1.msra.mxu0 %v1016
    %1053 = vmatprep.subr.mxu0 0.0
    %1054 = vmatpush1.msra.mxu0 %v1015
    %1055 = vmatprep.subr.mxu0 0.0
    %1056 = vmatpush1.msra.mxu0 %v1014
    %1057 = vmatprep.subr.mxu0 0.0
    %1058 = vmatpush2.msra.mxu0 0.0
    %1059 = vmatprep.subr.mxu0 0.0
    %1060 = vmatpush2.msra.mxu0 0.0
    %1061 = vmatprep.subr.mxu0 0.0
    %1062 = vmatpush2.msra.mxu0 0.0
    %1063 = vmatprep.subr.mxu0 0.0
    %1064 = vmatpush2.msra.mxu0 0.0
    %1065 = vmatprep.subr.mxu0 0.0
    %1066 = vmatpush2.msra.mxu0 0.0
    %1067 = vmatprep.subr.mxu0 0.0
    %1068 = vmatpush2.msra.mxu0 0.0
    %1069 = vmatprep.subr.mxu0 0.0
    %1070 = vmatpush2.msra.mxu0 0.0
    %1071 = vmatprep.subr.mxu0 0.0
    %1072 = vmatpush2.msra.mxu0 0.0
    %1073 = vmatprep.subr.mxu0 0.0
    %1074 = vmatpush2.msra.mxu0 0.0
    %1075 = vmatprep.subr.mxu0 0.0
    %1076 = vmatpush2.msra.mxu0 0.0
    %1077 = vmatprep.subr.mxu0 0.0
    %1078 = vmatpush2.msra.mxu0 0.0
    %1079 = vmatprep.subr.mxu0 0.0
    %1080 = vmatpush2.msra.mxu0 0.0
    %1081 = vmatprep.subr.mxu0 0.0
    %1082 = vmatpush2.msra.mxu0 0.0
    %1083 = vmatprep.subr.mxu0 0.0
    %1084 = vmatpush2.msra.mxu0 0.0
    %1085 = vmatprep.subr.mxu0 0.0
    %1086 = vmatpush2.msra.mxu0 0.0
    %1087 = vmatprep.subr.mxu0 0.0
    %1088 = vmatpush2.msra.mxu0 0.0
    %1089 = vmatprep.mubr.f32.mxu0 0.0
    %1090 = vmatmul.mubr.f32.gmra.mxu0 %v1023
    %v1091 = vpop.f32.mrf.mxu0
    %v1092 = vadd.f32 %v225, %v1091
    %v1093 = vpop.f32.mrf.mxu0
    %1094 = vdwg.mxu0
    %v1095 = vtanh.pop %v1092
    %v1096 = vxor.u32 %v1092, 2147483648
    %v1097 = vmul.f32 %v1096, 1.442695
    %v1098 = vpow.pop %v1097
    %v1099 = vadd.f32 %v1098, 1.0
    %v1100 = vrcp.pop %v1099
    %v1101 = vmul.f32 1.0, %v1100
    %v1102 = vsel %vm164, %v1095, %v1101
    %1104 = vrot.lane.b32.xlu0 %v1013, 32
    %v1105 = vpop.permute.xlu0 %1104
    %v1107 = vmul.f32 %v1102, %v1105
    %1109 = vrot.lane.b32.xlu0 %v1102, 64
    %v1110 = vpop.permute.xlu0 %1109
    %v1112 = vmul.f32 %v1102, %v1110
    %1114 = vrot.lane.b32.xlu0 %v1112, 32
    %v1115 = vpop.permute.xlu0 %1114
    %v1117 = vadd.f32 %v1107, %v1115
    %v1118 = vtanh.pop %v1117
    %1120 = vrot.lane.b32.xlu0 %v1118, 64
    %v1121 = vpop.permute.xlu0 %1120
    %v1123 = vmul.f32 %v1102, %v1121
    %1125 = vrot.lane.b32.xlu0 %v1123, 32
    %v1126 = vpop.permute.xlu0 %1125
    %1128 = vst.msk [vmem:[#allocation6] sm:$0xff] %vm47, %v1126
    %1130 = vrot.lane.b32.xlu0 %v1117, 96
    %v1131 = vpop.permute.xlu0 %1130
    %1133 = vst.msk [vmem:[#allocation7] sm:$0xff] %vm47, %v1131
    %s1134 = sld [smem:[#allocation9 + $0x200]]
    %s1135 = scalar_lea.vmem %s1, %s1134
    %v1136 = vld [vmem:[%s1135] sm:$0x1]
    %1137 = vst.msk [vmem:[#allocation2] sm:$0x1] %vm58, %v1136
    %s1138 = sld [smem:[#allocation9 + $0x201]]
    %s1139 = scalar_lea.vmem %s1, %s1138
    %v1140 = vld [vmem:[%s1139] sm:$0x1]
    %1141 = vst.msk [vmem:[#allocation2 + $0x1] sm:$0x1] %vm58, %v1140
    %v1142 = vld [vmem:[#allocation3] sm:$0xff]
    %1144 = vrot.lane.b32.xlu0 %v1142, 32
    %v1145 = vpop.permute.xlu0 %1144
    %1147 = vst.msk [vmem:[#allocation2] sm:$0xff] %vm69, %v1145
    %v1148 = vld [vmem:[#allocation2] sm:$0xff]
    %v1149 = vld [vmem:[#allocation4] sm:$0xff]
    %v1150 = vld [vmem:[%s2] sm:$0xff]
    %v1151 = vld [vmem:[%s2 + $0x8] sm:$0xff]
    %v1152 = vld [vmem:[%s2 + $0x10] sm:$0xff]
    %v1153 = vld [vmem:[%s2 + $0x18] sm:$0xff]
    %v1154 = vld [vmem:[%s2 + $0x20] sm:$0xff]
    %v1155 = vld [vmem:[%s2 + $0x28] sm:$0xff]
    %v1156 = vld [vmem:[%s2 + $0x30] sm:$0xff]
    %v1157 = vld [vmem:[%s2 + $0x38] sm:$0xff]
    %v1159 = vsel %vm45, %v1148, 0
    %1161 = vmatprep.subr.mxu0 0.0
    %1162 = vmatpush1.msra.mxu0 0.0
    %1163 = vmatprep.subr.mxu0 0.0
    %1164 = vmatpush1.msra.mxu0 0.0
    %1165 = vmatprep.subr.mxu0 0.0
    %1166 = vmatpush1.msra.mxu0 0.0
    %1167 = vmatprep.subr.mxu0 0.0
    %1168 = vmatpush1.msra.mxu0 0.0
    %1169 = vmatprep.subr.mxu0 0.0
    %1170 = vmatpush1.msra.mxu0 0.0
    %1171 = vmatprep.subr.mxu0 0.0
    %1172 = vmatpush1.msra.mxu0 0.0
    %1173 = vmatprep.subr.mxu0 0.0
    %1174 = vmatpush1.msra.mxu0 0.0
    %1175 = vmatprep.subr.mxu0 0.0
    %1176 = vmatpush1.msra.mxu0 0.0
    %1177 = vmatprep.subr.mxu0 0.0
    %1178 = vmatpush1.msra.mxu0 %v1157
    %1179 = vmatprep.subr.mxu0 0.0
    %1180 = vmatpush1.msra.mxu0 %v1156
    %1181 = vmatprep.subr.mxu0 0.0
    %1182 = vmatpush1.msra.mxu0 %v1155
    %1183 = vmatprep.subr.mxu0 0.0
    %1184 = vmatpush1.msra.mxu0 %v1154
    %1185 = vmatprep.subr.mxu0 0.0
    %1186 = vmatpush1.msra.mxu0 %v1153
    %1187 = vmatprep.subr.mxu0 0.0
    %1188 = vmatpush1.msra.mxu0 %v1152
    %1189 = vmatprep.subr.mxu0 0.0
    %1190 = vmatpush1.msra.mxu0 %v1151
    %1191 = vmatprep.subr.mxu0 0.0
    %1192 = vmatpush1.msra.mxu0 %v1150
    %1193 = vmatprep.subr.mxu0 0.0
    %1194 = vmatpush2.msra.mxu0 0.0
    %1195 = vmatprep.subr.mxu0 0.0
    %1196 = vmatpush2.msra.mxu0 0.0
    %1197 = vmatprep.subr.mxu0 0.0
    %1198 = vmatpush2.msra.mxu0 0.0
    %1199 = vmatprep.subr.mxu0 0.0
    %1200 = vmatpush2.msra.mxu0 0.0
    %1201 = vmatprep.subr.mxu0 0.0
    %1202 = vmatpush2.msra.mxu0 0.0
    %1203 = vmatprep.subr.mxu0 0.0
    %1204 = vmatpush2.msra.mxu0 0.0
    %1205 = vmatprep.subr.mxu0 0.0
    %1206 = vmatpush2.msra.mxu0 0.0
    %1207 = vmatprep.subr.mxu0 0.0
    %1208 = vmatpush2.msra.mxu0 0.0
    %1209 = vmatprep.subr.mxu0 0.0
    %1210 = vmatpush2.msra.mxu0 0.0
    %1211 = vmatprep.subr.mxu0 0.0
    %1212 = vmatpush2.msra.mxu0 0.0
    %1213 = vmatprep.subr.mxu0 0.0
    %1214 = vmatpush2.msra.mxu0 0.0
    %1215 = vmatprep.subr.mxu0 0.0
    %1216 = vmatpush2.msra.mxu0 0.0
    %1217 = vmatprep.subr.mxu0 0.0
    %1218 = vmatpush2.msra.mxu0 0.0
    %1219 = vmatprep.subr.mxu0 0.0
    %1220 = vmatpush2.msra.mxu0 0.0
    %1221 = vmatprep.subr.mxu0 0.0
    %1222 = vmatpush2.msra.mxu0 0.0
    %1223 = vmatprep.subr.mxu0 0.0
    %1224 = vmatpush2.msra.mxu0 0.0
    %1225 = vmatprep.mubr.f32.mxu0 0.0
    %1226 = vmatmul.mubr.f32.gmra.mxu0 %v1159
    %v1227 = vpop.f32.mrf.mxu0
    %v1228 = vadd.f32 %v85, %v1227
    %v1229 = vpop.f32.mrf.mxu0
    %1230 = vdwg.mxu0
    %v1231 = vtanh.pop %v1228
    %v1232 = vxor.u32 %v1228, 2147483648
    %v1233 = vmul.f32 %v1232, 1.442695
    %v1234 = vpow.pop %v1233
    %v1235 = vadd.f32 %v1234, 1.0
    %v1236 = vrcp.pop %v1235
    %v1237 = vmul.f32 1.0, %v1236
    %v1238 = vsel %vm164, %v1231, %v1237
    %1240 = vrot.lane.b32.xlu0 %v1149, 32
    %v1241 = vpop.permute.xlu0 %1240
    %v1243 = vmul.f32 %v1238, %v1241
    %1245 = vrot.lane.b32.xlu0 %v1238, 64
    %v1246 = vpop.permute.xlu0 %1245
    %v1248 = vmul.f32 %v1238, %v1246
    %1250 = vrot.lane.b32.xlu0 %v1248, 32
    %v1251 = vpop.permute.xlu0 %1250
    %v1253 = vadd.f32 %v1243, %v1251
    %v1254 = vtanh.pop %v1253
    %1256 = vrot.lane.b32.xlu0 %v1254, 64
    %v1257 = vpop.permute.xlu0 %1256
    %v1259 = vmul.f32 %v1238, %v1257
    %1261 = vrot.lane.b32.xlu0 %v1259, 32
    %v1262 = vpop.permute.xlu0 %1261
    %1264 = vst.msk [vmem:[#allocation3] sm:$0xff] %vm47, %v1262
    %1266 = vrot.lane.b32.xlu0 %v1253, 96
    %v1267 = vpop.permute.xlu0 %1266
    %1269 = vst.msk [vmem:[#allocation4] sm:$0xff] %vm47, %v1267
    %1270 = vst.msk [vmem:[#allocation5] sm:$0xff] %vm47, %v1262
    %v1271 = vld [vmem:[#allocation6] sm:$0xff]
    %1273 = vrot.lane.b32.xlu0 %v1271, 32
    %v1274 = vpop.permute.xlu0 %1273
    %1276 = vst.msk [vmem:[#allocation5] sm:$0xff] %vm69, %v1274
    %v1277 = vld [vmem:[#allocation5] sm:$0xff]
    %v1278 = vld [vmem:[#allocation7] sm:$0xff]
    %v1279 = vld [vmem:[#allocation10] sm:$0xff]
    %v1280 = vld [vmem:[#allocation10 + $0x8] sm:$0xff]
    %v1281 = vld [vmem:[#allocation10 + $0x10] sm:$0xff]
    %v1282 = vld [vmem:[#allocation10 + $0x18] sm:$0xff]
    %v1283 = vld [vmem:[#allocation10 + $0x20] sm:$0xff]
    %v1284 = vld [vmem:[#allocation10 + $0x28] sm:$0xff]
    %v1285 = vld [vmem:[#allocation10 + $0x30] sm:$0xff]
    %v1286 = vld [vmem:[#allocation10 + $0x38] sm:$0xff]
    %v1288 = vsel %vm45, %v1277, 0
    %1290 = vmatprep.subr.mxu0 0.0
    %1291 = vmatpush1.msra.mxu0 0.0
    %1292 = vmatprep.subr.mxu0 0.0
    %1293 = vmatpush1.msra.mxu0 0.0
    %1294 = vmatprep.subr.mxu0 0.0
    %1295 = vmatpush1.msra.mxu0 0.0
    %1296 = vmatprep.subr.mxu0 0.0
    %1297 = vmatpush1.msra.mxu0 0.0
    %1298 = vmatprep.subr.mxu0 0.0
    %1299 = vmatpush1.msra.mxu0 0.0
    %1300 = vmatprep.subr.mxu0 0.0
    %1301 = vmatpush1.msra.mxu0 0.0
    %1302 = vmatprep.subr.mxu0 0.0
    %1303 = vmatpush1.msra.mxu0 0.0
    %1304 = vmatprep.subr.mxu0 0.0
    %1305 = vmatpush1.msra.mxu0 0.0
    %1306 = vmatprep.subr.mxu0 0.0
    %1307 = vmatpush1.msra.mxu0 %v1286
    %1308 = vmatprep.subr.mxu0 0.0
    %1309 = vmatpush1.msra.mxu0 %v1285
    %1310 = vmatprep.subr.mxu0 0.0
    %1311 = vmatpush1.msra.mxu0 %v1284
    %1312 = vmatprep.subr.mxu0 0.0
    %1313 = vmatpush1.msra.mxu0 %v1283
    %1314 = vmatprep.subr.mxu0 0.0
    %1315 = vmatpush1.msra.mxu0 %v1282
    %1316 = vmatprep.subr.mxu0 0.0
    %1317 = vmatpush1.msra.mxu0 %v1281
    %1318 = vmatprep.subr.mxu0 0.0
    %1319 = vmatpush1.msra.mxu0 %v1280
    %1320 = vmatprep.subr.mxu0 0.0
    %1321 = vmatpush1.msra.mxu0 %v1279
    %1322 = vmatprep.subr.mxu0 0.0
    %1323 = vmatpush2.msra.mxu0 0.0
    %1324 = vmatprep.subr.mxu0 0.0
    %1325 = vmatpush2.msra.mxu0 0.0
    %1326 = vmatprep.subr.mxu0 0.0
    %1327 = vmatpush2.msra.mxu0 0.0
    %1328 = vmatprep.subr.mxu0 0.0
    %1329 = vmatpush2.msra.mxu0 0.0
    %1330 = vmatprep.subr.mxu0 0.0
    %1331 = vmatpush2.msra.mxu0 0.0
    %1332 = vmatprep.subr.mxu0 0.0
    %1333 = vmatpush2.msra.mxu0 0.0
    %1334 = vmatprep.subr.mxu0 0.0
    %1335 = vmatpush2.msra.mxu0 0.0
    %1336 = vmatprep.subr.mxu0 0.0
    %1337 = vmatpush2.msra.mxu0 0.0
    %1338 = vmatprep.subr.mxu0 0.0
    %1339 = vmatpush2.msra.mxu0 0.0
    %1340 = vmatprep.subr.mxu0 0.0
    %1341 = vmatpush2.msra.mxu0 0.0
    %1342 = vmatprep.subr.mxu0 0.0
    %1343 = vmatpush2.msra.mxu0 0.0
    %1344 = vmatprep.subr.mxu0 0.0
    %1345 = vmatpush2.msra.mxu0 0.0
    %1346 = vmatprep.subr.mxu0 0.0
    %1347 = vmatpush2.msra.mxu0 0.0
    %1348 = vmatprep.subr.mxu0 0.0
    %1349 = vmatpush2.msra.mxu0 0.0
    %1350 = vmatprep.subr.mxu0 0.0
    %1351 = vmatpush2.msra.mxu0 0.0
    %1352 = vmatprep.subr.mxu0 0.0
    %1353 = vmatpush2.msra.mxu0 0.0
    %1354 = vmatprep.mubr.f32.mxu0 0.0
    %1355 = vmatmul.mubr.f32.gmra.mxu0 %v1288
    %v1356 = vpop.f32.mrf.mxu0
    %v1357 = vadd.f32 %v225, %v1356
    %v1358 = vpop.f32.mrf.mxu0
    %1359 = vdwg.mxu0
    %v1360 = vtanh.pop %v1357
    %v1361 = vxor.u32 %v1357, 2147483648
    %v1362 = vmul.f32 %v1361, 1.442695
    %v1363 = vpow.pop %v1362
    %v1364 = vadd.f32 %v1363, 1.0
    %v1365 = vrcp.pop %v1364
    %v1366 = vmul.f32 1.0, %v1365
    %v1367 = vsel %vm164, %v1360, %v1366
    %1369 = vrot.lane.b32.xlu0 %v1278, 32
    %v1370 = vpop.permute.xlu0 %1369
    %v1372 = vmul.f32 %v1367, %v1370
    %1374 = vrot.lane.b32.xlu0 %v1367, 64
    %v1375 = vpop.permute.xlu0 %1374
    %v1377 = vmul.f32 %v1367, %v1375
    %1379 = vrot.lane.b32.xlu0 %v1377, 32
    %v1380 = vpop.permute.xlu0 %1379
    %v1382 = vadd.f32 %v1372, %v1380
    %v1383 = vtanh.pop %v1382
    %1385 = vrot.lane.b32.xlu0 %v1383, 64
    %v1386 = vpop.permute.xlu0 %1385
    %v1388 = vmul.f32 %v1367, %v1386
    %1390 = vrot.lane.b32.xlu0 %v1388, 32
    %v1391 = vpop.permute.xlu0 %1390
    %1393 = vst.msk [vmem:[#allocation6] sm:$0xff] %vm47, %v1391
    %1395 = vrot.lane.b32.xlu0 %v1382, 96
    %v1396 = vpop.permute.xlu0 %1395
    %1398 = vst.msk [vmem:[#allocation7] sm:$0xff] %vm47, %v1396
    %s1399 = sld [smem:[#allocation9 + $0x280]]
    %s1400 = scalar_lea.vmem %s1, %s1399
    %v1401 = vld [vmem:[%s1400] sm:$0x1]
    %1402 = vst.msk [vmem:[#allocation2] sm:$0x1] %vm58, %v1401
    %s1403 = sld [smem:[#allocation9 + $0x281]]
    %s1404 = scalar_lea.vmem %s1, %s1403
    %v1405 = vld [vmem:[%s1404] sm:$0x1]
    %1406 = vst.msk [vmem:[#allocation2 + $0x1] sm:$0x1] %vm58, %v1405
    %v1407 = vld [vmem:[#allocation3] sm:$0xff]
    %1409 = vrot.lane.b32.xlu0 %v1407, 32
    %v1410 = vpop.permute.xlu0 %1409
    %1412 = vst.msk [vmem:[#allocation2] sm:$0xff] %vm69, %v1410
    %v1413 = vld [vmem:[#allocation2] sm:$0xff]
    %v1414 = vld [vmem:[#allocation4] sm:$0xff]
    %v1415 = vld [vmem:[%s2] sm:$0xff]
    %v1416 = vld [vmem:[%s2 + $0x8] sm:$0xff]
    %v1417 = vld [vmem:[%s2 + $0x10] sm:$0xff]
    %v1418 = vld [vmem:[%s2 + $0x18] sm:$0xff]
    %v1419 = vld [vmem:[%s2 + $0x20] sm:$0xff]
    %v1420 = vld [vmem:[%s2 + $0x28] sm:$0xff]
    %v1421 = vld [vmem:[%s2 + $0x30] sm:$0xff]
    %v1422 = vld [vmem:[%s2 + $0x38] sm:$0xff]
    %v1424 = vsel %vm45, %v1413, 0
    %1426 = vmatprep.subr.mxu0 0.0
    %1427 = vmatpush1.msra.mxu0 0.0
    %1428 = vmatprep.subr.mxu0 0.0
    %1429 = vmatpush1.msra.mxu0 0.0
    %1430 = vmatprep.subr.mxu0 0.0
    %1431 = vmatpush1.msra.mxu0 0.0
    %1432 = vmatprep.subr.mxu0 0.0
    %1433 = vmatpush1.msra.mxu0 0.0
    %1434 = vmatprep.subr.mxu0 0.0
    %1435 = vmatpush1.msra.mxu0 0.0
    %1436 = vmatprep.subr.mxu0 0.0
    %1437 = vmatpush1.msra.mxu0 0.0
    %1438 = vmatprep.subr.mxu0 0.0
    %1439 = vmatpush1.msra.mxu0 0.0
    %1440 = vmatprep.subr.mxu0 0.0
    %1441 = vmatpush1.msra.mxu0 0.0
    %1442 = vmatprep.subr.mxu0 0.0
    %1443 = vmatpush1.msra.mxu0 %v1422
    %1444 = vmatprep.subr.mxu0 0.0
    %1445 = vmatpush1.msra.mxu0 %v1421
    %1446 = vmatprep.subr.mxu0 0.0
    %1447 = vmatpush1.msra.mxu0 %v1420
    %1448 = vmatprep.subr.mxu0 0.0
    %1449 = vmatpush1.msra.mxu0 %v1419
    %1450 = vmatprep.subr.mxu0 0.0
    %1451 = vmatpush1.msra.mxu0 %v1418
    %1452 = vmatprep.subr.mxu0 0.0
    %1453 = vmatpush1.msra.mxu0 %v1417
    %1454 = vmatprep.subr.mxu0 0.0
    %1455 = vmatpush1.msra.mxu0 %v1416
    %1456 = vmatprep.subr.mxu0 0.0
    %1457 = vmatpush1.msra.mxu0 %v1415
    %1458 = vmatprep.subr.mxu0 0.0
    %1459 = vmatpush2.msra.mxu0 0.0
    %1460 = vmatprep.subr.mxu0 0.0
    %1461 = vmatpush2.msra.mxu0 0.0
    %1462 = vmatprep.subr.mxu0 0.0
    %1463 = vmatpush2.msra.mxu0 0.0
    %1464 = vmatprep.subr.mxu0 0.0
    %1465 = vmatpush2.msra.mxu0 0.0
    %1466 = vmatprep.subr.mxu0 0.0
    %1467 = vmatpush2.msra.mxu0 0.0
    %1468 = vmatprep.subr.mxu0 0.0
    %1469 = vmatpush2.msra.mxu0 0.0
    %1470 = vmatprep.subr.mxu0 0.0
    %1471 = vmatpush2.msra.mxu0 0.0
    %1472 = vmatprep.subr.mxu0 0.0
    %1473 = vmatpush2.msra.mxu0 0.0
    %1474 = vmatprep.subr.mxu0 0.0
    %1475 = vmatpush2.msra.mxu0 0.0
    %1476 = vmatprep.subr.mxu0 0.0
    %1477 = vmatpush2.msra.mxu0 0.0
    %1478 = vmatprep.subr.mxu0 0.0
    %1479 = vmatpush2.msra.mxu0 0.0
    %1480 = vmatprep.subr.mxu0 0.0
    %1481 = vmatpush2.msra.mxu0 0.0
    %1482 = vmatprep.subr.mxu0 0.0
    %1483 = vmatpush2.msra.mxu0 0.0
    %1484 = vmatprep.subr.mxu0 0.0
    %1485 = vmatpush2.msra.mxu0 0.0
    %1486 = vmatprep.subr.mxu0 0.0
    %1487 = vmatpush2.msra.mxu0 0.0
    %1488 = vmatprep.subr.mxu0 0.0
    %1489 = vmatpush2.msra.mxu0 0.0
    %1490 = vmatprep.mubr.f32.mxu0 0.0
    %1491 = vmatmul.mubr.f32.gmra.mxu0 %v1424
    %v1492 = vpop.f32.mrf.mxu0
    %v1493 = vadd.f32 %v85, %v1492
    %v1494 = vpop.f32.mrf.mxu0
    %1495 = vdwg.mxu0
    %v1496 = vtanh.pop %v1493
    %v1497 = vxor.u32 %v1493, 2147483648
    %v1498 = vmul.f32 %v1497, 1.442695
    %v1499 = vpow.pop %v1498
    %v1500 = vadd.f32 %v1499, 1.0
    %v1501 = vrcp.pop %v1500
    %v1502 = vmul.f32 1.0, %v1501
    %v1503 = vsel %vm164, %v1496, %v1502
    %1505 = vrot.lane.b32.xlu0 %v1414, 32
    %v1506 = vpop.permute.xlu0 %1505
    %v1508 = vmul.f32 %v1503, %v1506
    %1510 = vrot.lane.b32.xlu0 %v1503, 64
    %v1511 = vpop.permute.xlu0 %1510
    %v1513 = vmul.f32 %v1503, %v1511
    %1515 = vrot.lane.b32.xlu0 %v1513, 32
    %v1516 = vpop.permute.xlu0 %1515
    %v1518 = vadd.f32 %v1508, %v1516
    %v1519 = vtanh.pop %v1518
    %1521 = vrot.lane.b32.xlu0 %v1519, 64
    %v1522 = vpop.permute.xlu0 %1521
    %v1524 = vmul.f32 %v1503, %v1522
    %1526 = vrot.lane.b32.xlu0 %v1524, 32
    %v1527 = vpop.permute.xlu0 %1526
    %1529 = vst.msk [vmem:[#allocation3] sm:$0xff] %vm47, %v1527
    %1531 = vrot.lane.b32.xlu0 %v1518, 96
    %v1532 = vpop.permute.xlu0 %1531
    %1534 = vst.msk [vmem:[#allocation4] sm:$0xff] %vm47, %v1532
    %1535 = vst.msk [vmem:[#allocation5] sm:$0xff] %vm47, %v1527
    %v1536 = vld [vmem:[#allocation6] sm:$0xff]
    %1538 = vrot.lane.b32.xlu0 %v1536, 32
    %v1539 = vpop.permute.xlu0 %1538
    %1541 = vst.msk [vmem:[#allocation5] sm:$0xff] %vm69, %v1539
    %v1542 = vld [vmem:[#allocation5] sm:$0xff]
    %v1543 = vld [vmem:[#allocation7] sm:$0xff]
    %v1544 = vld [vmem:[#allocation10] sm:$0xff]
    %v1545 = vld [vmem:[#allocation10 + $0x8] sm:$0xff]
    %v1546 = vld [vmem:[#allocation10 + $0x10] sm:$0xff]
    %v1547 = vld [vmem:[#allocation10 + $0x18] sm:$0xff]
    %v1548 = vld [vmem:[#allocation10 + $0x20] sm:$0xff]
    %v1549 = vld [vmem:[#allocation10 + $0x28] sm:$0xff]
    %v1550 = vld [vmem:[#allocation10 + $0x30] sm:$0xff]
    %v1551 = vld [vmem:[#allocation10 + $0x38] sm:$0xff]
    %v1553 = vsel %vm45, %v1542, 0
    %1555 = vmatprep.subr.mxu0 0.0
    %1556 = vmatpush1.msra.mxu0 0.0
    %1557 = vmatprep.subr.mxu0 0.0
    %1558 = vmatpush1.msra.mxu0 0.0
    %1559 = vmatprep.subr.mxu0 0.0
    %1560 = vmatpush1.msra.mxu0 0.0
    %1561 = vmatprep.subr.mxu0 0.0
    %1562 = vmatpush1.msra.mxu0 0.0
    %1563 = vmatprep.subr.mxu0 0.0
    %1564 = vmatpush1.msra.mxu0 0.0
    %1565 = vmatprep.subr.mxu0 0.0
    %1566 = vmatpush1.msra.mxu0 0.0
    %1567 = vmatprep.subr.mxu0 0.0
    %1568 = vmatpush1.msra.mxu0 0.0
    %1569 = vmatprep.subr.mxu0 0.0
    %1570 = vmatpush1.msra.mxu0 0.0
    %1571 = vmatprep.subr.mxu0 0.0
    %1572 = vmatpush1.msra.mxu0 %v1551
    %1573 = vmatprep.subr.mxu0 0.0
    %1574 = vmatpush1.msra.mxu0 %v1550
    %1575 = vmatprep.subr.mxu0 0.0
    %1576 = vmatpush1.msra.mxu0 %v1549
    %1577 = vmatprep.subr.mxu0 0.0
    %1578 = vmatpush1.msra.mxu0 %v1548
    %1579 = vmatprep.subr.mxu0 0.0
    %1580 = vmatpush1.msra.mxu0 %v1547
    %1581 = vmatprep.subr.mxu0 0.0
    %1582 = vmatpush1.msra.mxu0 %v1546
    %1583 = vmatprep.subr.mxu0 0.0
    %1584 = vmatpush1.msra.mxu0 %v1545
    %1585 = vmatprep.subr.mxu0 0.0
    %1586 = vmatpush1.msra.mxu0 %v1544
    %1587 = vmatprep.subr.mxu0 0.0
    %1588 = vmatpush2.msra.mxu0 0.0
    %1589 = vmatprep.subr.mxu0 0.0
    %1590 = vmatpush2.msra.mxu0 0.0
    %1591 = vmatprep.subr.mxu0 0.0
    %1592 = vmatpush2.msra.mxu0 0.0
    %1593 = vmatprep.subr.mxu0 0.0
    %1594 = vmatpush2.msra.mxu0 0.0
    %1595 = vmatprep.subr.mxu0 0.0
    %1596 = vmatpush2.msra.mxu0 0.0
    %1597 = vmatprep.subr.mxu0 0.0
    %1598 = vmatpush2.msra.mxu0 0.0
    %1599 = vmatprep.subr.mxu0 0.0
    %1600 = vmatpush2.msra.mxu0 0.0
    %1601 = vmatprep.subr.mxu0 0.0
    %1602 = vmatpush2.msra.mxu0 0.0
    %1603 = vmatprep.subr.mxu0 0.0
    %1604 = vmatpush2.msra.mxu0 0.0
    %1605 = vmatprep.subr.mxu0 0.0
    %1606 = vmatpush2.msra.mxu0 0.0
    %1607 = vmatprep.subr.mxu0 0.0
    %1608 = vmatpush2.msra.mxu0 0.0
    %1609 = vmatprep.subr.mxu0 0.0
    %1610 = vmatpush2.msra.mxu0 0.0
    %1611 = vmatprep.subr.mxu0 0.0
    %1612 = vmatpush2.msra.mxu0 0.0
    %1613 = vmatprep.subr.mxu0 0.0
    %1614 = vmatpush2.msra.mxu0 0.0
    %1615 = vmatprep.subr.mxu0 0.0
    %1616 = vmatpush2.msra.mxu0 0.0
    %1617 = vmatprep.subr.mxu0 0.0
    %1618 = vmatpush2.msra.mxu0 0.0
    %1619 = vmatprep.mubr.f32.mxu0 0.0
    %1620 = vmatmul.mubr.f32.gmra.mxu0 %v1553
    %v1621 = vpop.f32.mrf.mxu0
    %v1622 = vadd.f32 %v225, %v1621
    %v1623 = vpop.f32.mrf.mxu0
    %1624 = vdwg.mxu0
    %v1625 = vtanh.pop %v1622
    %v1626 = vxor.u32 %v1622, 2147483648
    %v1627 = vmul.f32 %v1626, 1.442695
    %v1628 = vpow.pop %v1627
    %v1629 = vadd.f32 %v1628, 1.0
    %v1630 = vrcp.pop %v1629
    %v1631 = vmul.f32 1.0, %v1630
    %v1632 = vsel %vm164, %v1625, %v1631
    %1634 = vrot.lane.b32.xlu0 %v1543, 32
    %v1635 = vpop.permute.xlu0 %1634
    %v1637 = vmul.f32 %v1632, %v1635
    %1639 = vrot.lane.b32.xlu0 %v1632, 64
    %v1640 = vpop.permute.xlu0 %1639
    %v1642 = vmul.f32 %v1632, %v1640
    %1644 = vrot.lane.b32.xlu0 %v1642, 32
    %v1645 = vpop.permute.xlu0 %1644
    %v1647 = vadd.f32 %v1637, %v1645
    %v1648 = vtanh.pop %v1647
    %1650 = vrot.lane.b32.xlu0 %v1648, 64
    %v1651 = vpop.permute.xlu0 %1650
    %v1653 = vmul.f32 %v1632, %v1651
    %1655 = vrot.lane.b32.xlu0 %v1653, 32
    %v1656 = vpop.permute.xlu0 %1655
    %1658 = vst.msk [vmem:[#allocation6] sm:$0xff] %vm47, %v1656
    %1660 = vrot.lane.b32.xlu0 %v1647, 96
    %v1661 = vpop.permute.xlu0 %1660
    %1663 = vst.msk [vmem:[#allocation7] sm:$0xff] %vm47, %v1661
    %s1664 = sld [smem:[#allocation9 + $0x300]]
    %s1665 = scalar_lea.vmem %s1, %s1664
    %v1666 = vld [vmem:[%s1665] sm:$0x1]
    %1667 = vst.msk [vmem:[#allocation2] sm:$0x1] %vm58, %v1666
    %s1668 = sld [smem:[#allocation9 + $0x301]]
    %s1669 = scalar_lea.vmem %s1, %s1668
    %v1670 = vld [vmem:[%s1669] sm:$0x1]
    %1671 = vst.msk [vmem:[#allocation2 + $0x1] sm:$0x1] %vm58, %v1670
    %v1672 = vld [vmem:[#allocation3] sm:$0xff]
    %1674 = vrot.lane.b32.xlu0 %v1672, 32
    %v1675 = vpop.permute.xlu0 %1674
    %1677 = vst.msk [vmem:[#allocation2] sm:$0xff] %vm69, %v1675
    %v1678 = vld [vmem:[#allocation2] sm:$0xff]
    %v1679 = vld [vmem:[#allocation4] sm:$0xff]
    %v1680 = vld [vmem:[%s2] sm:$0xff]
    %v1681 = vld [vmem:[%s2 + $0x8] sm:$0xff]
    %v1682 = vld [vmem:[%s2 + $0x10] sm:$0xff]
    %v1683 = vld [vmem:[%s2 + $0x18] sm:$0xff]
    %v1684 = vld [vmem:[%s2 + $0x20] sm:$0xff]
    %v1685 = vld [vmem:[%s2 + $0x28] sm:$0xff]
    %v1686 = vld [vmem:[%s2 + $0x30] sm:$0xff]
    %v1687 = vld [vmem:[%s2 + $0x38] sm:$0xff]
    %v1689 = vsel %vm45, %v1678, 0
    %1691 = vmatprep.subr.mxu0 0.0
    %1692 = vmatpush1.msra.mxu0 0.0
    %1693 = vmatprep.subr.mxu0 0.0
    %1694 = vmatpush1.msra.mxu0 0.0
    %1695 = vmatprep.subr.mxu0 0.0
    %1696 = vmatpush1.msra.mxu0 0.0
    %1697 = vmatprep.subr.mxu0 0.0
    %1698 = vmatpush1.msra.mxu0 0.0
    %1699 = vmatprep.subr.mxu0 0.0
    %1700 = vmatpush1.msra.mxu0 0.0
    %1701 = vmatprep.subr.mxu0 0.0
    %1702 = vmatpush1.msra.mxu0 0.0
    %1703 = vmatprep.subr.mxu0 0.0
    %1704 = vmatpush1.msra.mxu0 0.0
    %1705 = vmatprep.subr.mxu0 0.0
    %1706 = vmatpush1.msra.mxu0 0.0
    %1707 = vmatprep.subr.mxu0 0.0
    %1708 = vmatpush1.msra.mxu0 %v1687
    %1709 = vmatprep.subr.mxu0 0.0
    %1710 = vmatpush1.msra.mxu0 %v1686
    %1711 = vmatprep.subr.mxu0 0.0
    %1712 = vmatpush1.msra.mxu0 %v1685
    %1713 = vmatprep.subr.mxu0 0.0
    %1714 = vmatpush1.msra.mxu0 %v1684
    %1715 = vmatprep.subr.mxu0 0.0
    %1716 = vmatpush1.msra.mxu0 %v1683
    %1717 = vmatprep.subr.mxu0 0.0
    %1718 = vmatpush1.msra.mxu0 %v1682
    %1719 = vmatprep.subr.mxu0 0.0
    %1720 = vmatpush1.msra.mxu0 %v1681
    %1721 = vmatprep.subr.mxu0 0.0
    %1722 = vmatpush1.msra.mxu0 %v1680
    %1723 = vmatprep.subr.mxu0 0.0
    %1724 = vmatpush2.msra.mxu0 0.0
    %1725 = vmatprep.subr.mxu0 0.0
    %1726 = vmatpush2.msra.mxu0 0.0
    %1727 = vmatprep.subr.mxu0 0.0
    %1728 = vmatpush2.msra.mxu0 0.0
    %1729 = vmatprep.subr.mxu0 0.0
    %1730 = vmatpush2.msra.mxu0 0.0
    %1731 = vmatprep.subr.mxu0 0.0
    %1732 = vmatpush2.msra.mxu0 0.0
    %1733 = vmatprep.subr.mxu0 0.0
    %1734 = vmatpush2.msra.mxu0 0.0
    %1735 = vmatprep.subr.mxu0 0.0
    %1736 = vmatpush2.msra.mxu0 0.0
    %1737 = vmatprep.subr.mxu0 0.0
    %1738 = vmatpush2.msra.mxu0 0.0
    %1739 = vmatprep.subr.mxu0 0.0
    %1740 = vmatpush2.msra.mxu0 0.0
    %1741 = vmatprep.subr.mxu0 0.0
    %1742 = vmatpush2.msra.mxu0 0.0
    %1743 = vmatprep.subr.mxu0 0.0
    %1744 = vmatpush2.msra.mxu0 0.0
    %1745 = vmatprep.subr.mxu0 0.0
    %1746 = vmatpush2.msra.mxu0 0.0
    %1747 = vmatprep.subr.mxu0 0.0
    %1748 = vmatpush2.msra.mxu0 0.0
    %1749 = vmatprep.subr.mxu0 0.0
    %1750 = vmatpush2.msra.mxu0 0.0
    %1751 = vmatprep.subr.mxu0 0.0
    %1752 = vmatpush2.msra.mxu0 0.0
    %1753 = vmatprep.subr.mxu0 0.0
    %1754 = vmatpush2.msra.mxu0 0.0
    %1755 = vmatprep.mubr.f32.mxu0 0.0
    %1756 = vmatmul.mubr.f32.gmra.mxu0 %v1689
    %v1757 = vpop.f32.mrf.mxu0
    %v1758 = vadd.f32 %v85, %v1757
    %v1759 = vpop.f32.mrf.mxu0
    %1760 = vdwg.mxu0
    %v1761 = vtanh.pop %v1758
    %v1762 = vxor.u32 %v1758, 2147483648
    %v1763 = vmul.f32 %v1762, 1.442695
    %v1764 = vpow.pop %v1763
    %v1765 = vadd.f32 %v1764, 1.0
    %v1766 = vrcp.pop %v1765
    %v1767 = vmul.f32 1.0, %v1766
    %v1768 = vsel %vm164, %v1761, %v1767
    %1770 = vrot.lane.b32.xlu0 %v1679, 32
    %v1771 = vpop.permute.xlu0 %1770
    %v1773 = vmul.f32 %v1768, %v1771
    %1775 = vrot.lane.b32.xlu0 %v1768, 64
    %v1776 = vpop.permute.xlu0 %1775
    %v1778 = vmul.f32 %v1768, %v1776
    %1780 = vrot.lane.b32.xlu0 %v1778, 32
    %v1781 = vpop.permute.xlu0 %1780
    %v1783 = vadd.f32 %v1773, %v1781
    %v1784 = vtanh.pop %v1783
    %1786 = vrot.lane.b32.xlu0 %v1784, 64
    %v1787 = vpop.permute.xlu0 %1786
    %v1789 = vmul.f32 %v1768, %v1787
    %1791 = vrot.lane.b32.xlu0 %v1789, 32
    %v1792 = vpop.permute.xlu0 %1791
    %1794 = vst.msk [vmem:[#allocation3] sm:$0xff] %vm47, %v1792
    %1796 = vrot.lane.b32.xlu0 %v1783, 96
    %v1797 = vpop.permute.xlu0 %1796
    %1799 = vst.msk [vmem:[#allocation4] sm:$0xff] %vm47, %v1797
    %1800 = vst.msk [vmem:[#allocation5] sm:$0xff] %vm47, %v1792
    %v1801 = vld [vmem:[#allocation6] sm:$0xff]
    %1803 = vrot.lane.b32.xlu0 %v1801, 32
    %v1804 = vpop.permute.xlu0 %1803
    %1806 = vst.msk [vmem:[#allocation5] sm:$0xff] %vm69, %v1804
    %v1807 = vld [vmem:[#allocation5] sm:$0xff]
    %v1808 = vld [vmem:[#allocation7] sm:$0xff]
    %v1809 = vld [vmem:[#allocation10] sm:$0xff]
    %v1810 = vld [vmem:[#allocation10 + $0x8] sm:$0xff]
    %v1811 = vld [vmem:[#allocation10 + $0x10] sm:$0xff]
    %v1812 = vld [vmem:[#allocation10 + $0x18] sm:$0xff]
    %v1813 = vld [vmem:[#allocation10 + $0x20] sm:$0xff]
    %v1814 = vld [vmem:[#allocation10 + $0x28] sm:$0xff]
    %v1815 = vld [vmem:[#allocation10 + $0x30] sm:$0xff]
    %v1816 = vld [vmem:[#allocation10 + $0x38] sm:$0xff]
    %v1818 = vsel %vm45, %v1807, 0
    %1820 = vmatprep.subr.mxu0 0.0
    %1821 = vmatpush1.msra.mxu0 0.0
    %1822 = vmatprep.subr.mxu0 0.0
    %1823 = vmatpush1.msra.mxu0 0.0
    %1824 = vmatprep.subr.mxu0 0.0
    %1825 = vmatpush1.msra.mxu0 0.0
    %1826 = vmatprep.subr.mxu0 0.0
    %1827 = vmatpush1.msra.mxu0 0.0
    %1828 = vmatprep.subr.mxu0 0.0
    %1829 = vmatpush1.msra.mxu0 0.0
    %1830 = vmatprep.subr.mxu0 0.0
    %1831 = vmatpush1.msra.mxu0 0.0
    %1832 = vmatprep.subr.mxu0 0.0
    %1833 = vmatpush1.msra.mxu0 0.0
    %1834 = vmatprep.subr.mxu0 0.0
    %1835 = vmatpush1.msra.mxu0 0.0
    %1836 = vmatprep.subr.mxu0 0.0
    %1837 = vmatpush1.msra.mxu0 %v1816
    %1838 = vmatprep.subr.mxu0 0.0
    %1839 = vmatpush1.msra.mxu0 %v1815
    %1840 = vmatprep.subr.mxu0 0.0
    %1841 = vmatpush1.msra.mxu0 %v1814
    %1842 = vmatprep.subr.mxu0 0.0
    %1843 = vmatpush1.msra.mxu0 %v1813
    %1844 = vmatprep.subr.mxu0 0.0
    %1845 = vmatpush1.msra.mxu0 %v1812
    %1846 = vmatprep.subr.mxu0 0.0
    %1847 = vmatpush1.msra.mxu0 %v1811
    %1848 = vmatprep.subr.mxu0 0.0
    %1849 = vmatpush1.msra.mxu0 %v1810
    %1850 = vmatprep.subr.mxu0 0.0
    %1851 = vmatpush1.msra.mxu0 %v1809
    %1852 = vmatprep.subr.mxu0 0.0
    %1853 = vmatpush2.msra.mxu0 0.0
    %1854 = vmatprep.subr.mxu0 0.0
    %1855 = vmatpush2.msra.mxu0 0.0
    %1856 = vmatprep.subr.mxu0 0.0
    %1857 = vmatpush2.msra.mxu0 0.0
    %1858 = vmatprep.subr.mxu0 0.0
    %1859 = vmatpush2.msra.mxu0 0.0
    %1860 = vmatprep.subr.mxu0 0.0
    %1861 = vmatpush2.msra.mxu0 0.0
    %1862 = vmatprep.subr.mxu0 0.0
    %1863 = vmatpush2.msra.mxu0 0.0
    %1864 = vmatprep.subr.mxu0 0.0
    %1865 = vmatpush2.msra.mxu0 0.0
    %1866 = vmatprep.subr.mxu0 0.0
    %1867 = vmatpush2.msra.mxu0 0.0
    %1868 = vmatprep.subr.mxu0 0.0
    %1869 = vmatpush2.msra.mxu0 0.0
    %1870 = vmatprep.subr.mxu0 0.0
    %1871 = vmatpush2.msra.mxu0 0.0
    %1872 = vmatprep.subr.mxu0 0.0
    %1873 = vmatpush2.msra.mxu0 0.0
    %1874 = vmatprep.subr.mxu0 0.0
    %1875 = vmatpush2.msra.mxu0 0.0
    %1876 = vmatprep.subr.mxu0 0.0
    %1877 = vmatpush2.msra.mxu0 0.0
    %1878 = vmatprep.subr.mxu0 0.0
    %1879 = vmatpush2.msra.mxu0 0.0
    %1880 = vmatprep.subr.mxu0 0.0
    %1881 = vmatpush2.msra.mxu0 0.0
    %1882 = vmatprep.subr.mxu0 0.0
    %1883 = vmatpush2.msra.mxu0 0.0
    %1884 = vmatprep.mubr.f32.mxu0 0.0
    %1885 = vmatmul.mubr.f32.gmra.mxu0 %v1818
    %v1886 = vpop.f32.mrf.mxu0
    %v1887 = vadd.f32 %v225, %v1886
    %v1888 = vpop.f32.mrf.mxu0
    %1889 = vdwg.mxu0
    %v1890 = vtanh.pop %v1887
    %v1891 = vxor.u32 %v1887, 2147483648
    %v1892 = vmul.f32 %v1891, 1.442695
    %v1893 = vpow.pop %v1892
    %v1894 = vadd.f32 %v1893, 1.0
    %v1895 = vrcp.pop %v1894
    %v1896 = vmul.f32 1.0, %v1895
    %v1897 = vsel %vm164, %v1890, %v1896
    %1899 = vrot.lane.b32.xlu0 %v1808, 32
    %v1900 = vpop.permute.xlu0 %1899
    %v1902 = vmul.f32 %v1897, %v1900
    %1904 = vrot.lane.b32.xlu0 %v1897, 64
    %v1905 = vpop.permute.xlu0 %1904
    %v1907 = vmul.f32 %v1897, %v1905
    %1909 = vrot.lane.b32.xlu0 %v1907, 32
    %v1910 = vpop.permute.xlu0 %1909
    %v1912 = vadd.f32 %v1902, %v1910
    %v1913 = vtanh.pop %v1912
    %1915 = vrot.lane.b32.xlu0 %v1913, 64
    %v1916 = vpop.permute.xlu0 %1915
    %v1918 = vmul.f32 %v1897, %v1916
    %1920 = vrot.lane.b32.xlu0 %v1918, 32
    %v1921 = vpop.permute.xlu0 %1920
    %1923 = vst.msk [vmem:[#allocation6] sm:$0xff] %vm47, %v1921
    %1925 = vrot.lane.b32.xlu0 %v1912, 96
    %v1926 = vpop.permute.xlu0 %1925
    %1928 = vst.msk [vmem:[#allocation7] sm:$0xff] %vm47, %v1926
    %s1929 = sld [smem:[#allocation9 + $0x380]]
    %s1930 = scalar_lea.vmem %s1, %s1929
    %v1931 = vld [vmem:[%s1930] sm:$0x1]
    %1932 = vst.msk [vmem:[#allocation2] sm:$0x1] %vm58, %v1931
    %s1933 = sld [smem:[#allocation9 + $0x381]]
    %s1934 = scalar_lea.vmem %s1, %s1933
    %v1935 = vld [vmem:[%s1934] sm:$0x1]
    %1936 = vst.msk [vmem:[#allocation2 + $0x1] sm:$0x1] %vm58, %v1935
    %v1937 = vld [vmem:[#allocation3] sm:$0xff]
    %1939 = vrot.lane.b32.xlu0 %v1937, 32
    %v1940 = vpop.permute.xlu0 %1939
    %1942 = vst.msk [vmem:[#allocation2] sm:$0xff] %vm69, %v1940
    %v1943 = vld [vmem:[#allocation2] sm:$0xff]
    %v1944 = vld [vmem:[#allocation4] sm:$0xff]
    %v1945 = vld [vmem:[%s2] sm:$0xff]
    %v1946 = vld [vmem:[%s2 + $0x8] sm:$0xff]
    %v1947 = vld [vmem:[%s2 + $0x10] sm:$0xff]
    %v1948 = vld [vmem:[%s2 + $0x18] sm:$0xff]
    %v1949 = vld [vmem:[%s2 + $0x20] sm:$0xff]
    %v1950 = vld [vmem:[%s2 + $0x28] sm:$0xff]
    %v1951 = vld [vmem:[%s2 + $0x30] sm:$0xff]
    %v1952 = vld [vmem:[%s2 + $0x38] sm:$0xff]
    %v1954 = vsel %vm45, %v1943, 0
    %1956 = vmatprep.subr.mxu0 0.0
    %1957 = vmatpush1.msra.mxu0 0.0
    %1958 = vmatprep.subr.mxu0 0.0
    %1959 = vmatpush1.msra.mxu0 0.0
    %1960 = vmatprep.subr.mxu0 0.0
    %1961 = vmatpush1.msra.mxu0 0.0
    %1962 = vmatprep.subr.mxu0 0.0
    %1963 = vmatpush1.msra.mxu0 0.0
    %1964 = vmatprep.subr.mxu0 0.0
    %1965 = vmatpush1.msra.mxu0 0.0
    %1966 = vmatprep.subr.mxu0 0.0
    %1967 = vmatpush1.msra.mxu0 0.0
    %1968 = vmatprep.subr.mxu0 0.0
    %1969 = vmatpush1.msra.mxu0 0.0
    %1970 = vmatprep.subr.mxu0 0.0
    %1971 = vmatpush1.msra.mxu0 0.0
    %1972 = vmatprep.subr.mxu0 0.0
    %1973 = vmatpush1.msra.mxu0 %v1952
    %1974 = vmatprep.subr.mxu0 0.0
    %1975 = vmatpush1.msra.mxu0 %v1951
    %1976 = vmatprep.subr.mxu0 0.0
    %1977 = vmatpush1.msra.mxu0 %v1950
    %1978 = vmatprep.subr.mxu0 0.0
    %1979 = vmatpush1.msra.mxu0 %v1949
    %1980 = vmatprep.subr.mxu0 0.0
    %1981 = vmatpush1.msra.mxu0 %v1948
    %1982 = vmatprep.subr.mxu0 0.0
    %1983 = vmatpush1.msra.mxu0 %v1947
    %1984 = vmatprep.subr.mxu0 0.0
    %1985 = vmatpush1.msra.mxu0 %v1946
    %1986 = vmatprep.subr.mxu0 0.0
    %1987 = vmatpush1.msra.mxu0 %v1945
    %1988 = vmatprep.subr.mxu0 0.0
    %1989 = vmatpush2.msra.mxu0 0.0
    %1990 = vmatprep.subr.mxu0 0.0
    %1991 = vmatpush2.msra.mxu0 0.0
    %1992 = vmatprep.subr.mxu0 0.0
    %1993 = vmatpush2.msra.mxu0 0.0
    %1994 = vmatprep.subr.mxu0 0.0
    %1995 = vmatpush2.msra.mxu0 0.0
    %1996 = vmatprep.subr.mxu0 0.0
    %1997 = vmatpush2.msra.mxu0 0.0
    %1998 = vmatprep.subr.mxu0 0.0
    %1999 = vmatpush2.msra.mxu0 0.0
    %2000 = vmatprep.subr.mxu0 0.0
    %2001 = vmatpush2.msra.mxu0 0.0
    %2002 = vmatprep.subr.mxu0 0.0
    %2003 = vmatpush2.msra.mxu0 0.0
    %2004 = vmatprep.subr.mxu0 0.0
    %2005 = vmatpush2.msra.mxu0 0.0
    %2006 = vmatprep.subr.mxu0 0.0
    %2007 = vmatpush2.msra.mxu0 0.0
    %2008 = vmatprep.subr.mxu0 0.0
    %2009 = vmatpush2.msra.mxu0 0.0
    %2010 = vmatprep.subr.mxu0 0.0
    %2011 = vmatpush2.msra.mxu0 0.0
    %2012 = vmatprep.subr.mxu0 0.0
    %2013 = vmatpush2.msra.mxu0 0.0
    %2014 = vmatprep.subr.mxu0 0.0
    %2015 = vmatpush2.msra.mxu0 0.0
    %2016 = vmatprep.subr.mxu0 0.0
    %2017 = vmatpush2.msra.mxu0 0.0
    %2018 = vmatprep.subr.mxu0 0.0
    %2019 = vmatpush2.msra.mxu0 0.0
    %2020 = vmatprep.mubr.f32.mxu0 0.0
    %2021 = vmatmul.mubr.f32.gmra.mxu0 %v1954
    %v2022 = vpop.f32.mrf.mxu0
    %v2023 = vadd.f32 %v85, %v2022
    %v2024 = vpop.f32.mrf.mxu0
    %2025 = vdwg.mxu0
    %v2026 = vtanh.pop %v2023
    %v2027 = vxor.u32 %v2023, 2147483648
    %v2028 = vmul.f32 %v2027, 1.442695
    %v2029 = vpow.pop %v2028
    %v2030 = vadd.f32 %v2029, 1.0
    %v2031 = vrcp.pop %v2030
    %v2032 = vmul.f32 1.0, %v2031
    %v2033 = vsel %vm164, %v2026, %v2032
    %2035 = vrot.lane.b32.xlu0 %v1944, 32
    %v2036 = vpop.permute.xlu0 %2035
    %v2038 = vmul.f32 %v2033, %v2036
    %2040 = vrot.lane.b32.xlu0 %v2033, 64
    %v2041 = vpop.permute.xlu0 %2040
    %v2043 = vmul.f32 %v2033, %v2041
    %2045 = vrot.lane.b32.xlu0 %v2043, 32
    %v2046 = vpop.permute.xlu0 %2045
    %v2048 = vadd.f32 %v2038, %v2046
    %v2049 = vtanh.pop %v2048
    %2051 = vrot.lane.b32.xlu0 %v2049, 64
    %v2052 = vpop.permute.xlu0 %2051
    %v2054 = vmul.f32 %v2033, %v2052
    %2056 = vrot.lane.b32.xlu0 %v2054, 32
    %v2057 = vpop.permute.xlu0 %2056
    %2059 = vst.msk [vmem:[#allocation3] sm:$0xff] %vm47, %v2057
    %2061 = vrot.lane.b32.xlu0 %v2048, 96
    %v2062 = vpop.permute.xlu0 %2061
    %2064 = vst.msk [vmem:[#allocation4] sm:$0xff] %vm47, %v2062
    %2065 = vst.msk [vmem:[#allocation5] sm:$0xff] %vm47, %v2057
    %v2066 = vld [vmem:[#allocation6] sm:$0xff]
    %2068 = vrot.lane.b32.xlu0 %v2066, 32
    %v2069 = vpop.permute.xlu0 %2068
    %2071 = vst.msk [vmem:[#allocation5] sm:$0xff] %vm69, %v2069
    %v2072 = vld [vmem:[#allocation5] sm:$0xff]
    %v2073 = vld [vmem:[#allocation7] sm:$0xff]
    %v2074 = vld [vmem:[#allocation10] sm:$0xff]
    %v2075 = vld [vmem:[#allocation10 + $0x8] sm:$0xff]
    %v2076 = vld [vmem:[#allocation10 + $0x10] sm:$0xff]
    %v2077 = vld [vmem:[#allocation10 + $0x18] sm:$0xff]
    %v2078 = vld [vmem:[#allocation10 + $0x20] sm:$0xff]
    %v2079 = vld [vmem:[#allocation10 + $0x28] sm:$0xff]
    %v2080 = vld [vmem:[#allocation10 + $0x30] sm:$0xff]
    %v2081 = vld [vmem:[#allocation10 + $0x38] sm:$0xff]
    %v2083 = vsel %vm45, %v2072, 0
    %2085 = vmatprep.subr.mxu0 0.0
    %2086 = vmatpush1.msra.mxu0 0.0
    %2087 = vmatprep.subr.mxu0 0.0
    %2088 = vmatpush1.msra.mxu0 0.0
    %2089 = vmatprep.subr.mxu0 0.0
    %2090 = vmatpush1.msra.mxu0 0.0
    %2091 = vmatprep.subr.mxu0 0.0
    %2092 = vmatpush1.msra.mxu0 0.0
    %2093 = vmatprep.subr.mxu0 0.0
    %2094 = vmatpush1.msra.mxu0 0.0
    %2095 = vmatprep.subr.mxu0 0.0
    %2096 = vmatpush1.msra.mxu0 0.0
    %2097 = vmatprep.subr.mxu0 0.0
    %2098 = vmatpush1.msra.mxu0 0.0
    %2099 = vmatprep.subr.mxu0 0.0
    %2100 = vmatpush1.msra.mxu0 0.0
    %2101 = vmatprep.subr.mxu0 0.0
    %2102 = vmatpush1.msra.mxu0 %v2081
    %2103 = vmatprep.subr.mxu0 0.0
    %2104 = vmatpush1.msra.mxu0 %v2080
    %2105 = vmatprep.subr.mxu0 0.0
    %2106 = vmatpush1.msra.mxu0 %v2079
    %2107 = vmatprep.subr.mxu0 0.0
    %2108 = vmatpush1.msra.mxu0 %v2078
    %2109 = vmatprep.subr.mxu0 0.0
    %2110 = vmatpush1.msra.mxu0 %v2077
    %2111 = vmatprep.subr.mxu0 0.0
    %2112 = vmatpush1.msra.mxu0 %v2076
    %2113 = vmatprep.subr.mxu0 0.0
    %2114 = vmatpush1.msra.mxu0 %v2075
    %2115 = vmatprep.subr.mxu0 0.0
    %2116 = vmatpush1.msra.mxu0 %v2074
    %2117 = vmatprep.subr.mxu0 0.0
    %2118 = vmatpush2.msra.mxu0 0.0
    %2119 = vmatprep.subr.mxu0 0.0
    %2120 = vmatpush2.msra.mxu0 0.0
    %2121 = vmatprep.subr.mxu0 0.0
    %2122 = vmatpush2.msra.mxu0 0.0
    %2123 = vmatprep.subr.mxu0 0.0
    %2124 = vmatpush2.msra.mxu0 0.0
    %2125 = vmatprep.subr.mxu0 0.0
    %2126 = vmatpush2.msra.mxu0 0.0
    %2127 = vmatprep.subr.mxu0 0.0
    %2128 = vmatpush2.msra.mxu0 0.0
    %2129 = vmatprep.subr.mxu0 0.0
    %2130 = vmatpush2.msra.mxu0 0.0
    %2131 = vmatprep.subr.mxu0 0.0
    %2132 = vmatpush2.msra.mxu0 0.0
    %2133 = vmatprep.subr.mxu0 0.0
    %2134 = vmatpush2.msra.mxu0 0.0
    %2135 = vmatprep.subr.mxu0 0.0
    %2136 = vmatpush2.msra.mxu0 0.0
    %2137 = vmatprep.subr.mxu0 0.0
    %2138 = vmatpush2.msra.mxu0 0.0
    %2139 = vmatprep.subr.mxu0 0.0
    %2140 = vmatpush2.msra.mxu0 0.0
    %2141 = vmatprep.subr.mxu0 0.0
    %2142 = vmatpush2.msra.mxu0 0.0
    %2143 = vmatprep.subr.mxu0 0.0
    %2144 = vmatpush2.msra.mxu0 0.0
    %2145 = vmatprep.subr.mxu0 0.0
    %2146 = vmatpush2.msra.mxu0 0.0
    %2147 = vmatprep.subr.mxu0 0.0
    %2148 = vmatpush2.msra.mxu0 0.0
    %2149 = vmatprep.mubr.f32.mxu0 0.0
    %2150 = vmatmul.mubr.f32.gmra.mxu0 %v2083
    %v2151 = vpop.f32.mrf.mxu0
    %v2152 = vadd.f32 %v225, %v2151
    %v2153 = vpop.f32.mrf.mxu0
    %2154 = vdwg.mxu0
    %v2155 = vtanh.pop %v2152
    %v2156 = vxor.u32 %v2152, 2147483648
    %v2157 = vmul.f32 %v2156, 1.442695
    %v2158 = vpow.pop %v2157
    %v2159 = vadd.f32 %v2158, 1.0
    %v2160 = vrcp.pop %v2159
    %v2161 = vmul.f32 1.0, %v2160
    %v2162 = vsel %vm164, %v2155, %v2161
    %2164 = vrot.lane.b32.xlu0 %v2073, 32
    %v2165 = vpop.permute.xlu0 %2164
    %v2167 = vmul.f32 %v2162, %v2165
    %2169 = vrot.lane.b32.xlu0 %v2162, 64
    %v2170 = vpop.permute.xlu0 %2169
    %v2172 = vmul.f32 %v2162, %v2170
    %2174 = vrot.lane.b32.xlu0 %v2172, 32
    %v2175 = vpop.permute.xlu0 %2174
    %v2177 = vadd.f32 %v2167, %v2175
    %v2178 = vtanh.pop %v2177
    %2180 = vrot.lane.b32.xlu0 %v2178, 64
    %v2181 = vpop.permute.xlu0 %2180
    %v2183 = vmul.f32 %v2162, %v2181
    %2185 = vrot.lane.b32.xlu0 %v2183, 32
    %v2186 = vpop.permute.xlu0 %2185
    %2188 = vst.msk [vmem:[#allocation6] sm:$0xff] %vm47, %v2186
    %2190 = vrot.lane.b32.xlu0 %v2177, 96
    %v2191 = vpop.permute.xlu0 %2190
    %2193 = vst.msk [vmem:[#allocation7] sm:$0xff] %vm47, %v2191
    %v2194 = vld [vmem:[#allocation3] sm:$0xff]
    %2195 = vst.msk [vmem:[#allocation13] sm:$0xff] %vm47, %v2194
    %v2196 = vld [vmem:[#allocation4] sm:$0xff]
    %2197 = vst.msk [vmem:[#allocation14] sm:$0xff] %vm47, %v2196
    %v2198 = vld [vmem:[#allocation6] sm:$0xff]
    %s2199 = scalar_lea.vmem [#allocation13], 8
    %2200 = vst.msk [vmem:[%s2199] sm:$0xff] %vm47, %v2198
    %v2201 = vld [vmem:[#allocation7] sm:$0xff]
    %s2202 = scalar_lea.vmem [#allocation14], 8
    %2203 = vst.msk [vmem:[%s2202] sm:$0xff] %vm47, %v2201
    // Predicated region
    $region26: #{tpu_custom_call.1} parent=1 // pred_check
      _
    $region27: #{tpu_custom_call.1} parent=1 // pred_check_branch
      %2205 = sbr.rel (0) target = $region29
    $region28: #{tpu_custom_call.1} parent=1 // pred_region
      %s2207 = ssub.s32 256, 256
      %2208 = vsyncadd [#allocation12], %s2207
      %s2209 = sshll.u32 [#allocation13], 4
      %s2210 = int_to_ptr.vmem [resolvable:$true] %s2209
      %2215 = dma.vmem_to_hbm [thread:$0]  %s2210, 256, %s6, [#allocation12], 128, 128, 8
    $region29: #{tpu_custom_call.1} parent=1 // pred_fallthru
      _
    // Predicated region
    $region30: #{tpu_custom_call.1} parent=1 // pred_check
      _
    $region31: #{tpu_custom_call.1} parent=1 // pred_check_branch
      %2217 = sbr.rel (0) target = $region33
    $region32: #{tpu_custom_call.1} parent=1 // pred_region
      %s2219 = ssub.s32 256, 256
      %2220 = vsyncadd [#allocation15], %s2219
      %s2221 = sshll.u32 [#allocation14], 4
      %s2222 = int_to_ptr.vmem [resolvable:$true] %s2221
      %2227 = dma.vmem_to_hbm [thread:$0]  %s2222, 256, %s7, [#allocation15], 128, 128, 8
    $region33: #{tpu_custom_call.1} parent=1 // pred_fallthru
      _
    // Predicated region
    $region34: #{tpu_custom_call.1} parent=1 // pred_check
      _
    $region35: #{tpu_custom_call.1} parent=1 // pred_check_branch
      %2229 = sbr.rel (0) target = $region37
    $region36: #{tpu_custom_call.1} parent=1 // pred_region
      %2230 = dma.done [#allocation12], 256
    $region37: #{tpu_custom_call.1} parent=1 // pred_fallthru
      _
    // Predicated region
    $region38: #{tpu_custom_call.1} parent=1 // pred_check
      _
    $region39: #{tpu_custom_call.1} parent=1 // pred_check_branch
      %2232 = sbr.rel (0) target = $region41
    $region40: #{tpu_custom_call.1} parent=1 // pred_region
      %2233 = dma.done [#allocation15], 256
    $region41: #{tpu_custom_call.1} parent=1 // pred_fallthru
      _
    %2234 = vsyncpa [#allocation11], 1
    %2235 = vsyncpa [#allocation12], 1
    %2236 = vsyncpa [#allocation15], 1

</llo_original>
